<compile_context>
chip_gen: v7x
topology: tpu7x:2x2x1
jax: 0.10.0
libtpu: 0.0.40
codegen_flags: <defaults>
</compile_context>

<pallas_src>
import math
import functools

import jax
import jax.numpy as jnp
from jax import lax
from jax.experimental import pallas as pl
from jax.experimental.pallas import tpu as pltpu


# ----------------------------------------------------------------------------
# Small model config (consistent with the module's constructor, scaled down)
# ----------------------------------------------------------------------------
VOCAB = 256
DIM = 64
N_LAYERS = 2
NUM_HEADS = 4
NUM_KV_HEADS = 2          # GQA reshape == plain per-head slicing (see note above)
D_FF = 64
NUM_EXPERTS = 4
TOP_K = 2
MAX_LEN = 32
WINDOW_SIZE = 8
CAPACITY_FACTOR = 1.0
EPS = 1e-6

HEAD_DIM = DIM // NUM_HEADS


# ----------------------------------------------------------------------------
# Kernel A: fused attention sublayer + second RMSNorm + MoE gate logits
#   h1     = x + Wo( SWA_Attention( RoPE( RMSNorm1(x) @ Wqkv ) ) )
#   xn2    = RMSNorm2(h1)
#   logits = xn2 @ Wgate
# ----------------------------------------------------------------------------
def _attn_gate_kernel(x_ref, ln1_ref, wqkv_ref, wo_ref, cos_ref, sin_ref,
                      ln2_ref, gate_ref, h1_ref, xn2_ref, lg_ref,
                      *, num_heads, head_dim, window):
    f32 = jnp.float32
    bf16 = jnp.bfloat16

    x = x_ref[...]                                   # (S, D) f32
    S, D = x.shape
    half = head_dim // 2

    # RMSNorm1 (rsqrt -> EUP slot)
    ms = jnp.mean(x * x, axis=-1, keepdims=True)
    xn = x * lax.rsqrt(ms + EPS) * ln1_ref[...]

    # Fused Q/K/V projection: one MXU matmul, bf16 operands, f32 accumulation.
    qkv = jnp.dot(xn.astype(bf16), wqkv_ref[...],
                  preferred_element_type=f32)        # (S, 3D)

    cos = cos_ref[...]                               # (S, half)
    sin = sin_ref[...]

    # Causal + sliding-window mask built in-kernel from iota (no S*S HBM input).
    qi = lax.broadcasted_iota(jnp.int32, (S, S), 0)
    kj = lax.broadcasted_iota(jnp.int32, (S, S), 1)
    allowed = (kj <= qi) & (qi - kj < window)
    neg = jnp.float32(-1e30)                         # finite -> no NaN risk
    inv_scale = jnp.float32(1.0 / math.sqrt(head_dim))

    dn_nt = (((1,), (1,)), ((), ()))                 # contract last dims (q . k^T)
    ctx_heads = []
    for h in range(num_heads):                       # static unroll, single launch
        q = qkv[:, h * head_dim:(h + 1) * head_dim]
        k = qkv[:, D + h * head_dim:D + (h + 1) * head_dim]
        v = qkv[:, 2 * D + h * head_dim:2 * D + (h + 1) * head_dim]

        # RoPE in split-half form: avoids concatenating rotated tensors.
        q1, q2 = q[:, :half], q[:, half:]
        k1, k2 = k[:, :half], k[:, half:]
        qr1 = q1 * cos - q2 * sin
        qr2 = q2 * cos + q1 * sin
        kr1 = k1 * cos - k2 * sin
        kr2 = k2 * cos + k1 * sin

        s = (lax.dot_general(qr1.astype(bf16), kr1.astype(bf16), dn_nt,
                             preferred_element_type=f32)
             + lax.dot_general(qr2.astype(bf16), kr2.astype(bf16), dn_nt,
                               preferred_element_type=f32))
        s = jnp.where(allowed, s * inv_scale, neg)

        m = jnp.max(s, axis=-1, keepdims=True)
        p = jnp.exp(s - m)
        denom = jnp.sum(p, axis=-1, keepdims=True)
        p = p * pl.reciprocal(denom, approx=True)    # EUP reciprocal

        ctx = jnp.dot(p.astype(bf16), v.astype(bf16),
                      preferred_element_type=f32)    # (S, head_dim)
        ctx_heads.append(ctx)

    # Lane-dense (S, D) context, one output-projection matmul, fused residual.
    ctx_full = jnp.concatenate(ctx_heads, axis=-1)
    attn_out = jnp.dot(ctx_full.astype(bf16), wo_ref[...],
                       preferred_element_type=f32)
    h1 = x + attn_out
    h1_ref[...] = h1

    # Second RMSNorm + gate projection (router inputs), fused in same launch.
    ms2 = jnp.mean(h1 * h1, axis=-1, keepdims=True)
    xn2 = h1 * lax.rsqrt(ms2 + EPS) * ln2_ref[...]
    xn2_ref[...] = xn2
    # gate logits kept in f32: tiny matmul, preserves discrete routing decisions
    lg_ref[...] = jnp.dot(xn2, gate_ref[...], preferred_element_type=f32)


def attn_norm_gate(x, lp, cos, sin, B, S):
    T, D = x.shape
    E = lp['gate_t'].shape[1]
    half = HEAD_DIM // 2
    kernel = functools.partial(_attn_gate_kernel,
                               num_heads=NUM_HEADS, head_dim=HEAD_DIM,
                               window=WINDOW_SIZE)
    return pl.pallas_call(
        kernel,
        grid=(B,),
        in_specs=[
            pl.BlockSpec((S, D), lambda b: (b, 0)),
            pl.BlockSpec((1, D), lambda b: (0, 0)),
            pl.BlockSpec((D, 3 * D), lambda b: (0, 0)),
            pl.BlockSpec((D, D), lambda b: (0, 0)),
            pl.BlockSpec((S, half), lambda b: (0, 0)),
            pl.BlockSpec((S, half), lambda b: (0, 0)),
            pl.BlockSpec((1, D), lambda b: (0, 0)),
            pl.BlockSpec((D, E), lambda b: (0, 0)),
        ],
        out_specs=(
            pl.BlockSpec((S, D), lambda b: (b, 0)),
            pl.BlockSpec((S, D), lambda b: (b, 0)),
            pl.BlockSpec((S, E), lambda b: (b, 0)),
        ),
        out_shape=(
            jax.ShapeDtypeStruct((T, D), jnp.float32),   # hidden after attn
            jax.ShapeDtypeStruct((T, D), jnp.float32),   # RMSNorm2(hidden)
            jax.ShapeDtypeStruct((T, E), jnp.float32),   # gate logits
        ),
        compiler_params=pltpu.CompilerParams(
            dimension_semantics=("parallel",)),          # shards across v7x's 2 TCs
    )(x, lp['ln1'], lp['wqkv_t'], lp['wo_t'], cos, sin, lp['ln2'], lp['gate_t'])


# ----------------------------------------------------------------------------
# Kernel B: MoE experts — one launch, static expert unroll, bf16 MXU matmuls,
#           f32 register accumulation, residual fused into the final store.
#           Combine weights are zero for unrouted / capacity-dropped tokens,
#           so dense per-expert compute is exactly the reference semantics.
# ----------------------------------------------------------------------------
def _moe_kernel(xn_ref, res_ref, cw_ref, w1_ref, w2_ref, o_ref,
                *, num_experts, d_ff):
    bf16 = jnp.bfloat16
    f32 = jnp.float32

    x = xn_ref[...]                                  # (T, D) f32 (normed input)
    xb = x.astype(bf16)
    acc = res_ref[...]                               # start from residual (f32)

    for e in range(num_experts):                     # static unroll, one launch
        h = jnp.dot(xb, w1_ref[e], preferred_element_type=f32)   # (T, 2F)
        x1 = h[:, :d_ff]
        x2 = h[:, d_ff:]
        a = x1 * (x2 * jax.nn.sigmoid(x2))           # SwiGLU
        y = jnp.dot(a.astype(bf16), w2_ref[e],
                    preferred_element_type=f32)      # (T, D)
        acc = acc + cw_ref[e] * y                    # (T,1) combine weights

    o_ref[...] = acc                                 # fused residual add


def moe_block(xn2, res, cw_e, w1_t, w2_t):
    T, D = xn2.shape
    E, _, F2 = w1_t.shape
    return pl.pallas_call(
        functools.partial(_moe_kernel, num_experts=E, d_ff=F2 // 2),
        out_shape=jax.ShapeDtypeStruct((T, D), jnp.float32),
    )(xn2, res, cw_e, w1_t, w2_t)


# ----------------------------------------------------------------------------
# Kernel C: final RMSNorm + tied-embedding logits head, tiled over vocab
# ----------------------------------------------------------------------------
def _norm_head_kernel(x_ref, nw_ref, wt_ref, o_ref):
    x = x_ref[...]
    ms = jnp.mean(x * x, axis=-1, keepdims=True)
    xn = x * lax.rsqrt(ms + EPS) * nw_ref[...]
    o_ref[...] = jnp.dot(xn.astype(jnp.bfloat16), wt_ref[...],
                         preferred_element_type=jnp.float32)


def norm_head(x, norm_w, embed_t, *, tn=128):
    T, D = x.shape
    V = embed_t.shape[1]
    tn = min(tn, V)
    if V % tn:
        tn = V
    return pl.pallas_call(
        _norm_head_kernel,
        grid=(V // tn,),
        in_specs=[
            pl.BlockSpec((T, D), lambda j: (0, 0)),
            pl.BlockSpec((1, D), lambda j: (0, 0)),
            pl.BlockSpec((D, tn), lambda j: (0, j)),
        ],
        out_specs=pl.BlockSpec((T, tn), lambda j: (0, j)),
        out_shape=jax.ShapeDtypeStruct((T, V), jnp.float32),
        compiler_params=pltpu.CompilerParams(
            dimension_semantics=("parallel",)),
    )(x, norm_w, embed_t)


# ----------------------------------------------------------------------------
# Plain-JAX glue: RoPE tables (half width), sort-free MoE routing, embedding
# ----------------------------------------------------------------------------
def build_rotary_tables(head_dim, max_seq_len):
    inv_freq = 1.0 / (10000.0 ** (jnp.arange(0, head_dim, 2, dtype=jnp.float32)
                                  / head_dim))
    t = jnp.arange(max_seq_len, dtype=jnp.float32)
    freqs = jnp.einsum('i,j->ij', t, inv_freq)       # (max_len, head_dim//2)
    return jnp.cos(freqs), jnp.sin(freqs)


def route_tokens(gate_logits, num_tokens):
    """Dense combine weights (E,T,1) + aux loss, without top_k / argsort kernels.

    Ranks are computed by pairwise comparison counts (pure elementwise +
    reductions -> XLA fuses them), matching torch's topk + capacity argsort
    semantics up to tie-breaking.
    """
    E = NUM_EXPERTS
    scores = jax.nn.softmax(gate_logits, axis=-1)                  # (T,E)

    phi_mean = scores.mean(axis=0)
    aux_loss = E * jnp.sum(phi_mean * phi_mean)

    # Top-k selection per token: expert e selected iff < TOP_K experts beat it.
    e_i = jnp.arange(E)[:, None]
    e_j = jnp.arange(E)[None, :]
    beats_e = ((scores[:, None, :] > scores[:, :, None])
               | ((scores[:, None, :] == scores[:, :, None]) & (e_j < e_i)[None]))
    expert_rank = beats_e.sum(axis=-1)                             # (T,E)
    selected = expert_rank < TOP_K
    w = jnp.where(selected, scores, 0.0)                           # (T,E)

    # Capacity: keep the top-`capacity` routed tokens per expert (by weight).
    capacity = max(1, int(CAPACITY_FACTOR * num_tokens / E))
    key = jnp.where(selected, w, -jnp.inf)                         # (T,E)
    t_i = jnp.arange(num_tokens)[:, None, None]
    t_j = jnp.arange(num_tokens)[None, :, None]
    beats_t = ((key[None, :, :] > key[:, None, :])
               | ((key[None, :, :] == key[:, None, :]) & (t_j < t_i)))
    token_rank = beats_t.sum(axis=1)                               # (T,E)
    keep = selected & (token_rank < capacity)
    cw = jnp.where(keep, w, 0.0)                                   # (T,E)

    cw_e = cw.T.reshape(E, num_tokens, 1)                          # (E,T,1)
    return cw_e, aux_loss


def mixtral_forward(params, tokens):
    B, S = tokens.shape
    T = B * S
    # TODO(synk): embedding gather is a data-dependent lookup; done in plain JAX.
    hidden = (params['embed'][tokens] * math.sqrt(DIM)).reshape(T, DIM)
    cos = params['rope_cos'][:S]
    sin = params['rope_sin'][:S]

    total_aux = jnp.float32(0.0)
    for lp in params['layers']:
        hidden, xn2, gate_logits = attn_norm_gate(hidden, lp, cos, sin, B, S)
        cw_e, aux = route_tokens(gate_logits, T)
        hidden = moe_block(xn2, hidden, cw_e, lp['w1_t'], lp['w2_t'])
        total_aux = total_aux + aux

    logits = norm_head(hidden, params['norm'], params['embed_t'])
    return logits.reshape(B, S, VOCAB), total_aux


# ----------------------------------------------------------------------------
# Deterministic parameter init (weights pre-transposed / pre-fused / pre-bf16)
# ----------------------------------------------------------------------------
def init_params(key):
    keys = iter(jax.random.split(key, 4 + N_LAYERS * 8))
    bf16 = jnp.bfloat16

    def nrm(shape, scale=0.05):
        return jax.random.normal(next(keys), shape, jnp.float32) * scale

    embed = nrm((VOCAB, DIM), 0.5)
    params = {
        'embed': embed,                              # f32 for the gather
        'embed_t': embed.T.astype(bf16),             # pre-transposed tied head
        'norm': jnp.ones((1, DIM), jnp.float32),
    }
    cos, sin = build_rotary_tables(HEAD_DIM, MAX_LEN)
    params['rope_cos'] = cos
    params['rope_sin'] = sin

    layers = []
    for _ in range(N_LAYERS):
        wq, wk, wv = nrm((DIM, DIM)), nrm((DIM, DIM)), nrm((DIM, DIM))
        layers.append({
            'wqkv_t': jnp.concatenate([wq.T, wk.T, wv.T], axis=1).astype(bf16),
            'wo_t': nrm((DIM, DIM)).T.astype(bf16),                 # (D, D)
            'ln1': jnp.ones((1, DIM), jnp.float32),
            'ln2': jnp.ones((1, DIM), jnp.float32),
            'gate_t': nrm((NUM_EXPERTS, DIM)).T,                    # (D, E) f32
            'w1_t': jnp.transpose(nrm((NUM_EXPERTS, 2 * D_FF, DIM)),
                                  (0, 2, 1)).astype(bf16),          # (E, D, 2F)
            'w2_t': jnp.transpose(nrm((NUM_EXPERTS, DIM, D_FF)),
                                  (0, 2, 1)).astype(bf16),          # (E, F, D)
        })
    params['layers'] = layers
    return params


# ----------------------------------------------------------------------------
if __name__ == "__main__":
    key = jax.random.PRNGKey(0)
    pkey, tkey = jax.random.split(key)
    params = init_params(pkey)

    B, S = 2, 16
    tokens = jax.random.randint(tkey, (B, S), 0, VOCAB, dtype=jnp.int32)

    fwd = jax.jit(mixtral_forward)
    logits, aux_loss = fwd(params, tokens)
    jax.block_until_ready((logits, aux_loss))

    assert logits.shape == (B, S, VOCAB)
    assert jnp.isfinite(logits).all()
    assert jnp.isfinite(aux_loss)
    print("KERNEL_OK")
</pallas_src>

<mosaic_0001>
module attributes {stable_mosaic.version = 11 : i64} {
  func.func @_attn_gate_kernel(%arg0: i32, %arg1: memref<16x64xf32, #tpu.memory_space<vmem>>, %arg2: memref<1x64xf32, #tpu.memory_space<vmem>>, %arg3: memref<64x192xbf16, #tpu.memory_space<vmem>>, %arg4: memref<64x64xbf16, #tpu.memory_space<vmem>>, %arg5: memref<16x8xf32, #tpu.memory_space<vmem>>, %arg6: memref<16x8xf32, #tpu.memory_space<vmem>>, %arg7: memref<1x64xf32, #tpu.memory_space<vmem>>, %arg8: memref<64x4xf32, #tpu.memory_space<vmem>>, %arg9: memref<16x64xf32, #tpu.memory_space<vmem>>, %arg10: memref<16x64xf32, #tpu.memory_space<vmem>>, %arg11: memref<16x4xf32, #tpu.memory_space<vmem>>) attributes {dimension_semantics = [#tpu.dimension_semantics<parallel>], iteration_bounds = array<i64: 2>, scalar_prefetch = 0 : i64, scratch_operands = 0 : i64, tpu.core_type = #tpu.core_type<tc>, window_params = [{transform_indices = @transform_0, window_bounds = array<i64: 16, 64>}, {pipeline_mode = #tpu.pipeline_mode<synchronous>, transform_indices = @transform_1, window_bounds = array<i64: 1, 64>}, {pipeline_mode = #tpu.pipeline_mode<synchronous>, transform_indices = @transform_2, window_bounds = array<i64: 64, 192>}, {pipeline_mode = #tpu.pipeline_mode<synchronous>, transform_indices = @transform_3, window_bounds = array<i64: 64, 64>}, {pipeline_mode = #tpu.pipeline_mode<synchronous>, transform_indices = @transform_4, window_bounds = array<i64: 16, 8>}, {pipeline_mode = #tpu.pipeline_mode<synchronous>, transform_indices = @transform_5, window_bounds = array<i64: 16, 8>}, {pipeline_mode = #tpu.pipeline_mode<synchronous>, transform_indices = @transform_6, window_bounds = array<i64: 1, 64>}, {pipeline_mode = #tpu.pipeline_mode<synchronous>, transform_indices = @transform_7, window_bounds = array<i64: 64, 4>}, {transform_indices = @transform_8, window_bounds = array<i64: 16, 64>}, {transform_indices = @transform_9, window_bounds = array<i64: 16, 64>}, {transform_indices = @transform_10, window_bounds = array<i64: 16, 4>}]} {
    %c0 = arith.constant 0 : index
    %c0_0 = arith.constant 0 : index
    %0 = vector.load %arg1[%c0, %c0_0] : memref<16x64xf32, #tpu.memory_space<vmem>>, vector<16x64xf32>
    %1 = arith.mulf %0, %0 : vector<16x64xf32>
    %cst = arith.constant dense<0.000000e+00> : vector<16xf32>
    %2 = vector.multi_reduction <add>, %1, %cst [1] : vector<16x64xf32> to vector<16xf32>
    %3 = vector.shape_cast %2 : vector<16xf32> to vector<16x1xf32>
    %cst_1 = arith.constant 6.400000e+01 : f32
    %4 = vector.broadcast %cst_1 : f32 to vector<16x1xf32>
    %5 = arith.divf %3, %4 : vector<16x1xf32>
    %cst_2 = arith.constant 9.99999997E-7 : f32
    %6 = vector.broadcast %cst_2 : f32 to vector<16x1xf32>
    %7 = arith.addf %5, %6 : vector<16x1xf32>
    %8 = math.rsqrt %7 : vector<16x1xf32>
    %9 = vector.broadcast %8 : vector<16x1xf32> to vector<16x64xf32>
    %10 = arith.mulf %0, %9 : vector<16x64xf32>
    %c0_3 = arith.constant 0 : index
    %c0_4 = arith.constant 0 : index
    %11 = vector.load %arg2[%c0_3, %c0_4] : memref<1x64xf32, #tpu.memory_space<vmem>>, vector<1x64xf32>
    %12 = vector.broadcast %11 : vector<1x64xf32> to vector<16x64xf32>
    %13 = arith.mulf %10, %12 : vector<16x64xf32>
    %14 = arith.truncf %13 : vector<16x64xf32> to vector<16x64xbf16>
    %c0_5 = arith.constant 0 : index
    %c0_6 = arith.constant 0 : index
    %15 = vector.load %arg3[%c0_5, %c0_6] : memref<64x192xbf16, #tpu.memory_space<vmem>>, vector<64x192xbf16>
    %cst_7 = arith.constant dense<0.000000e+00> : vector<16x192xf32>
    %16 = tpu.matmul %14, %15, %cst_7 {dimension_numbers = #tpu.dot_dimension_numbers<[1], [0], [0], [1], [0, 0, 1, 1], [], []>} : vector<16x64xbf16>, vector<64x192xbf16>, vector<16x192xf32> -> vector<16x192xf32>
    %c0_8 = arith.constant 0 : index
    %c0_9 = arith.constant 0 : index
    %17 = vector.load %arg5[%c0_8, %c0_9] : memref<16x8xf32, #tpu.memory_space<vmem>>, vector<16x8xf32>
    %c0_10 = arith.constant 0 : index
    %c0_11 = arith.constant 0 : index
    %18 = vector.load %arg6[%c0_10, %c0_11] : memref<16x8xf32, #tpu.memory_space<vmem>>, vector<16x8xf32>
    %19 = tpu.iota {dimensions = array<i32: 0>} : vector<16x16xi32>
    %20 = tpu.iota {dimensions = array<i32: 1>} : vector<16x16xi32>
    %21 = arith.cmpi sle, %20, %19 : vector<16x16xi32>
    %22 = arith.subi %19, %20 : vector<16x16xi32>
    %c8_i32 = arith.constant 8 : i32
    %23 = vector.broadcast %c8_i32 : i32 to vector<16x16xi32>
    %24 = arith.cmpi slt, %22, %23 : vector<16x16xi32>
    %25 = arith.andi %21, %24 : vector<16x16xi1>
    %26 = vector.extract_strided_slice %16 {offsets = [0, 0], sizes = [16, 16], strides = [1, 1]} : vector<16x192xf32> to vector<16x16xf32>
    %27 = vector.extract_strided_slice %16 {offsets = [0, 64], sizes = [16, 16], strides = [1, 1]} : vector<16x192xf32> to vector<16x16xf32>
    %28 = vector.extract_strided_slice %16 {offsets = [0, 128], sizes = [16, 16], strides = [1, 1]} : vector<16x192xf32> to vector<16x16xf32>
    %29 = vector.extract_strided_slice %26 {offsets = [0, 0], sizes = [16, 8], strides = [1, 1]} : vector<16x16xf32> to vector<16x8xf32>
    %30 = vector.extract_strided_slice %26 {offsets = [0, 8], sizes = [16, 8], strides = [1, 1]} : vector<16x16xf32> to vector<16x8xf32>
    %31 = vector.extract_strided_slice %27 {offsets = [0, 0], sizes = [16, 8], strides = [1, 1]} : vector<16x16xf32> to vector<16x8xf32>
    %32 = vector.extract_strided_slice %27 {offsets = [0, 8], sizes = [16, 8], strides = [1, 1]} : vector<16x16xf32> to vector<16x8xf32>
    %33 = arith.mulf %29, %17 : vector<16x8xf32>
    %34 = arith.mulf %30, %18 : vector<16x8xf32>
    %35 = arith.subf %33, %34 : vector<16x8xf32>
    %36 = arith.mulf %30, %17 : vector<16x8xf32>
    %37 = arith.mulf %29, %18 : vector<16x8xf32>
    %38 = arith.addf %36, %37 : vector<16x8xf32>
    %39 = arith.mulf %31, %17 : vector<16x8xf32>
    %40 = arith.mulf %32, %18 : vector<16x8xf32>
    %41 = arith.subf %39, %40 : vector<16x8xf32>
    %42 = arith.mulf %32, %17 : vector<16x8xf32>
    %43 = arith.mulf %31, %18 : vector<16x8xf32>
    %44 = arith.addf %42, %43 : vector<16x8xf32>
    %45 = arith.truncf %35 : vector<16x8xf32> to vector<16x8xbf16>
    %46 = arith.truncf %41 : vector<16x8xf32> to vector<16x8xbf16>
    %cst_12 = arith.constant dense<0.000000e+00> : vector<16x16xf32>
    %47 = tpu.matmul %45, %46, %cst_12 {dimension_numbers = #tpu.dot_dimension_numbers<[1], [1], [0], [0], [0, 0, 1, 0], [], []>} : vector<16x8xbf16>, vector<16x8xbf16>, vector<16x16xf32> -> vector<16x16xf32>
    %48 = arith.truncf %38 : vector<16x8xf32> to vector<16x8xbf16>
    %49 = arith.truncf %44 : vector<16x8xf32> to vector<16x8xbf16>
    %cst_13 = arith.constant dense<0.000000e+00> : vector<16x16xf32>
    %50 = tpu.matmul %48, %49, %cst_13 {dimension_numbers = #tpu.dot_dimension_numbers<[1], [1], [0], [0], [0, 0, 1, 0], [], []>} : vector<16x8xbf16>, vector<16x8xbf16>, vector<16x16xf32> -> vector<16x16xf32>
    %51 = arith.addf %47, %50 : vector<16x16xf32>
    %cst_14 = arith.constant 2.500000e-01 : f32
    %52 = vector.broadcast %cst_14 : f32 to vector<16x16xf32>
    %53 = arith.mulf %51, %52 : vector<16x16xf32>
    %cst_15 = arith.constant -1.000000e+30 : f32
    %54 = vector.broadcast %cst_15 : f32 to vector<16x16xf32>
    %55 = arith.select %25, %53, %54 : vector<16x16xi1>, vector<16x16xf32>
    %cst_16 = arith.constant dense<0xFF800000> : vector<16xf32>
    %56 = vector.multi_reduction <maximumf>, %55, %cst_16 [1] : vector<16x16xf32> to vector<16xf32>
    %57 = vector.shape_cast %56 : vector<16xf32> to vector<16x1xf32>
    %58 = vector.broadcast %57 : vector<16x1xf32> to vector<16x16xf32>
    %59 = arith.subf %55, %58 : vector<16x16xf32>
    %60 = math.exp %59 : vector<16x16xf32>
    %cst_17 = arith.constant dense<0.000000e+00> : vector<16xf32>
    %61 = vector.multi_reduction <add>, %60, %cst_17 [1] : vector<16x16xf32> to vector<16xf32>
    %62 = vector.shape_cast %61 : vector<16xf32> to vector<16x1xf32>
    %63 = tpu.reciprocal %62 {approx = true} : vector<16x1xf32> -> vector<16x1xf32>
    %64 = vector.broadcast %63 : vector<16x1xf32> to vector<16x16xf32>
    %65 = arith.mulf %60, %64 : vector<16x16xf32>
    %66 = arith.truncf %65 : vector<16x16xf32> to vector<16x16xbf16>
    %67 = arith.truncf %28 : vector<16x16xf32> to vector<16x16xbf16>
    %cst_18 = arith.constant dense<0.000000e+00> : vector<16x16xf32>
    %68 = tpu.matmul %66, %67, %cst_18 {dimension_numbers = #tpu.dot_dimension_numbers<[1], [0], [0], [1], [0, 0, 1, 1], [], []>} : vector<16x16xbf16>, vector<16x16xbf16>, vector<16x16xf32> -> vector<16x16xf32>
    %69 = vector.extract_strided_slice %16 {offsets = [0, 16], sizes = [16, 16], strides = [1, 1]} : vector<16x192xf32> to vector<16x16xf32>
    %70 = vector.extract_strided_slice %16 {offsets = [0, 80], sizes = [16, 16], strides = [1, 1]} : vector<16x192xf32> to vector<16x16xf32>
    %71 = vector.extract_strided_slice %16 {offsets = [0, 144], sizes = [16, 16], strides = [1, 1]} : vector<16x192xf32> to vector<16x16xf32>
    %72 = vector.extract_strided_slice %69 {offsets = [0, 0], sizes = [16, 8], strides = [1, 1]} : vector<16x16xf32> to vector<16x8xf32>
    %73 = vector.extract_strided_slice %69 {offsets = [0, 8], sizes = [16, 8], strides = [1, 1]} : vector<16x16xf32> to vector<16x8xf32>
    %74 = vector.extract_strided_slice %70 {offsets = [0, 0], sizes = [16, 8], strides = [1, 1]} : vector<16x16xf32> to vector<16x8xf32>
    %75 = vector.extract_strided_slice %70 {offsets = [0, 8], sizes = [16, 8], strides = [1, 1]} : vector<16x16xf32> to vector<16x8xf32>
    %76 = arith.mulf %72, %17 : vector<16x8xf32>
    %77 = arith.mulf %73, %18 : vector<16x8xf32>
    %78 = arith.subf %76, %77 : vector<16x8xf32>
    %79 = arith.mulf %73, %17 : vector<16x8xf32>
    %80 = arith.mulf %72, %18 : vector<16x8xf32>
    %81 = arith.addf %79, %80 : vector<16x8xf32>
    %82 = arith.mulf %74, %17 : vector<16x8xf32>
    %83 = arith.mulf %75, %18 : vector<16x8xf32>
    %84 = arith.subf %82, %83 : vector<16x8xf32>
    %85 = arith.mulf %75, %17 : vector<16x8xf32>
    %86 = arith.mulf %74, %18 : vector<16x8xf32>
    %87 = arith.addf %85, %86 : vector<16x8xf32>
    %88 = arith.truncf %78 : vector<16x8xf32> to vector<16x8xbf16>
    %89 = arith.truncf %84 : vector<16x8xf32> to vector<16x8xbf16>
    %cst_19 = arith.constant dense<0.000000e+00> : vector<16x16xf32>
    %90 = tpu.matmul %88, %89, %cst_19 {dimension_numbers = #tpu.dot_dimension_numbers<[1], [1], [0], [0], [0, 0, 1, 0], [], []>} : vector<16x8xbf16>, vector<16x8xbf16>, vector<16x16xf32> -> vector<16x16xf32>
    %91 = arith.truncf %81 : vector<16x8xf32> to vector<16x8xbf16>
    %92 = arith.truncf %87 : vector<16x8xf32> to vector<16x8xbf16>
    %cst_20 = arith.constant dense<0.000000e+00> : vector<16x16xf32>
    %93 = tpu.matmul %91, %92, %cst_20 {dimension_numbers = #tpu.dot_dimension_numbers<[1], [1], [0], [0], [0, 0, 1, 0], [], []>} : vector<16x8xbf16>, vector<16x8xbf16>, vector<16x16xf32> -> vector<16x16xf32>
    %94 = arith.addf %90, %93 : vector<16x16xf32>
    %cst_21 = arith.constant 2.500000e-01 : f32
    %95 = vector.broadcast %cst_21 : f32 to vector<16x16xf32>
    %96 = arith.mulf %94, %95 : vector<16x16xf32>
    %cst_22 = arith.constant -1.000000e+30 : f32
    %97 = vector.broadcast %cst_22 : f32 to vector<16x16xf32>
    %98 = arith.select %25, %96, %97 : vector<16x16xi1>, vector<16x16xf32>
    %cst_23 = arith.constant dense<0xFF800000> : vector<16xf32>
    %99 = vector.multi_reduction <maximumf>, %98, %cst_23 [1] : vector<16x16xf32> to vector<16xf32>
    %100 = vector.shape_cast %99 : vector<16xf32> to vector<16x1xf32>
    %101 = vector.broadcast %100 : vector<16x1xf32> to vector<16x16xf32>
    %102 = arith.subf %98, %101 : vector<16x16xf32>
    %103 = math.exp %102 : vector<16x16xf32>
    %cst_24 = arith.constant dense<0.000000e+00> : vector<16xf32>
    %104 = vector.multi_reduction <add>, %103, %cst_24 [1] : vector<16x16xf32> to vector<16xf32>
    %105 = vector.shape_cast %104 : vector<16xf32> to vector<16x1xf32>
    %106 = tpu.reciprocal %105 {approx = true} : vector<16x1xf32> -> vector<16x1xf32>
    %107 = vector.broadcast %106 : vector<16x1xf32> to vector<16x16xf32>
    %108 = arith.mulf %103, %107 : vector<16x16xf32>
    %109 = arith.truncf %108 : vector<16x16xf32> to vector<16x16xbf16>
    %110 = arith.truncf %71 : vector<16x16xf32> to vector<16x16xbf16>
    %cst_25 = arith.constant dense<0.000000e+00> : vector<16x16xf32>
    %111 = tpu.matmul %109, %110, %cst_25 {dimension_numbers = #tpu.dot_dimension_numbers<[1], [0], [0], [1], [0, 0, 1, 1], [], []>} : vector<16x16xbf16>, vector<16x16xbf16>, vector<16x16xf32> -> vector<16x16xf32>
    %112 = vector.extract_strided_slice %16 {offsets = [0, 32], sizes = [16, 16], strides = [1, 1]} : vector<16x192xf32> to vector<16x16xf32>
    %113 = vector.extract_strided_slice %16 {offsets = [0, 96], sizes = [16, 16], strides = [1, 1]} : vector<16x192xf32> to vector<16x16xf32>
    %114 = vector.extract_strided_slice %16 {offsets = [0, 160], sizes = [16, 16], strides = [1, 1]} : vector<16x192xf32> to vector<16x16xf32>
    %115 = vector.extract_strided_slice %112 {offsets = [0, 0], sizes = [16, 8], strides = [1, 1]} : vector<16x16xf32> to vector<16x8xf32>
    %116 = vector.extract_strided_slice %112 {offsets = [0, 8], sizes = [16, 8], strides = [1, 1]} : vector<16x16xf32> to vector<16x8xf32>
    %117 = vector.extract_strided_slice %113 {offsets = [0, 0], sizes = [16, 8], strides = [1, 1]} : vector<16x16xf32> to vector<16x8xf32>
    %118 = vector.extract_strided_slice %113 {offsets = [0, 8], sizes = [16, 8], strides = [1, 1]} : vector<16x16xf32> to vector<16x8xf32>
    %119 = arith.mulf %115, %17 : vector<16x8xf32>
    %120 = arith.mulf %116, %18 : vector<16x8xf32>
    %121 = arith.subf %119, %120 : vector<16x8xf32>
    %122 = arith.mulf %116, %17 : vector<16x8xf32>
    %123 = arith.mulf %115, %18 : vector<16x8xf32>
    %124 = arith.addf %122, %123 : vector<16x8xf32>
    %125 = arith.mulf %117, %17 : vector<16x8xf32>
    %126 = arith.mulf %118, %18 : vector<16x8xf32>
    %127 = arith.subf %125, %126 : vector<16x8xf32>
    %128 = arith.mulf %118, %17 : vector<16x8xf32>
    %129 = arith.mulf %117, %18 : vector<16x8xf32>
    %130 = arith.addf %128, %129 : vector<16x8xf32>
    %131 = arith.truncf %121 : vector<16x8xf32> to vector<16x8xbf16>
    %132 = arith.truncf %127 : vector<16x8xf32> to vector<16x8xbf16>
    %cst_26 = arith.constant dense<0.000000e+00> : vector<16x16xf32>
    %133 = tpu.matmul %131, %132, %cst_26 {dimension_numbers = #tpu.dot_dimension_numbers<[1], [1], [0], [0], [0, 0, 1, 0], [], []>} : vector<16x8xbf16>, vector<16x8xbf16>, vector<16x16xf32> -> vector<16x16xf32>
    %134 = arith.truncf %124 : vector<16x8xf32> to vector<16x8xbf16>
    %135 = arith.truncf %130 : vector<16x8xf32> to vector<16x8xbf16>
    %cst_27 = arith.constant dense<0.000000e+00> : vector<16x16xf32>
    %136 = tpu.matmul %134, %135, %cst_27 {dimension_numbers = #tpu.dot_dimension_numbers<[1], [1], [0], [0], [0, 0, 1, 0], [], []>} : vector<16x8xbf16>, vector<16x8xbf16>, vector<16x16xf32> -> vector<16x16xf32>
    %137 = arith.addf %133, %136 : vector<16x16xf32>
    %cst_28 = arith.constant 2.500000e-01 : f32
    %138 = vector.broadcast %cst_28 : f32 to vector<16x16xf32>
    %139 = arith.mulf %137, %138 : vector<16x16xf32>
    %cst_29 = arith.constant -1.000000e+30 : f32
    %140 = vector.broadcast %cst_29 : f32 to vector<16x16xf32>
    %141 = arith.select %25, %139, %140 : vector<16x16xi1>, vector<16x16xf32>
    %cst_30 = arith.constant dense<0xFF800000> : vector<16xf32>
    %142 = vector.multi_reduction <maximumf>, %141, %cst_30 [1] : vector<16x16xf32> to vector<16xf32>
    %143 = vector.shape_cast %142 : vector<16xf32> to vector<16x1xf32>
    %144 = vector.broadcast %143 : vector<16x1xf32> to vector<16x16xf32>
    %145 = arith.subf %141, %144 : vector<16x16xf32>
    %146 = math.exp %145 : vector<16x16xf32>
    %cst_31 = arith.constant dense<0.000000e+00> : vector<16xf32>
    %147 = vector.multi_reduction <add>, %146, %cst_31 [1] : vector<16x16xf32> to vector<16xf32>
    %148 = vector.shape_cast %147 : vector<16xf32> to vector<16x1xf32>
    %149 = tpu.reciprocal %148 {approx = true} : vector<16x1xf32> -> vector<16x1xf32>
    %150 = vector.broadcast %149 : vector<16x1xf32> to vector<16x16xf32>
    %151 = arith.mulf %146, %150 : vector<16x16xf32>
    %152 = arith.truncf %151 : vector<16x16xf32> to vector<16x16xbf16>
    %153 = arith.truncf %114 : vector<16x16xf32> to vector<16x16xbf16>
    %cst_32 = arith.constant dense<0.000000e+00> : vector<16x16xf32>
    %154 = tpu.matmul %152, %153, %cst_32 {dimension_numbers = #tpu.dot_dimension_numbers<[1], [0], [0], [1], [0, 0, 1, 1], [], []>} : vector<16x16xbf16>, vector<16x16xbf16>, vector<16x16xf32> -> vector<16x16xf32>
    %155 = vector.extract_strided_slice %16 {offsets = [0, 48], sizes = [16, 16], strides = [1, 1]} : vector<16x192xf32> to vector<16x16xf32>
    %156 = vector.extract_strided_slice %16 {offsets = [0, 112], sizes = [16, 16], strides = [1, 1]} : vector<16x192xf32> to vector<16x16xf32>
    %157 = vector.extract_strided_slice %16 {offsets = [0, 176], sizes = [16, 16], strides = [1, 1]} : vector<16x192xf32> to vector<16x16xf32>
    %158 = vector.extract_strided_slice %155 {offsets = [0, 0], sizes = [16, 8], strides = [1, 1]} : vector<16x16xf32> to vector<16x8xf32>
    %159 = vector.extract_strided_slice %155 {offsets = [0, 8], sizes = [16, 8], strides = [1, 1]} : vector<16x16xf32> to vector<16x8xf32>
    %160 = vector.extract_strided_slice %156 {offsets = [0, 0], sizes = [16, 8], strides = [1, 1]} : vector<16x16xf32> to vector<16x8xf32>
    %161 = vector.extract_strided_slice %156 {offsets = [0, 8], sizes = [16, 8], strides = [1, 1]} : vector<16x16xf32> to vector<16x8xf32>
    %162 = arith.mulf %158, %17 : vector<16x8xf32>
    %163 = arith.mulf %159, %18 : vector<16x8xf32>
    %164 = arith.subf %162, %163 : vector<16x8xf32>
    %165 = arith.mulf %159, %17 : vector<16x8xf32>
    %166 = arith.mulf %158, %18 : vector<16x8xf32>
    %167 = arith.addf %165, %166 : vector<16x8xf32>
    %168 = arith.mulf %160, %17 : vector<16x8xf32>
    %169 = arith.mulf %161, %18 : vector<16x8xf32>
    %170 = arith.subf %168, %169 : vector<16x8xf32>
    %171 = arith.mulf %161, %17 : vector<16x8xf32>
    %172 = arith.mulf %160, %18 : vector<16x8xf32>
    %173 = arith.addf %171, %172 : vector<16x8xf32>
    %174 = arith.truncf %164 : vector<16x8xf32> to vector<16x8xbf16>
    %175 = arith.truncf %170 : vector<16x8xf32> to vector<16x8xbf16>
    %cst_33 = arith.constant dense<0.000000e+00> : vector<16x16xf32>
    %176 = tpu.matmul %174, %175, %cst_33 {dimension_numbers = #tpu.dot_dimension_numbers<[1], [1], [0], [0], [0, 0, 1, 0], [], []>} : vector<16x8xbf16>, vector<16x8xbf16>, vector<16x16xf32> -> vector<16x16xf32>
    %177 = arith.truncf %167 : vector<16x8xf32> to vector<16x8xbf16>
    %178 = arith.truncf %173 : vector<16x8xf32> to vector<16x8xbf16>
    %cst_34 = arith.constant dense<0.000000e+00> : vector<16x16xf32>
    %179 = tpu.matmul %177, %178, %cst_34 {dimension_numbers = #tpu.dot_dimension_numbers<[1], [1], [0], [0], [0, 0, 1, 0], [], []>} : vector<16x8xbf16>, vector<16x8xbf16>, vector<16x16xf32> -> vector<16x16xf32>
    %180 = arith.addf %176, %179 : vector<16x16xf32>
    %cst_35 = arith.constant 2.500000e-01 : f32
    %181 = vector.broadcast %cst_35 : f32 to vector<16x16xf32>
    %182 = arith.mulf %180, %181 : vector<16x16xf32>
    %cst_36 = arith.constant -1.000000e+30 : f32
    %183 = vector.broadcast %cst_36 : f32 to vector<16x16xf32>
    %184 = arith.select %25, %182, %183 : vector<16x16xi1>, vector<16x16xf32>
    %cst_37 = arith.constant dense<0xFF800000> : vector<16xf32>
    %185 = vector.multi_reduction <maximumf>, %184, %cst_37 [1] : vector<16x16xf32> to vector<16xf32>
    %186 = vector.shape_cast %185 : vector<16xf32> to vector<16x1xf32>
    %187 = vector.broadcast %186 : vector<16x1xf32> to vector<16x16xf32>
    %188 = arith.subf %184, %187 : vector<16x16xf32>
    %189 = math.exp %188 : vector<16x16xf32>
    %cst_38 = arith.constant dense<0.000000e+00> : vector<16xf32>
    %190 = vector.multi_reduction <add>, %189, %cst_38 [1] : vector<16x16xf32> to vector<16xf32>
    %191 = vector.shape_cast %190 : vector<16xf32> to vector<16x1xf32>
    %192 = tpu.reciprocal %191 {approx = true} : vector<16x1xf32> -> vector<16x1xf32>
    %193 = vector.broadcast %192 : vector<16x1xf32> to vector<16x16xf32>
    %194 = arith.mulf %189, %193 : vector<16x16xf32>
    %195 = arith.truncf %194 : vector<16x16xf32> to vector<16x16xbf16>
    %196 = arith.truncf %157 : vector<16x16xf32> to vector<16x16xbf16>
    %cst_39 = arith.constant dense<0.000000e+00> : vector<16x16xf32>
    %197 = tpu.matmul %195, %196, %cst_39 {dimension_numbers = #tpu.dot_dimension_numbers<[1], [0], [0], [1], [0, 0, 1, 1], [], []>} : vector<16x16xbf16>, vector<16x16xbf16>, vector<16x16xf32> -> vector<16x16xf32>
    %198 = tpu.concatenate %68, %111, %154, %197 in 1 : vector<16x16xf32>, vector<16x16xf32>, vector<16x16xf32>, vector<16x16xf32> -> vector<16x64xf32>
    %199 = arith.truncf %198 : vector<16x64xf32> to vector<16x64xbf16>
    %c0_40 = arith.constant 0 : index
    %c0_41 = arith.constant 0 : index
    %200 = vector.load %arg4[%c0_40, %c0_41] : memref<64x64xbf16, #tpu.memory_space<vmem>>, vector<64x64xbf16>
    %cst_42 = arith.constant dense<0.000000e+00> : vector<16x64xf32>
    %201 = tpu.matmul %199, %200, %cst_42 {dimension_numbers = #tpu.dot_dimension_numbers<[1], [0], [0], [1], [0, 0, 1, 1], [], []>} : vector<16x64xbf16>, vector<64x64xbf16>, vector<16x64xf32> -> vector<16x64xf32>
    %202 = arith.addf %0, %201 : vector<16x64xf32>
    %c0_43 = arith.constant 0 : index
    %c0_44 = arith.constant 0 : index
    %203 = vector.load %arg9[%c0_43, %c0_44] : memref<16x64xf32, #tpu.memory_space<vmem>>, vector<16x64xf32>
    tpu.vector_store %arg9[%c0_43, %c0_44], %202 {strides = array<i32>} : memref<16x64xf32, #tpu.memory_space<vmem>>, vector<16x64xf32>,
    %204 = arith.mulf %202, %202 : vector<16x64xf32>
    %cst_45 = arith.constant dense<0.000000e+00> : vector<16xf32>
    %205 = vector.multi_reduction <add>, %204, %cst_45 [1] : vector<16x64xf32> to vector<16xf32>
    %206 = vector.shape_cast %205 : vector<16xf32> to vector<16x1xf32>
    %cst_46 = arith.constant 6.400000e+01 : f32
    %207 = vector.broadcast %cst_46 : f32 to vector<16x1xf32>
    %208 = arith.divf %206, %207 : vector<16x1xf32>
    %cst_47 = arith.constant 9.99999997E-7 : f32
    %209 = vector.broadcast %cst_47 : f32 to vector<16x1xf32>
    %210 = arith.addf %208, %209 : vector<16x1xf32>
    %211 = math.rsqrt %210 : vector<16x1xf32>
    %212 = vector.broadcast %211 : vector<16x1xf32> to vector<16x64xf32>
    %213 = arith.mulf %202, %212 : vector<16x64xf32>
    %c0_48 = arith.constant 0 : index
    %c0_49 = arith.constant 0 : index
    %214 = vector.load %arg7[%c0_48, %c0_49] : memref<1x64xf32, #tpu.memory_space<vmem>>, vector<1x64xf32>
    %215 = vector.broadcast %214 : vector<1x64xf32> to vector<16x64xf32>
    %216 = arith.mulf %213, %215 : vector<16x64xf32>
    %c0_50 = arith.constant 0 : index
    %c0_51 = arith.constant 0 : index
    %217 = vector.load %arg10[%c0_50, %c0_51] : memref<16x64xf32, #tpu.memory_space<vmem>>, vector<16x64xf32>
    tpu.vector_store %arg10[%c0_50, %c0_51], %216 {strides = array<i32>} : memref<16x64xf32, #tpu.memory_space<vmem>>, vector<16x64xf32>,
    %c0_52 = arith.constant 0 : index
    %c0_53 = arith.constant 0 : index
    %218 = vector.load %arg8[%c0_52, %c0_53] : memref<64x4xf32, #tpu.memory_space<vmem>>, vector<64x4xf32>
    %cst_54 = arith.constant dense<0.000000e+00> : vector<16x4xf32>
    %219 = tpu.matmul %216, %218, %cst_54 {dimension_numbers = #tpu.dot_dimension_numbers<[1], [0], [0], [1], [0, 0, 1, 1], [], []>} : vector<16x64xf32>, vector<64x4xf32>, vector<16x4xf32> -> vector<16x4xf32>
    %c0_55 = arith.constant 0 : index
    %c0_56 = arith.constant 0 : index
    %220 = vector.load %arg11[%c0_55, %c0_56] : memref<16x4xf32, #tpu.memory_space<vmem>>, vector<16x4xf32>
    tpu.vector_store %arg11[%c0_55, %c0_56], %219 {strides = array<i32>} : memref<16x4xf32, #tpu.memory_space<vmem>>, vector<16x4xf32>,
    return
  }
  func.func @transform_0(%arg0: i32) -> (i32, i32) {
    %c0_i32 = arith.constant 0 : i32
    %c0_i32_0 = arith.constant 0 : i32
    return %arg0, %c0_i32 : i32, i32
  }
  func.func @transform_1(%arg0: i32) -> (i32, i32) {
    %c0_i32 = arith.constant 0 : i32
    %c0_i32_0 = arith.constant 0 : i32
    %c0_i32_1 = arith.constant 0 : i32
    return %c0_i32, %c0_i32_0 : i32, i32
  }
  func.func @transform_2(%arg0: i32) -> (i32, i32) {
    %c0_i32 = arith.constant 0 : i32
    %c0_i32_0 = arith.constant 0 : i32
    %c0_i32_1 = arith.constant 0 : i32
    return %c0_i32, %c0_i32_0 : i32, i32
  }
  func.func @transform_3(%arg0: i32) -> (i32, i32) {
    %c0_i32 = arith.constant 0 : i32
    %c0_i32_0 = arith.constant 0 : i32
    %c0_i32_1 = arith.constant 0 : i32
    return %c0_i32, %c0_i32_0 : i32, i32
  }
  func.func @transform_4(%arg0: i32) -> (i32, i32) {
    %c0_i32 = arith.constant 0 : i32
    %c0_i32_0 = arith.constant 0 : i32
    %c0_i32_1 = arith.constant 0 : i32
    return %c0_i32, %c0_i32_0 : i32, i32
  }
  func.func @transform_5(%arg0: i32) -> (i32, i32) {
    %c0_i32 = arith.constant 0 : i32
    %c0_i32_0 = arith.constant 0 : i32
    %c0_i32_1 = arith.constant 0 : i32
    return %c0_i32, %c0_i32_0 : i32, i32
  }
  func.func @transform_6(%arg0: i32) -> (i32, i32) {
    %c0_i32 = arith.constant 0 : i32
    %c0_i32_0 = arith.constant 0 : i32
    %c0_i32_1 = arith.constant 0 : i32
    return %c0_i32, %c0_i32_0 : i32, i32
  }
  func.func @transform_7(%arg0: i32) -> (i32, i32) {
    %c0_i32 = arith.constant 0 : i32
    %c0_i32_0 = arith.constant 0 : i32
    %c0_i32_1 = arith.constant 0 : i32
    return %c0_i32, %c0_i32_0 : i32, i32
  }
  func.func @transform_8(%arg0: i32) -> (i32, i32) {
    %c0_i32 = arith.constant 0 : i32
    %c0_i32_0 = arith.constant 0 : i32
    return %arg0, %c0_i32 : i32, i32
  }
  func.func @transform_9(%arg0: i32) -> (i32, i32) {
    %c0_i32 = arith.constant 0 : i32
    %c0_i32_0 = arith.constant 0 : i32
    return %arg0, %c0_i32 : i32, i32
  }
  func.func @transform_10(%arg0: i32) -> (i32, i32) {
    %c0_i32 = arith.constant 0 : i32
    %c0_i32_0 = arith.constant 0 : i32
    return %arg0, %c0_i32 : i32, i32
  }
}

module attributes {stable_mosaic.version = 11 : i64} {
  func.func @_moe_kernel(%arg0: memref<32x64xf32, #tpu.memory_space<vmem>>, %arg1: memref<32x64xf32, #tpu.memory_space<vmem>>, %arg2: memref<4x32x1xf32, #tpu.memory_space<vmem>>, %arg3: memref<4x64x128xbf16, #tpu.memory_space<vmem>>, %arg4: memref<4x64x64xbf16, #tpu.memory_space<vmem>>, %arg5: memref<32x64xf32, #tpu.memory_space<vmem>>) attributes {dimension_semantics = [], scalar_prefetch = 0 : i64, scratch_operands = 0 : i64, tpu.core_type = #tpu.core_type<tc>} {
    %c0 = arith.constant 0 : index
    %c0_0 = arith.constant 0 : index
    %0 = vector.load %arg0[%c0, %c0_0] : memref<32x64xf32, #tpu.memory_space<vmem>>, vector<32x64xf32>
    %1 = arith.truncf %0 : vector<32x64xf32> to vector<32x64xbf16>
    %c0_1 = arith.constant 0 : index
    %c0_2 = arith.constant 0 : index
    %2 = vector.load %arg1[%c0_1, %c0_2] : memref<32x64xf32, #tpu.memory_space<vmem>>, vector<32x64xf32>
    %c0_3 = arith.constant 0 : index
    %c0_4 = arith.constant 0 : index
    %c0_5 = arith.constant 0 : index
    %3 = vector.load %arg3[%c0_3, %c0_4, %c0_5] : memref<4x64x128xbf16, #tpu.memory_space<vmem>>, vector<1x64x128xbf16>
    %4 = vector.shape_cast %3 : vector<1x64x128xbf16> to vector<64x128xbf16>
    %cst = arith.constant dense<0.000000e+00> : vector<32x128xf32>
    %5 = tpu.matmul %1, %4, %cst {dimension_numbers = #tpu.dot_dimension_numbers<[1], [0], [0], [1], [0, 0, 1, 1], [], []>} : vector<32x64xbf16>, vector<64x128xbf16>, vector<32x128xf32> -> vector<32x128xf32>
    %6 = vector.extract_strided_slice %5 {offsets = [0, 0], sizes = [32, 64], strides = [1, 1]} : vector<32x128xf32> to vector<32x64xf32>
    %7 = vector.extract_strided_slice %5 {offsets = [0, 64], sizes = [32, 64], strides = [1, 1]} : vector<32x128xf32> to vector<32x64xf32>
    %8 = arith.negf %7 : vector<32x64xf32>
    %9 = math.exp %8 : vector<32x64xf32>
    %cst_6 = arith.constant 1.000000e+00 : f32
    %10 = vector.broadcast %cst_6 : f32 to vector<32x64xf32>
    %11 = arith.addf %10, %9 : vector<32x64xf32>
    %12 = arith.divf %10, %11 : vector<32x64xf32>
    %13 = arith.mulf %7, %12 : vector<32x64xf32>
    %14 = arith.mulf %6, %13 : vector<32x64xf32>
    %15 = arith.truncf %14 : vector<32x64xf32> to vector<32x64xbf16>
    %c0_7 = arith.constant 0 : index
    %c0_8 = arith.constant 0 : index
    %c0_9 = arith.constant 0 : index
    %16 = vector.load %arg4[%c0_7, %c0_8, %c0_9] : memref<4x64x64xbf16, #tpu.memory_space<vmem>>, vector<1x64x64xbf16>
    %17 = vector.shape_cast %16 : vector<1x64x64xbf16> to vector<64x64xbf16>
    %cst_10 = arith.constant dense<0.000000e+00> : vector<32x64xf32>
    %18 = tpu.matmul %15, %17, %cst_10 {dimension_numbers = #tpu.dot_dimension_numbers<[1], [0], [0], [1], [0, 0, 1, 1], [], []>} : vector<32x64xbf16>, vector<64x64xbf16>, vector<32x64xf32> -> vector<32x64xf32>
    %c0_11 = arith.constant 0 : index
    %c0_12 = arith.constant 0 : index
    %c0_13 = arith.constant 0 : index
    %19 = vector.load %arg2[%c0_11, %c0_12, %c0_13] : memref<4x32x1xf32, #tpu.memory_space<vmem>>, vector<1x32x1xf32>
    %20 = vector.shape_cast %19 : vector<1x32x1xf32> to vector<32x1xf32>
    %21 = vector.broadcast %20 : vector<32x1xf32> to vector<32x64xf32>
    %22 = arith.mulf %21, %18 : vector<32x64xf32>
    %23 = arith.addf %2, %22 : vector<32x64xf32>
    %c1 = arith.constant 1 : index
    %c0_14 = arith.constant 0 : index
    %c0_15 = arith.constant 0 : index
    %24 = vector.load %arg3[%c1, %c0_14, %c0_15] : memref<4x64x128xbf16, #tpu.memory_space<vmem>>, vector<1x64x128xbf16>
    %25 = vector.shape_cast %24 : vector<1x64x128xbf16> to vector<64x128xbf16>
    %cst_16 = arith.constant dense<0.000000e+00> : vector<32x128xf32>
    %26 = tpu.matmul %1, %25, %cst_16 {dimension_numbers = #tpu.dot_dimension_numbers<[1], [0], [0], [1], [0, 0, 1, 1], [], []>} : vector<32x64xbf16>, vector<64x128xbf16>, vector<32x128xf32> -> vector<32x128xf32>
    %27 = vector.extract_strided_slice %26 {offsets = [0, 0], sizes = [32, 64], strides = [1, 1]} : vector<32x128xf32> to vector<32x64xf32>
    %28 = vector.extract_strided_slice %26 {offsets = [0, 64], sizes = [32, 64], strides = [1, 1]} : vector<32x128xf32> to vector<32x64xf32>
    %29 = arith.negf %28 : vector<32x64xf32>
    %30 = math.exp %29 : vector<32x64xf32>
    %cst_17 = arith.constant 1.000000e+00 : f32
    %31 = vector.broadcast %cst_17 : f32 to vector<32x64xf32>
    %32 = arith.addf %31, %30 : vector<32x64xf32>
    %33 = arith.divf %31, %32 : vector<32x64xf32>
    %34 = arith.mulf %28, %33 : vector<32x64xf32>
    %35 = arith.mulf %27, %34 : vector<32x64xf32>
    %36 = arith.truncf %35 : vector<32x64xf32> to vector<32x64xbf16>
    %c1_18 = arith.constant 1 : index
    %c0_19 = arith.constant 0 : index
    %c0_20 = arith.constant 0 : index
    %37 = vector.load %arg4[%c1_18, %c0_19, %c0_20] : memref<4x64x64xbf16, #tpu.memory_space<vmem>>, vector<1x64x64xbf16>
    %38 = vector.shape_cast %37 : vector<1x64x64xbf16> to vector<64x64xbf16>
    %cst_21 = arith.constant dense<0.000000e+00> : vector<32x64xf32>
    %39 = tpu.matmul %36, %38, %cst_21 {dimension_numbers = #tpu.dot_dimension_numbers<[1], [0], [0], [1], [0, 0, 1, 1], [], []>} : vector<32x64xbf16>, vector<64x64xbf16>, vector<32x64xf32> -> vector<32x64xf32>
    %c1_22 = arith.constant 1 : index
    %c0_23 = arith.constant 0 : index
    %c0_24 = arith.constant 0 : index
    %40 = vector.load %arg2[%c1_22, %c0_23, %c0_24] : memref<4x32x1xf32, #tpu.memory_space<vmem>>, vector<1x32x1xf32>
    %41 = vector.shape_cast %40 : vector<1x32x1xf32> to vector<32x1xf32>
    %42 = vector.broadcast %41 : vector<32x1xf32> to vector<32x64xf32>
    %43 = arith.mulf %42, %39 : vector<32x64xf32>
    %44 = arith.addf %23, %43 : vector<32x64xf32>
    %c2 = arith.constant 2 : index
    %c0_25 = arith.constant 0 : index
    %c0_26 = arith.constant 0 : index
    %45 = vector.load %arg3[%c2, %c0_25, %c0_26] : memref<4x64x128xbf16, #tpu.memory_space<vmem>>, vector<1x64x128xbf16>
    %46 = vector.shape_cast %45 : vector<1x64x128xbf16> to vector<64x128xbf16>
    %cst_27 = arith.constant dense<0.000000e+00> : vector<32x128xf32>
    %47 = tpu.matmul %1, %46, %cst_27 {dimension_numbers = #tpu.dot_dimension_numbers<[1], [0], [0], [1], [0, 0, 1, 1], [], []>} : vector<32x64xbf16>, vector<64x128xbf16>, vector<32x128xf32> -> vector<32x128xf32>
    %48 = vector.extract_strided_slice %47 {offsets = [0, 0], sizes = [32, 64], strides = [1, 1]} : vector<32x128xf32> to vector<32x64xf32>
    %49 = vector.extract_strided_slice %47 {offsets = [0, 64], sizes = [32, 64], strides = [1, 1]} : vector<32x128xf32> to vector<32x64xf32>
    %50 = arith.negf %49 : vector<32x64xf32>
    %51 = math.exp %50 : vector<32x64xf32>
    %cst_28 = arith.constant 1.000000e+00 : f32
    %52 = vector.broadcast %cst_28 : f32 to vector<32x64xf32>
    %53 = arith.addf %52, %51 : vector<32x64xf32>
    %54 = arith.divf %52, %53 : vector<32x64xf32>
    %55 = arith.mulf %49, %54 : vector<32x64xf32>
    %56 = arith.mulf %48, %55 : vector<32x64xf32>
    %57 = arith.truncf %56 : vector<32x64xf32> to vector<32x64xbf16>
    %c2_29 = arith.constant 2 : index
    %c0_30 = arith.constant 0 : index
    %c0_31 = arith.constant 0 : index
    %58 = vector.load %arg4[%c2_29, %c0_30, %c0_31] : memref<4x64x64xbf16, #tpu.memory_space<vmem>>, vector<1x64x64xbf16>
    %59 = vector.shape_cast %58 : vector<1x64x64xbf16> to vector<64x64xbf16>
    %cst_32 = arith.constant dense<0.000000e+00> : vector<32x64xf32>
    %60 = tpu.matmul %57, %59, %cst_32 {dimension_numbers = #tpu.dot_dimension_numbers<[1], [0], [0], [1], [0, 0, 1, 1], [], []>} : vector<32x64xbf16>, vector<64x64xbf16>, vector<32x64xf32> -> vector<32x64xf32>
    %c2_33 = arith.constant 2 : index
    %c0_34 = arith.constant 0 : index
    %c0_35 = arith.constant 0 : index
    %61 = vector.load %arg2[%c2_33, %c0_34, %c0_35] : memref<4x32x1xf32, #tpu.memory_space<vmem>>, vector<1x32x1xf32>
    %62 = vector.shape_cast %61 : vector<1x32x1xf32> to vector<32x1xf32>
    %63 = vector.broadcast %62 : vector<32x1xf32> to vector<32x64xf32>
    %64 = arith.mulf %63, %60 : vector<32x64xf32>
    %65 = arith.addf %44, %64 : vector<32x64xf32>
    %c3 = arith.constant 3 : index
    %c0_36 = arith.constant 0 : index
    %c0_37 = arith.constant 0 : index
    %66 = vector.load %arg3[%c3, %c0_36, %c0_37] : memref<4x64x128xbf16, #tpu.memory_space<vmem>>, vector<1x64x128xbf16>
    %67 = vector.shape_cast %66 : vector<1x64x128xbf16> to vector<64x128xbf16>
    %cst_38 = arith.constant dense<0.000000e+00> : vector<32x128xf32>
    %68 = tpu.matmul %1, %67, %cst_38 {dimension_numbers = #tpu.dot_dimension_numbers<[1], [0], [0], [1], [0, 0, 1, 1], [], []>} : vector<32x64xbf16>, vector<64x128xbf16>, vector<32x128xf32> -> vector<32x128xf32>
    %69 = vector.extract_strided_slice %68 {offsets = [0, 0], sizes = [32, 64], strides = [1, 1]} : vector<32x128xf32> to vector<32x64xf32>
    %70 = vector.extract_strided_slice %68 {offsets = [0, 64], sizes = [32, 64], strides = [1, 1]} : vector<32x128xf32> to vector<32x64xf32>
    %71 = arith.negf %70 : vector<32x64xf32>
    %72 = math.exp %71 : vector<32x64xf32>
    %cst_39 = arith.constant 1.000000e+00 : f32
    %73 = vector.broadcast %cst_39 : f32 to vector<32x64xf32>
    %74 = arith.addf %73, %72 : vector<32x64xf32>
    %75 = arith.divf %73, %74 : vector<32x64xf32>
    %76 = arith.mulf %70, %75 : vector<32x64xf32>
    %77 = arith.mulf %69, %76 : vector<32x64xf32>
    %78 = arith.truncf %77 : vector<32x64xf32> to vector<32x64xbf16>
    %c3_40 = arith.constant 3 : index
    %c0_41 = arith.constant 0 : index
    %c0_42 = arith.constant 0 : index
    %79 = vector.load %arg4[%c3_40, %c0_41, %c0_42] : memref<4x64x64xbf16, #tpu.memory_space<vmem>>, vector<1x64x64xbf16>
    %80 = vector.shape_cast %79 : vector<1x64x64xbf16> to vector<64x64xbf16>
    %cst_43 = arith.constant dense<0.000000e+00> : vector<32x64xf32>
    %81 = tpu.matmul %78, %80, %cst_43 {dimension_numbers = #tpu.dot_dimension_numbers<[1], [0], [0], [1], [0, 0, 1, 1], [], []>} : vector<32x64xbf16>, vector<64x64xbf16>, vector<32x64xf32> -> vector<32x64xf32>
    %c3_44 = arith.constant 3 : index
    %c0_45 = arith.constant 0 : index
    %c0_46 = arith.constant 0 : index
    %82 = vector.load %arg2[%c3_44, %c0_45, %c0_46] : memref<4x32x1xf32, #tpu.memory_space<vmem>>, vector<1x32x1xf32>
    %83 = vector.shape_cast %82 : vector<1x32x1xf32> to vector<32x1xf32>
    %84 = vector.broadcast %83 : vector<32x1xf32> to vector<32x64xf32>
    %85 = arith.mulf %84, %81 : vector<32x64xf32>
    %86 = arith.addf %65, %85 : vector<32x64xf32>
    %c0_47 = arith.constant 0 : index
    %c0_48 = arith.constant 0 : index
    %87 = vector.load %arg5[%c0_47, %c0_48] : memref<32x64xf32, #tpu.memory_space<vmem>>, vector<32x64xf32>
    tpu.vector_store %arg5[%c0_47, %c0_48], %86 {strides = array<i32>} : memref<32x64xf32, #tpu.memory_space<vmem>>, vector<32x64xf32>,
    return
  }
}

module attributes {stable_mosaic.version = 11 : i64} {
  func.func @_norm_head_kernel(%arg0: i32, %arg1: memref<32x64xf32, #tpu.memory_space<vmem>>, %arg2: memref<1x64xf32, #tpu.memory_space<vmem>>, %arg3: memref<64x128xbf16, #tpu.memory_space<vmem>>, %arg4: memref<32x128xf32, #tpu.memory_space<vmem>>) attributes {dimension_semantics = [#tpu.dimension_semantics<parallel>], iteration_bounds = array<i64: 2>, scalar_prefetch = 0 : i64, scratch_operands = 0 : i64, tpu.core_type = #tpu.core_type<tc>, window_params = [{pipeline_mode = #tpu.pipeline_mode<synchronous>, transform_indices = @transform_0, window_bounds = array<i64: 32, 64>}, {pipeline_mode = #tpu.pipeline_mode<synchronous>, transform_indices = @transform_1, window_bounds = array<i64: 1, 64>}, {transform_indices = @transform_2, window_bounds = array<i64: 64, 128>}, {transform_indices = @transform_3, window_bounds = array<i64: 32, 128>}]} {
    %c0 = arith.constant 0 : index
    %c0_0 = arith.constant 0 : index
    %0 = vector.load %arg1[%c0, %c0_0] : memref<32x64xf32, #tpu.memory_space<vmem>>, vector<32x64xf32>
    %1 = arith.mulf %0, %0 : vector<32x64xf32>
    %cst = arith.constant dense<0.000000e+00> : vector<32xf32>
    %2 = vector.multi_reduction <add>, %1, %cst [1] : vector<32x64xf32> to vector<32xf32>
    %3 = vector.shape_cast %2 : vector<32xf32> to vector<32x1xf32>
    %cst_1 = arith.constant 6.400000e+01 : f32
    %4 = vector.broadcast %cst_1 : f32 to vector<32x1xf32>
    %5 = arith.divf %3, %4 : vector<32x1xf32>
    %cst_2 = arith.constant 9.99999997E-7 : f32
    %6 = vector.broadcast %cst_2 : f32 to vector<32x1xf32>
    %7 = arith.addf %5, %6 : vector<32x1xf32>
    %8 = math.rsqrt %7 : vector<32x1xf32>
    %9 = vector.broadcast %8 : vector<32x1xf32> to vector<32x64xf32>
    %10 = arith.mulf %0, %9 : vector<32x64xf32>
    %c0_3 = arith.constant 0 : index
    %c0_4 = arith.constant 0 : index
    %11 = vector.load %arg2[%c0_3, %c0_4] : memref<1x64xf32, #tpu.memory_space<vmem>>, vector<1x64xf32>
    %12 = vector.broadcast %11 : vector<1x64xf32> to vector<32x64xf32>
    %13 = arith.mulf %10, %12 : vector<32x64xf32>
    %14 = arith.truncf %13 : vector<32x64xf32> to vector<32x64xbf16>
    %c0_5 = arith.constant 0 : index
    %c0_6 = arith.constant 0 : index
    %15 = vector.load %arg3[%c0_5, %c0_6] : memref<64x128xbf16, #tpu.memory_space<vmem>>, vector<64x128xbf16>
    %cst_7 = arith.constant dense<0.000000e+00> : vector<32x128xf32>
    %16 = tpu.matmul %14, %15, %cst_7 {dimension_numbers = #tpu.dot_dimension_numbers<[1], [0], [0], [1], [0, 0, 1, 1], [], []>} : vector<32x64xbf16>, vector<64x128xbf16>, vector<32x128xf32> -> vector<32x128xf32>
    %c0_8 = arith.constant 0 : index
    %c0_9 = arith.constant 0 : index
    %17 = vector.load %arg4[%c0_8, %c0_9] : memref<32x128xf32, #tpu.memory_space<vmem>>, vector<32x128xf32>
    tpu.vector_store %arg4[%c0_8, %c0_9], %16 {strides = array<i32>} : memref<32x128xf32, #tpu.memory_space<vmem>>, vector<32x128xf32>,
    return
  }
  func.func @transform_0(%arg0: i32) -> (i32, i32) {
    %c0_i32 = arith.constant 0 : i32
    %c0_i32_0 = arith.constant 0 : i32
    %c0_i32_1 = arith.constant 0 : i32
    return %c0_i32, %c0_i32_0 : i32, i32
  }
  func.func @transform_1(%arg0: i32) -> (i32, i32) {
    %c0_i32 = arith.constant 0 : i32
    %c0_i32_0 = arith.constant 0 : i32
    %c0_i32_1 = arith.constant 0 : i32
    return %c0_i32, %c0_i32_0 : i32, i32
  }
  func.func @transform_2(%arg0: i32) -> (i32, i32) {
    %c0_i32 = arith.constant 0 : i32
    %c0_i32_0 = arith.constant 0 : i32
    return %c0_i32, %arg0 : i32, i32
  }
  func.func @transform_3(%arg0: i32) -> (i32, i32) {
    %c0_i32 = arith.constant 0 : i32
    %c0_i32_0 = arith.constant 0 : i32
    return %c0_i32, %arg0 : i32, i32
  }
}

</mosaic_0001>

<llo_original>
// kernel: mixtral_forward.9
$region0: #{mixtral_forward.9}
  #allocation0 [shape = 'u32[]', space=smem, size = 0x4, offset = 0x4, fixed_abs, tag = 'smem constant byte address 0x4 - core index']
  #allocation1 [shape = 'u32[144,128]{1,0:T(1,128)}', space=vmem, size = 0x12000, scoped, tag = 'internal scratch']
  %s0 = inlined_call_operand.vmem [shape: f32[32,64], index: 0, kind: input, shape index: {}]
  %s1 = inlined_call_operand.vmem [shape: f32[1,64], index: 1, kind: input, shape index: {}]
  %s2 = inlined_call_operand.vmem [shape: bf16[64,256], index: 2, kind: input, shape index: {}]
  %s3 = inlined_call_operand.hbm [shape: f32[32,256], index: 3, kind: output, shape index: {}]
  %s4 = sld [smem:[#allocation0]]
  $region86: #{mixtral_forward.9} parent=0
    _
  %s6 = ssub.s32 1, %s4
  %s7 = scalar_select 0, %s6, %s4
  $region1: #{mixtral_forward.9} parent=0
    #allocation2 [shape = 'u8[32768]{0}', space=vmem, size = 0x8000, scoped, tag = 'input window, operand 2']
    #allocation3 [shape = 'u8[32768]{0}', space=vmem, size = 0x8000, scoped, tag = 'output window, operand 0']
    #allocation4 [shape = 's32[2]{0}', space=sflag, size = 0x8, scoped, tag = 'scoped memory for mixtral_forward.9']
    %8 = vsyncpa [#allocation4], 0
    %s9 = scalar_lea.sflag [#allocation4], 1
    %10 = vsyncpa %s9, 0
    loop: start=0, step=1, limit=4
    $region2: #{mixtral_forward.9} parent=1 // loop_pre_header
      _
    $region3: #{mixtral_forward.9} parent=1 // loop_header
      %s12 = sphi 0, %s16
      %p13 = scmp.ge.s32.totalorder %s12, 4
      %s20 = sphi 0, %s20
      %s22 = sphi 0, %s20
      %s23 = sphi 0, %s22
      %s37 = sphi 0, %s23
      %s41 = sphi 0, %s41
      %s43 = sphi 0, %s41
      %s44 = sphi 0, %s43
      %s58 = sphi 0, %s44
      %s64 = sphi 0, %s66
      %s67 = sphi 0, %s64
      %s68 = sphi 0, %s67
      %s84 = sphi 0, %s68
      %s90 = sphi 0, %s92
      %s93 = sphi 0, %s90
      %s94 = sphi 0, %s93
      %s110 = sphi 0, %s94
    $region4: #{mixtral_forward.9} parent=1 // loop_header_branch
      %15 = sbr.rel (%p13) target = $region8
    $region5: #{mixtral_forward.9} parent=1 // loop_body
      %s17 = ssub.s32 %s12, 1
      %s18 = ssub.s32 %s12, 2
      %s19 = sadd.s32 %s12, 1
      %s21 = sadd.s32 %s20, 1
      %p24 = scmp.eq.s32.totalorder %s12, 1
      %p25 = scmp.ne.s32.totalorder %s20, %s22
      %p26 = scmp.eq.s32.totalorder %s12, 0
      %p27 = por %p25, %p26
      %p28 = scmp.ne.s32.totalorder %s20, %s22
      %p29 = scmp.eq.s32.totalorder %s17, 1
      %p30 = por %p28, %p29
      %p31 = scmp.ne.s32.totalorder %s22, %s23
      %p32 = scmp.eq.s32.totalorder %s17, 0
      %p33 = por %p31, %p32
      %p34 = scmp.ne.s32.totalorder %s22, %s23
      %p35 = scmp.eq.s32.totalorder %s18, 1
      %p36 = por %p34, %p35
      %p38 = scmp.ne.s32.totalorder %s23, %s37
      %p39 = scmp.eq.s32.totalorder %s18, 0
      %p40 = por %p38, %p39
      %s42 = sadd.s32 %s41, 1
      %p45 = scmp.eq.s32.totalorder %s12, 1
      %p46 = scmp.ne.s32.totalorder %s41, %s43
      %p47 = scmp.eq.s32.totalorder %s12, 0
      %p48 = por %p46, %p47
      %p49 = scmp.ne.s32.totalorder %s41, %s43
      %p50 = scmp.eq.s32.totalorder %s17, 1
      %p51 = por %p49, %p50
      %p52 = scmp.ne.s32.totalorder %s43, %s44
      %p53 = scmp.eq.s32.totalorder %s17, 0
      %p54 = por %p52, %p53
      %p55 = scmp.ne.s32.totalorder %s43, %s44
      %p56 = scmp.eq.s32.totalorder %s18, 1
      %p57 = por %p55, %p56
      %p59 = scmp.ne.s32.totalorder %s44, %s58
      %p60 = scmp.eq.s32.totalorder %s18, 0
      %p61 = por %p59, %p60
      %s62 = ssub.s32 %s12, %s19
      %p63 = scmp.eq.s32.totalorder %s62, 0
      %s65 = sadd.s32 %s64, 1
      %s66 = scalar_select %p63, %s64, %s65
      %p69 = pneg %p63
      %p70 = scmp.eq.s32.totalorder %s12, 1
      %p71 = por %p69, %p70
      %p72 = scmp.ne.s32.totalorder %s64, %s67
      %p73 = scmp.eq.s32.totalorder %s12, 0
      %p74 = por %p72, %p73
      %p75 = scmp.ne.s32.totalorder %s64, %s67
      %p76 = scmp.eq.s32.totalorder %s17, 1
      %p77 = por %p75, %p76
      %p78 = scmp.ne.s32.totalorder %s67, %s68
      %p79 = scmp.eq.s32.totalorder %s17, 0
      %p80 = por %p78, %p79
      %p81 = scmp.ne.s32.totalorder %s67, %s68
      %p82 = scmp.eq.s32.totalorder %s18, 1
      %p83 = por %p81, %p82
      %p85 = scmp.ne.s32.totalorder %s68, %s84
      %p86 = scmp.eq.s32.totalorder %s18, 0
      %p87 = por %p85, %p86
      %s88 = ssub.s32 %s12, %s19
      %p89 = scmp.eq.s32.totalorder %s88, 0
      %s91 = sadd.s32 %s90, 1
      %s92 = scalar_select %p89, %s90, %s91
      %p95 = pneg %p89
      %p96 = scmp.eq.s32.totalorder %s12, 1
      %p97 = por %p95, %p96
      %p98 = scmp.ne.s32.totalorder %s90, %s93
      %p99 = scmp.eq.s32.totalorder %s12, 0
      %p100 = por %p98, %p99
      %p101 = scmp.ne.s32.totalorder %s90, %s93
      %p102 = scmp.eq.s32.totalorder %s17, 1
      %p103 = por %p101, %p102
      %p104 = scmp.ne.s32.totalorder %s93, %s94
      %p105 = scmp.eq.s32.totalorder %s17, 0
      %p106 = por %p104, %p105
      %p107 = scmp.ne.s32.totalorder %s93, %s94
      %p108 = scmp.eq.s32.totalorder %s18, 1
      %p109 = por %p107, %p108
      %p111 = scmp.ne.s32.totalorder %s94, %s110
      %p112 = scmp.eq.s32.totalorder %s18, 0
      %p113 = por %p111, %p112
      %p114 = scmp.le.s32.totalorder 1, %s12
      %p115 = scmp.lt.s32.totalorder %s12, 3
      %p116 = pnand %p114, %p115
      %p117 = pneg %p116
      // Predicated region
      $region9: #{mixtral_forward.9} parent=5 // pred_check
        _
      $region10: #{mixtral_forward.9} parent=5 // pred_check_branch
        %119 = sbr.rel (%p116) target = $region12
      $region11: #{mixtral_forward.9} parent=5 // pred_region
        %s120 = ssub.s32 %s12, 1
        // Predicated region
        $region13: #{mixtral_forward.9} parent=11 // pred_check
          %p121 = pneg %p33
        $region14: #{mixtral_forward.9} parent=11 // pred_check_branch
          %123 = sbr.rel (%p121) target = $region16
        $region15: #{mixtral_forward.9} parent=11 // pred_region
          _
        $region16: #{mixtral_forward.9} parent=11 // pred_fallthru
          _
        // Predicated region
        $region17: #{mixtral_forward.9} parent=11 // pred_check
          %p124 = pneg %p54
        $region18: #{mixtral_forward.9} parent=11 // pred_check_branch
          %126 = sbr.rel (%p124) target = $region20
        $region19: #{mixtral_forward.9} parent=11 // pred_region
          _
        $region20: #{mixtral_forward.9} parent=11 // pred_fallthru
          _
      $region12: #{mixtral_forward.9} parent=5 // pred_fallthru
        _
      %p127 = scmp.lt.s32.totalorder %s12, 2
      // Predicated region
      $region21: #{mixtral_forward.9} parent=5 // pred_check
        %p128 = pneg %p127
      $region22: #{mixtral_forward.9} parent=5 // pred_check_branch
        %130 = sbr.rel (%p128) target = $region24
      $region23: #{mixtral_forward.9} parent=5 // pred_region
        // Predicated region
        $region25: #{mixtral_forward.9} parent=23 // pred_check
          %p131 = pneg %p74
        $region26: #{mixtral_forward.9} parent=23 // pred_check_branch
          %133 = sbr.rel (%p131) target = $region28
        $region27: #{mixtral_forward.9} parent=23 // pred_region
          %s134 = sand.u32 %s64, 1
          %s135 = sand.u32 %s64, 1
          %s136 = smul.addr %s135, 32
          %s137 = scalar_lea.vmem [#allocation2], %s136
          %s138 = smul.addr %s12, 4
          %s139 = scalar_lea.vmem %s2, %s138
          // Predicated region
          $region29: #{mixtral_forward.9} parent=27 // pred_check
            _
          $region30: #{mixtral_forward.9} parent=27 // pred_check_branch
            %141 = sbr.rel (0) target = $region32
          $region31: #{mixtral_forward.9} parent=27 // pred_region
            // Predicated region
            $region33: #{mixtral_forward.9} parent=31 // pred_check
              _
            $region34: #{mixtral_forward.9} parent=31 // pred_check_branch
              %143 = sbr.rel target = $region36
            $region35: #{mixtral_forward.9} parent=31 // pred_region
              // Predicated region
              $region48: #{mixtral_forward.9} parent=35 // pred_check
                _
              $region49: #{mixtral_forward.9} parent=35 // pred_check_branch
                %172 = sbr.rel (0) target = $region51
              $region50: #{mixtral_forward.9} parent=35 // pred_region
                loop: start=0, step=1, limit=1
                $region52: #{mixtral_forward.9} parent=50 // loop_pre_header
                  _
                $region53: #{mixtral_forward.9} parent=50 // loop_header
                  %s174 = sphi 0, %s178
                  %p175 = scmp.ge.s32.totalorder %s174, 1
                  %s179 = sphi %s139, %s139
                  %s180 = sphi %s137, %s137
                $region54: #{mixtral_forward.9} parent=50 // loop_header_branch
                  %177 = sbr.rel (%p175) target = $region58
                $region55: #{mixtral_forward.9} parent=50 // loop_body
                  _
                $region56: #{mixtral_forward.9} parent=50 // loop_footer
                  %s178 = sadd.s32 1, %s174
                $region57: #{mixtral_forward.9} parent=50 // loop_footer_branch
                  %173 = sbr.rel target = $region53
                $region58: #{mixtral_forward.9} parent=50 // loop_exit
                  _
                loop: start=0, step=1, limit=1
                $region59: #{mixtral_forward.9} parent=50 // loop_pre_header
                  _
                $region60: #{mixtral_forward.9} parent=50 // loop_header
                  %s183 = sphi 0, %s187
                  %p184 = scmp.ge.s32.totalorder %s183, 1
                  %s188 = sphi %s139, %s139
                  %s189 = sphi %s137, %s137
                $region61: #{mixtral_forward.9} parent=50 // loop_header_branch
                  %186 = sbr.rel (%p184) target = $region65
                $region62: #{mixtral_forward.9} parent=50 // loop_body
                  %v190 = vld [vmem:[%s188] sm:$0xf]
                  %191 = vst [vmem:[%s189] sm:$0xf] %v190
                  %v192 = vld [vmem:[%s188 + $0x8] sm:$0xf]
                  %193 = vst [vmem:[%s189 + $0x4] sm:$0xf] %v192
                  %v194 = vld [vmem:[%s188 + $0x10] sm:$0xf]
                  %195 = vst [vmem:[%s189 + $0x8] sm:$0xf] %v194
                  %v196 = vld [vmem:[%s188 + $0x18] sm:$0xf]
                  %197 = vst [vmem:[%s189 + $0xc] sm:$0xf] %v196
                  %v198 = vld [vmem:[%s188 + $0x20] sm:$0xf]
                  %199 = vst [vmem:[%s189 + $0x10] sm:$0xf] %v198
                  %v200 = vld [vmem:[%s188 + $0x28] sm:$0xf]
                  %201 = vst [vmem:[%s189 + $0x14] sm:$0xf] %v200
                  %v202 = vld [vmem:[%s188 + $0x30] sm:$0xf]
                  %203 = vst [vmem:[%s189 + $0x18] sm:$0xf] %v202
                  %v204 = vld [vmem:[%s188 + $0x38] sm:$0xf]
                  %205 = vst [vmem:[%s189 + $0x1c] sm:$0xf] %v204
                $region63: #{mixtral_forward.9} parent=50 // loop_footer
                  %s187 = sadd.s32 1, %s183
                $region64: #{mixtral_forward.9} parent=50 // loop_footer_branch
                  %182 = sbr.rel target = $region60
                $region65: #{mixtral_forward.9} parent=50 // loop_exit
                  _
              $region51: #{mixtral_forward.9} parent=35 // pred_fallthru
                _
            $region36: #{mixtral_forward.9} parent=31 // pred_fallthru
              _
            // Predicated region
            $region37: #{mixtral_forward.9} parent=31 // pred_check
              _
            $region38: #{mixtral_forward.9} parent=31 // pred_check_branch
              %145 = sbr.rel (0) target = $region40
            $region39: #{mixtral_forward.9} parent=31 // pred_region
              loop: start=0, step=1, limit=1
              $region41: #{mixtral_forward.9} parent=39 // loop_pre_header
                _
              $region42: #{mixtral_forward.9} parent=39 // loop_header
                %s148 = sphi 0, %s152
                %p149 = scmp.ge.s32.totalorder %s148, 1
                %s153 = sphi %s139, %s139
                %s154 = sphi %s137, %s137
              $region43: #{mixtral_forward.9} parent=39 // loop_header_branch
                %151 = sbr.rel (%p149) target = $region47
              $region44: #{mixtral_forward.9} parent=39 // loop_body
                %v155 = vld [vmem:[%s153] sm:$0xf]
                %156 = vst [vmem:[%s154] sm:$0xf] %v155
                %v157 = vld [vmem:[%s153 + $0x8] sm:$0xf]
                %158 = vst [vmem:[%s154 + $0x4] sm:$0xf] %v157
                %v159 = vld [vmem:[%s153 + $0x10] sm:$0xf]
                %160 = vst [vmem:[%s154 + $0x8] sm:$0xf] %v159
                %v161 = vld [vmem:[%s153 + $0x18] sm:$0xf]
                %162 = vst [vmem:[%s154 + $0xc] sm:$0xf] %v161
                %v163 = vld [vmem:[%s153 + $0x20] sm:$0xf]
                %164 = vst [vmem:[%s154 + $0x10] sm:$0xf] %v163
                %v165 = vld [vmem:[%s153 + $0x28] sm:$0xf]
                %166 = vst [vmem:[%s154 + $0x14] sm:$0xf] %v165
                %v167 = vld [vmem:[%s153 + $0x30] sm:$0xf]
                %168 = vst [vmem:[%s154 + $0x18] sm:$0xf] %v167
                %v169 = vld [vmem:[%s153 + $0x38] sm:$0xf]
                %170 = vst [vmem:[%s154 + $0x1c] sm:$0xf] %v169
              $region45: #{mixtral_forward.9} parent=39 // loop_footer
                %s152 = sadd.s32 1, %s148
              $region46: #{mixtral_forward.9} parent=39 // loop_footer_branch
                %147 = sbr.rel target = $region42
              $region47: #{mixtral_forward.9} parent=39 // loop_exit
                _
            $region40: #{mixtral_forward.9} parent=31 // pred_fallthru
              _
          $region32: #{mixtral_forward.9} parent=27 // pred_fallthru
            _
          %206 = vnop
        $region28: #{mixtral_forward.9} parent=23 // pred_fallthru
          _
      $region24: #{mixtral_forward.9} parent=5 // pred_fallthru
        _
      %p207 = scmp.le.s32.totalorder 1, %s12
      %p208 = scmp.lt.s32.totalorder %s12, 3
      %p209 = pnand %p207, %p208
      %p210 = pneg %p209
      // Predicated region
      $region66: #{mixtral_forward.9} parent=5 // pred_check
        _
      $region67: #{mixtral_forward.9} parent=5 // pred_check_branch
        %212 = sbr.rel (%p209) target = $region69
      $region68: #{mixtral_forward.9} parent=5 // pred_region
        %s213 = ssub.s32 %s12, 1
        %s214 = sand.u32 %s67, 1
        %s215 = sand.u32 %s67, 1
        %s216 = smul.addr %s215, 32
        %s217 = scalar_lea.vmem [#allocation2], %s216
        // Predicated region
        $region70: #{mixtral_forward.9} parent=68 // pred_check
          %p218 = pneg %p80
        $region71: #{mixtral_forward.9} parent=68 // pred_check_branch
          %220 = sbr.rel (%p218) target = $region73
        $region72: #{mixtral_forward.9} parent=68 // pred_region
          _
        $region73: #{mixtral_forward.9} parent=68 // pred_fallthru
          _
        %p221 = pneg %p33
        %p222 = pneg %p30
        %p223 = pneg %p54
        %p224 = pneg %p51
        %s225 = sand.u32 %s67, 1
        %s226 = sand.u32 %s67, 1
        %s227 = smul.addr %s226, 32
        %s228 = scalar_lea.vmem [#allocation2], %s227
        %p229 = pneg %p80
        %p230 = pneg %p77
        %p231 = pneg %p106
        %p232 = pneg %p103
        %s233 = sand.u32 %s93, 1
        %s234 = scalar_lea.sflag [#allocation4], %s233
        %s235 = sand.u32 %s93, 1
        %s236 = smul.addr %s235, 32
        %s237 = scalar_lea.vmem [#allocation3], %s236
        %v239 = vld [vmem:[%s0] sm:$0xff]
        %v240 = vld [vmem:[%s0 + $0x8] sm:$0xff]
        %v241 = vld [vmem:[%s0 + $0x10] sm:$0xff]
        %v242 = vld [vmem:[%s0 + $0x18] sm:$0xff]
        %v243 = vmul.f32 %v239, %v239
        %v244 = vmul.f32 %v240, %v240
        %v245 = vmul.f32 %v241, %v241
        %v246 = vmul.f32 %v242, %v242
        %vm247 = vcmask 523264
        %v248 = vsel %vm247, %v243, 0.0
        %249 = vadd.xlane.f32.xlu0 %v248
        %v250 = vpop.xlane.xlu0 %249
        %v251 = vsel %vm247, %v244, 0.0
        %252 = vadd.xlane.f32.xlu0 %v251
        %v253 = vpop.xlane.xlu0 %252
        %v254 = vsel %vm247, %v245, 0.0
        %255 = vadd.xlane.f32.xlu0 %v254
        %v256 = vpop.xlane.xlu0 %255
        %v257 = vsel %vm247, %v246, 0.0
        %258 = vadd.xlane.f32.xlu0 %v257
        %v259 = vpop.xlane.xlu0 %258
        %v260 = vrcp.pop 64.0
        %v261 = vmul.f32 %v250, %v260
        %v262 = vmul.f32 %v253, %v260
        %v263 = vmul.f32 %v256, %v260
        %v264 = vmul.f32 %v259, %v260
        %v265 = vadd.f32 %v261, 1e-06
        %v266 = vadd.f32 %v262, 1e-06
        %v267 = vadd.f32 %v263, 1e-06
        %v268 = vadd.f32 %v264, 1e-06
        %v269 = vrsqrt.pop %v265
        %v270 = vrsqrt.pop %v266
        %v271 = vrsqrt.pop %v267
        %v272 = vrsqrt.pop %v268
        %v273 = vmul.f32 %v239, %v269
        %v274 = vmul.f32 %v240, %v270
        %v275 = vmul.f32 %v241, %v271
        %v276 = vmul.f32 %v242, %v272
        %v277 = vld [vmem:[%s1] sm:$0x1]
        %v279 = vlaneseq
        %v280 = vshrl.u32 %v279, 7
        %v281 = vsub.s32 0, %v280
        %v282 = vrot.slane %v277, %v281
        %v284 = vmul.f32 %v273, %v282
        %v285 = vmul.f32 %v274, %v282
        %v286 = vmul.f32 %v275, %v282
        %v287 = vmul.f32 %v276, %v282
        %v288 = vpack.c.bf16 %v285, %v284
        %v289 = vpack.c.bf16 %v287, %v286
        %v290 = vld [vmem:[%s217] sm:$0xf]
        %v291 = vld [vmem:[%s217 + $0x4] sm:$0xf]
        %v292 = vld [vmem:[%s217 + $0x8] sm:$0xf]
        %v293 = vld [vmem:[%s217 + $0xc] sm:$0xf]
        %v294 = vld [vmem:[%s217 + $0x10] sm:$0xf]
        %v295 = vld [vmem:[%s217 + $0x14] sm:$0xf]
        %v296 = vld [vmem:[%s217 + $0x18] sm:$0xf]
        %v297 = vld [vmem:[%s217 + $0x1c] sm:$0xf]
        %v306 = vunpack.c.l.b16 %v290
        %v307 = vunpack.c.l.b16 %v291
        %v308 = vunpack.c.l.b16 %v292
        %v309 = vunpack.c.l.b16 %v293
        %v310 = vunpack.c.l.b16 %v294
        %v311 = vunpack.c.l.b16 %v295
        %v312 = vunpack.c.l.b16 %v296
        %v313 = vunpack.c.l.b16 %v297
        %v314 = vpack.c.b16 %v307, %v306
        %v315 = vpack.c.b16 %v309, %v308
        %v316 = vpack.c.b16 %v311, %v310
        %v317 = vpack.c.b16 %v313, %v312
        %v323 = vsel %vm247, %v288, 0
        %v326 = vsel %vm247, %v289, 0
        %328 = vmatprep.subr.bf16.mxu0 0
        %329 = vmatpush1.bf16.msra.mxu0 %v314
        %330 = vmatprep.subr.bf16.mxu0 0
        %331 = vmatpush1.bf16.msra.mxu0 %v315
        %332 = vmatprep.subr.bf16.mxu0 0
        %333 = vmatpush1.bf16.msra.mxu0 %v316
        %334 = vmatprep.subr.bf16.mxu0 0
        %335 = vmatpush1.bf16.msra.mxu0 %v317
        %336 = vmatprep.subr.bf16.mxu0 0
        %337 = vmatpush1.bf16.msra.mxu0 0
        %338 = vmatprep.subr.bf16.mxu0 0
        %339 = vmatpush1.bf16.msra.mxu0 0
        %340 = vmatprep.subr.bf16.mxu0 0
        %341 = vmatpush1.bf16.msra.mxu0 0
        %342 = vmatprep.subr.bf16.mxu0 0
        %343 = vmatpush1.bf16.msra.mxu0 0
        %344 = vmatprep.subr.bf16.mxu0 0
        %345 = vmatpush1.bf16.msra.mxu0 0
        %346 = vmatprep.subr.bf16.mxu0 0
        %347 = vmatpush1.bf16.msra.mxu0 0
        %348 = vmatprep.subr.bf16.mxu0 0
        %349 = vmatpush1.bf16.msra.mxu0 0
        %350 = vmatprep.subr.bf16.mxu0 0
        %351 = vmatpush1.bf16.msra.mxu0 0
        %352 = vmatprep.subr.bf16.mxu0 0
        %353 = vmatpush1.bf16.msra.mxu0 0
        %354 = vmatprep.subr.bf16.mxu0 0
        %355 = vmatpush1.bf16.msra.mxu0 0
        %356 = vmatprep.subr.bf16.mxu0 0
        %357 = vmatpush1.bf16.msra.mxu0 0
        %358 = vmatprep.subr.bf16.mxu0 0
        %359 = vmatpush1.bf16.msra.mxu0 0
        %360 = vmatprep.mubr.bf16.mxu0 0
        %361 = vmatmul.mubr.bf16.gmra.mrb[0].mxu0 %v323
        %v362 = vpop.f32.mrb[0].mxu0
        %v363 = vadd.f32 0.0, %v362
        %v364 = vpop.f32.mrb[0].mxu0
        %v365 = vpop.f32.mrb[0].mxu0
        %v366 = vadd.f32 0.0, %v365
        %v367 = vpop.f32.mrb[0].mxu0
        %368 = vmatprep.mubr.bf16.mxu0 0
        %369 = vmatmul.mubr.bf16.gmra.mrb[0].mxu0 %v326
        %v370 = vpop.f32.mrb[0].mxu0
        %v371 = vadd.f32 0.0, %v370
        %v372 = vpop.f32.mrb[0].mxu0
        %v373 = vpop.f32.mrb[0].mxu0
        %v374 = vadd.f32 0.0, %v373
        %v375 = vpop.f32.mrb[0].mxu0
        %376 = vdwg.mxu0
        %377 = vst [vmem:[%s237] sm:$0xff] %v363
        %378 = vst [vmem:[%s237 + $0x8] sm:$0xff] %v366
        %379 = vst [vmem:[%s237 + $0x10] sm:$0xff] %v371
        %380 = vst [vmem:[%s237 + $0x18] sm:$0xff] %v374
        %s381 = sand.u32 %s93, 1
        %s382 = scalar_lea.sflag [#allocation4], %s381
        %s383 = sand.u32 %s93, 1
        %s384 = smul.addr %s383, 32
        %s385 = scalar_lea.vmem [#allocation3], %s384
        // Predicated region
        $region74: #{mixtral_forward.9} parent=68 // pred_check
          %p386 = pneg %p103
        $region75: #{mixtral_forward.9} parent=68 // pred_check_branch
          %388 = sbr.rel (%p386) target = $region77
        $region76: #{mixtral_forward.9} parent=68 // pred_region
          %s390 = ssub.s32 512, 512
          %391 = vsyncadd %s382, %s390
          %s392 = smul.addr %s17, 128
          %s393 = scalar_lea.hbm %s3, %s392
          %s394 = sshll.u32 %s385, 4
          %s395 = int_to_ptr.vmem [resolvable:$true] %s394
          %400 = dma.vmem_to_hbm [thread:$0]  %s395, 512, %s393, %s382, 128, 256, 8
        $region77: #{mixtral_forward.9} parent=68 // pred_fallthru
          _
      $region69: #{mixtral_forward.9} parent=5 // pred_fallthru
        _
      %p401 = scmp.le.s32.totalorder 2, %s12
      // Predicated region
      $region78: #{mixtral_forward.9} parent=5 // pred_check
        %p402 = pneg %p401
      $region79: #{mixtral_forward.9} parent=5 // pred_check_branch
        %404 = sbr.rel (%p402) target = $region81
      $region80: #{mixtral_forward.9} parent=5 // pred_region
        %s405 = ssub.s32 %s12, 2
        // Predicated region
        $region82: #{mixtral_forward.9} parent=80 // pred_check
          %p406 = pneg %p109
        $region83: #{mixtral_forward.9} parent=80 // pred_check_branch
          %408 = sbr.rel (%p406) target = $region85
        $region84: #{mixtral_forward.9} parent=80 // pred_region
          %s409 = sand.u32 %s94, 1
          %s410 = scalar_lea.sflag [#allocation4], %s409
          %s411 = sand.u32 %s94, 1
          %s412 = smul.addr %s411, 32
          %s413 = scalar_lea.vmem [#allocation3], %s412
          %414 = dma.done %s410, 512
        $region85: #{mixtral_forward.9} parent=80 // pred_fallthru
          _
      $region81: #{mixtral_forward.9} parent=5 // pred_fallthru
        _
    $region6: #{mixtral_forward.9} parent=1 // loop_footer
      %s16 = sadd.s32 1, %s12
    $region7: #{mixtral_forward.9} parent=1 // loop_footer_branch
      %11 = sbr.rel target = $region3
    $region8: #{mixtral_forward.9} parent=1 // loop_exit
      _
    %415 = vsyncpa [#allocation4], 1
    %s416 = scalar_lea.sflag [#allocation4], 1
    %417 = vsyncpa %s416, 1

// kernel: mixtral_forward.6
$region0: #{mixtral_forward.6}
  #allocation0 [shape = 'u32[]', space=smem, size = 0x4, offset = 0x4, fixed_abs, tag = 'smem constant byte address 0x4 - core index']
  #allocation1 [shape = 'u32[144,128]{1,0:T(1,128)}', space=vmem, size = 0x12000, scoped, tag = 'internal scratch']
  %s0 = inlined_call_operand.vmem [shape: f32[32,64], index: 0, kind: input, shape index: {}]
  %s1 = inlined_call_operand.vmem [shape: f32[32,64], index: 1, kind: input, shape index: {}]
  %s2 = inlined_call_operand.vmem [shape: f32[4,32,1], index: 2, kind: input, shape index: {}]
  %s3 = inlined_call_operand.vmem [shape: bf16[4,64,128], index: 3, kind: input, shape index: {}]
  %s4 = inlined_call_operand.vmem [shape: bf16[4,64,64], index: 4, kind: input, shape index: {}]
  %s5 = inlined_call_operand.vmem [shape: f32[32,64], index: 5, kind: output, shape index: {}]
  %s6 = sld [smem:[#allocation0]]
  $region30: #{mixtral_forward.6} parent=0
    _
  %s8 = ssub.s32 1, %s6
  %s9 = scalar_select 0, %s8, %s6
  // Predicated region
  $region2: #{mixtral_forward.6} parent=0 // pred_check
    _
  $region3: #{mixtral_forward.6} parent=0 // pred_check_branch
    %11 = sbr.rel (0) target = $region5
  $region4: #{mixtral_forward.6} parent=0 // pred_region
    _
  $region5: #{mixtral_forward.6} parent=0 // pred_fallthru
    _
  // Predicated region
  $region6: #{mixtral_forward.6} parent=0 // pred_check
    _
  $region7: #{mixtral_forward.6} parent=0 // pred_check_branch
    %13 = sbr.rel (0) target = $region9
  $region8: #{mixtral_forward.6} parent=0 // pred_region
    _
  $region9: #{mixtral_forward.6} parent=0 // pred_fallthru
    _
  // Predicated region
  $region10: #{mixtral_forward.6} parent=0 // pred_check
    _
  $region11: #{mixtral_forward.6} parent=0 // pred_check_branch
    %15 = sbr.rel (0) target = $region13
  $region12: #{mixtral_forward.6} parent=0 // pred_region
    _
  $region13: #{mixtral_forward.6} parent=0 // pred_fallthru
    _
  // Predicated region
  $region14: #{mixtral_forward.6} parent=0 // pred_check
    _
  $region15: #{mixtral_forward.6} parent=0 // pred_check_branch
    %17 = sbr.rel (0) target = $region17
  $region16: #{mixtral_forward.6} parent=0 // pred_region
    _
  $region17: #{mixtral_forward.6} parent=0 // pred_fallthru
    _
  // Predicated region
  $region18: #{mixtral_forward.6} parent=0 // pred_check
    _
  $region19: #{mixtral_forward.6} parent=0 // pred_check_branch
    %19 = sbr.rel (0) target = $region21
  $region20: #{mixtral_forward.6} parent=0 // pred_region
    _
  $region21: #{mixtral_forward.6} parent=0 // pred_fallthru
    _
  %v21 = vld [vmem:[%s0] sm:$0xff]
  %v22 = vld [vmem:[%s0 + $0x8] sm:$0xff]
  %v23 = vld [vmem:[%s0 + $0x10] sm:$0xff]
  %v24 = vld [vmem:[%s0 + $0x18] sm:$0xff]
  %v25 = vpack.c.bf16 %v22, %v21
  %v26 = vpack.c.bf16 %v24, %v23
  %v27 = vld [vmem:[%s1] sm:$0xff]
  %v28 = vld [vmem:[%s1 + $0x8] sm:$0xff]
  %v29 = vld [vmem:[%s1 + $0x10] sm:$0xff]
  %v30 = vld [vmem:[%s1 + $0x18] sm:$0xff]
  %v31 = vld [vmem:[%s3] sm:$0xf]
  %v32 = vld [vmem:[%s3 + $0x4] sm:$0xf]
  %v33 = vld [vmem:[%s3 + $0x8] sm:$0xf]
  %v34 = vld [vmem:[%s3 + $0xc] sm:$0xf]
  %v35 = vld [vmem:[%s3 + $0x10] sm:$0xf]
  %v36 = vld [vmem:[%s3 + $0x14] sm:$0xf]
  %v37 = vld [vmem:[%s3 + $0x18] sm:$0xf]
  %v38 = vld [vmem:[%s3 + $0x1c] sm:$0xf]
  %v47 = vunpack.c.l.b16 %v31
  %v48 = vunpack.c.l.b16 %v32
  %v49 = vunpack.c.l.b16 %v33
  %v50 = vunpack.c.l.b16 %v34
  %v51 = vunpack.c.l.b16 %v35
  %v52 = vunpack.c.l.b16 %v36
  %v53 = vunpack.c.l.b16 %v37
  %v54 = vunpack.c.l.b16 %v38
  %v55 = vpack.c.b16 %v48, %v47
  %v56 = vpack.c.b16 %v50, %v49
  %v57 = vpack.c.b16 %v52, %v51
  %v58 = vpack.c.b16 %v54, %v53
  %vm63 = vcmask 523264
  %v65 = vsel %vm63, %v25, 0
  %v68 = vsel %vm63, %v26, 0
  %70 = vmatprep.subr.bf16.mxu0 0
  %71 = vmatpush1.bf16.msra.mxu0 %v55
  %72 = vmatprep.subr.bf16.mxu0 0
  %73 = vmatpush1.bf16.msra.mxu0 %v56
  %74 = vmatprep.subr.bf16.mxu0 0
  %75 = vmatpush1.bf16.msra.mxu0 %v57
  %76 = vmatprep.subr.bf16.mxu0 0
  %77 = vmatpush1.bf16.msra.mxu0 %v58
  %78 = vmatprep.subr.bf16.mxu0 0
  %79 = vmatpush1.bf16.msra.mxu0 0
  %80 = vmatprep.subr.bf16.mxu0 0
  %81 = vmatpush1.bf16.msra.mxu0 0
  %82 = vmatprep.subr.bf16.mxu0 0
  %83 = vmatpush1.bf16.msra.mxu0 0
  %84 = vmatprep.subr.bf16.mxu0 0
  %85 = vmatpush1.bf16.msra.mxu0 0
  %86 = vmatprep.subr.bf16.mxu0 0
  %87 = vmatpush1.bf16.msra.mxu0 0
  %88 = vmatprep.subr.bf16.mxu0 0
  %89 = vmatpush1.bf16.msra.mxu0 0
  %90 = vmatprep.subr.bf16.mxu0 0
  %91 = vmatpush1.bf16.msra.mxu0 0
  %92 = vmatprep.subr.bf16.mxu0 0
  %93 = vmatpush1.bf16.msra.mxu0 0
  %94 = vmatprep.subr.bf16.mxu0 0
  %95 = vmatpush1.bf16.msra.mxu0 0
  %96 = vmatprep.subr.bf16.mxu0 0
  %97 = vmatpush1.bf16.msra.mxu0 0
  %98 = vmatprep.subr.bf16.mxu0 0
  %99 = vmatpush1.bf16.msra.mxu0 0
  %100 = vmatprep.subr.bf16.mxu0 0
  %101 = vmatpush1.bf16.msra.mxu0 0
  %102 = vmatprep.mubr.bf16.mxu0 0
  %103 = vmatmul.mubr.bf16.gmra.mrb[0].mxu0 %v65
  %v104 = vpop.f32.mrb[0].mxu0
  %v105 = vadd.f32 0.0, %v104
  %v106 = vpop.f32.mrb[0].mxu0
  %v107 = vpop.f32.mrb[0].mxu0
  %v108 = vadd.f32 0.0, %v107
  %v109 = vpop.f32.mrb[0].mxu0
  %110 = vmatprep.mubr.bf16.mxu0 0
  %111 = vmatmul.mubr.bf16.gmra.mrb[0].mxu0 %v68
  %v112 = vpop.f32.mrb[0].mxu0
  %v113 = vadd.f32 0.0, %v112
  %v114 = vpop.f32.mrb[0].mxu0
  %v115 = vpop.f32.mrb[0].mxu0
  %v116 = vadd.f32 0.0, %v115
  %v117 = vpop.f32.mrb[0].mxu0
  %118 = vdwg.mxu0
  %v119 = vxor.u32 %v105, 2147483648
  %v120 = vxor.u32 %v108, 2147483648
  %v121 = vxor.u32 %v113, 2147483648
  %v122 = vxor.u32 %v116, 2147483648
  %v123 = vmul.f32 %v119, 1.442695
  %v124 = vpow.pop %v123
  %v125 = vmul.f32 %v120, 1.442695
  %v126 = vpow.pop %v125
  %v127 = vmul.f32 %v121, 1.442695
  %v128 = vpow.pop %v127
  %v129 = vmul.f32 %v122, 1.442695
  %v130 = vpow.pop %v129
  %v131 = vadd.f32 %v124, 1.0
  %v132 = vadd.f32 %v126, 1.0
  %v133 = vadd.f32 %v128, 1.0
  %v134 = vadd.f32 %v130, 1.0
  %v135 = vrcp.pop %v131
  %v136 = vmul.f32 1.0, %v135
  %v137 = vrcp.pop %v132
  %v138 = vmul.f32 1.0, %v137
  %v139 = vrcp.pop %v133
  %v140 = vmul.f32 1.0, %v139
  %v141 = vrcp.pop %v134
  %v142 = vmul.f32 1.0, %v141
  %v143 = vmul.f32 %v105, %v136
  %v144 = vmul.f32 %v108, %v138
  %v145 = vmul.f32 %v113, %v140
  %v146 = vmul.f32 %v116, %v142
  %151 = vrot.lane.b32.xlu0 %v143, 64
  %v152 = vpop.permute.xlu0 %151
  %153 = vrot.lane.b32.xlu0 %v144, 64
  %v154 = vpop.permute.xlu0 %153
  %155 = vrot.lane.b32.xlu0 %v145, 64
  %v156 = vpop.permute.xlu0 %155
  %157 = vrot.lane.b32.xlu0 %v146, 64
  %v158 = vpop.permute.xlu0 %157
  %v163 = vmul.f32 %v105, %v152
  %v164 = vmul.f32 %v108, %v154
  %v165 = vmul.f32 %v113, %v156
  %v166 = vmul.f32 %v116, %v158
  %v167 = vpack.c.bf16 %v164, %v163
  %v168 = vpack.c.bf16 %v166, %v165
  %v169 = vld [vmem:[%s4] sm:$0xf]
  %v170 = vld [vmem:[%s4 + $0x4] sm:$0xf]
  %v171 = vld [vmem:[%s4 + $0x8] sm:$0xf]
  %v172 = vld [vmem:[%s4 + $0xc] sm:$0xf]
  %v173 = vld [vmem:[%s4 + $0x10] sm:$0xf]
  %v174 = vld [vmem:[%s4 + $0x14] sm:$0xf]
  %v175 = vld [vmem:[%s4 + $0x18] sm:$0xf]
  %v176 = vld [vmem:[%s4 + $0x1c] sm:$0xf]
  %v185 = vunpack.c.l.b16 %v169
  %v186 = vunpack.c.l.b16 %v170
  %v187 = vunpack.c.l.b16 %v171
  %v188 = vunpack.c.l.b16 %v172
  %v189 = vunpack.c.l.b16 %v173
  %v190 = vunpack.c.l.b16 %v174
  %v191 = vunpack.c.l.b16 %v175
  %v192 = vunpack.c.l.b16 %v176
  %v193 = vpack.c.b16 %v186, %v185
  %v194 = vpack.c.b16 %v188, %v187
  %v195 = vpack.c.b16 %v190, %v189
  %v196 = vpack.c.b16 %v192, %v191
  %v202 = vsel %vm63, %v167, 0
  %v205 = vsel %vm63, %v168, 0
  %207 = vmatprep.subr.bf16.mxu0 0
  %208 = vmatpush1.bf16.msra.mxu0 %v193
  %209 = vmatprep.subr.bf16.mxu0 0
  %210 = vmatpush1.bf16.msra.mxu0 %v194
  %211 = vmatprep.subr.bf16.mxu0 0
  %212 = vmatpush1.bf16.msra.mxu0 %v195
  %213 = vmatprep.subr.bf16.mxu0 0
  %214 = vmatpush1.bf16.msra.mxu0 %v196
  %215 = vmatprep.subr.bf16.mxu0 0
  %216 = vmatpush1.bf16.msra.mxu0 0
  %217 = vmatprep.subr.bf16.mxu0 0
  %218 = vmatpush1.bf16.msra.mxu0 0
  %219 = vmatprep.subr.bf16.mxu0 0
  %220 = vmatpush1.bf16.msra.mxu0 0
  %221 = vmatprep.subr.bf16.mxu0 0
  %222 = vmatpush1.bf16.msra.mxu0 0
  %223 = vmatprep.subr.bf16.mxu0 0
  %224 = vmatpush1.bf16.msra.mxu0 0
  %225 = vmatprep.subr.bf16.mxu0 0
  %226 = vmatpush1.bf16.msra.mxu0 0
  %227 = vmatprep.subr.bf16.mxu0 0
  %228 = vmatpush1.bf16.msra.mxu0 0
  %229 = vmatprep.subr.bf16.mxu0 0
  %230 = vmatpush1.bf16.msra.mxu0 0
  %231 = vmatprep.subr.bf16.mxu0 0
  %232 = vmatpush1.bf16.msra.mxu0 0
  %233 = vmatprep.subr.bf16.mxu0 0
  %234 = vmatpush1.bf16.msra.mxu0 0
  %235 = vmatprep.subr.bf16.mxu0 0
  %236 = vmatpush1.bf16.msra.mxu0 0
  %237 = vmatprep.subr.bf16.mxu0 0
  %238 = vmatpush1.bf16.msra.mxu0 0
  %239 = vmatprep.mubr.bf16.mxu0 0
  %240 = vmatmul.mubr.bf16.gmra.mrb[0].mxu0 %v202
  %v241 = vpop.f32.mrb[0].mxu0
  %v242 = vadd.f32 0.0, %v241
  %v243 = vpop.f32.mrb[0].mxu0
  %v244 = vpop.f32.mrb[0].mxu0
  %v245 = vadd.f32 0.0, %v244
  %v246 = vpop.f32.mrb[0].mxu0
  %247 = vmatprep.mubr.bf16.mxu0 0
  %248 = vmatmul.mubr.bf16.gmra.mrb[0].mxu0 %v205
  %v249 = vpop.f32.mrb[0].mxu0
  %v250 = vadd.f32 0.0, %v249
  %v251 = vpop.f32.mrb[0].mxu0
  %v252 = vpop.f32.mrb[0].mxu0
  %v253 = vadd.f32 0.0, %v252
  %v254 = vpop.f32.mrb[0].mxu0
  %255 = vdwg.mxu0
  %v256 = vld [vmem:[%s2] sm:$0xff]
  %v257 = vld [vmem:[%s2 + $0x8] sm:$0xff]
  %v258 = vld [vmem:[%s2 + $0x10] sm:$0xff]
  %v259 = vld [vmem:[%s2 + $0x18] sm:$0xff]
  %261 = vset.pattern.permute.xlu0 0
  %262 = vperm.xlu0 %261, %v256
  %v263 = vpop.permute.xlu0 %262
  %266 = vset.pattern.permute.xlu0 0
  %267 = vperm.xlu0 %266, %v257
  %v268 = vpop.permute.xlu0 %267
  %271 = vset.pattern.permute.xlu0 0
  %272 = vperm.xlu0 %271, %v258
  %v273 = vpop.permute.xlu0 %272
  %276 = vset.pattern.permute.xlu0 0
  %277 = vperm.xlu0 %276, %v259
  %v278 = vpop.permute.xlu0 %277
  %v280 = vmul.f32 %v263, %v242
  %v281 = vmul.f32 %v268, %v245
  %v282 = vmul.f32 %v273, %v250
  %v283 = vmul.f32 %v278, %v253
  %v284 = vadd.f32 %v27, %v280
  %v285 = vadd.f32 %v28, %v281
  %v286 = vadd.f32 %v29, %v282
  %v287 = vadd.f32 %v30, %v283
  %s288 = scalar_lea.vmem %s3, 32
  %v289 = vld [vmem:[%s288] sm:$0xf]
  %v290 = vld [vmem:[%s288 + $0x4] sm:$0xf]
  %v291 = vld [vmem:[%s288 + $0x8] sm:$0xf]
  %v292 = vld [vmem:[%s288 + $0xc] sm:$0xf]
  %v293 = vld [vmem:[%s288 + $0x10] sm:$0xf]
  %v294 = vld [vmem:[%s288 + $0x14] sm:$0xf]
  %v295 = vld [vmem:[%s288 + $0x18] sm:$0xf]
  %v296 = vld [vmem:[%s288 + $0x1c] sm:$0xf]
  %v305 = vunpack.c.l.b16 %v289
  %v306 = vunpack.c.l.b16 %v290
  %v307 = vunpack.c.l.b16 %v291
  %v308 = vunpack.c.l.b16 %v292
  %v309 = vunpack.c.l.b16 %v293
  %v310 = vunpack.c.l.b16 %v294
  %v311 = vunpack.c.l.b16 %v295
  %v312 = vunpack.c.l.b16 %v296
  %v313 = vpack.c.b16 %v306, %v305
  %v314 = vpack.c.b16 %v308, %v307
  %v315 = vpack.c.b16 %v310, %v309
  %v316 = vpack.c.b16 %v312, %v311
  %321 = vmatprep.subr.bf16.mxu0 0
  %322 = vmatpush1.bf16.msra.mxu0 %v313
  %323 = vmatprep.subr.bf16.mxu0 0
  %324 = vmatpush1.bf16.msra.mxu0 %v314
  %325 = vmatprep.subr.bf16.mxu0 0
  %326 = vmatpush1.bf16.msra.mxu0 %v315
  %327 = vmatprep.subr.bf16.mxu0 0
  %328 = vmatpush1.bf16.msra.mxu0 %v316
  %329 = vmatprep.subr.bf16.mxu0 0
  %330 = vmatpush1.bf16.msra.mxu0 0
  %331 = vmatprep.subr.bf16.mxu0 0
  %332 = vmatpush1.bf16.msra.mxu0 0
  %333 = vmatprep.subr.bf16.mxu0 0
  %334 = vmatpush1.bf16.msra.mxu0 0
  %335 = vmatprep.subr.bf16.mxu0 0
  %336 = vmatpush1.bf16.msra.mxu0 0
  %337 = vmatprep.subr.bf16.mxu0 0
  %338 = vmatpush1.bf16.msra.mxu0 0
  %339 = vmatprep.subr.bf16.mxu0 0
  %340 = vmatpush1.bf16.msra.mxu0 0
  %341 = vmatprep.subr.bf16.mxu0 0
  %342 = vmatpush1.bf16.msra.mxu0 0
  %343 = vmatprep.subr.bf16.mxu0 0
  %344 = vmatpush1.bf16.msra.mxu0 0
  %345 = vmatprep.subr.bf16.mxu0 0
  %346 = vmatpush1.bf16.msra.mxu0 0
  %347 = vmatprep.subr.bf16.mxu0 0
  %348 = vmatpush1.bf16.msra.mxu0 0
  %349 = vmatprep.subr.bf16.mxu0 0
  %350 = vmatpush1.bf16.msra.mxu0 0
  %351 = vmatprep.subr.bf16.mxu0 0
  %352 = vmatpush1.bf16.msra.mxu0 0
  %353 = vmatprep.mubr.bf16.mxu0 0
  %354 = vmatmul.mubr.bf16.gmra.mrb[0].mxu0 %v65
  %v355 = vpop.f32.mrb[0].mxu0
  %v356 = vadd.f32 0.0, %v355
  %v357 = vpop.f32.mrb[0].mxu0
  %v358 = vpop.f32.mrb[0].mxu0
  %v359 = vadd.f32 0.0, %v358
  %v360 = vpop.f32.mrb[0].mxu0
  %361 = vmatprep.mubr.bf16.mxu0 0
  %362 = vmatmul.mubr.bf16.gmra.mrb[0].mxu0 %v68
  %v363 = vpop.f32.mrb[0].mxu0
  %v364 = vadd.f32 0.0, %v363
  %v365 = vpop.f32.mrb[0].mxu0
  %v366 = vpop.f32.mrb[0].mxu0
  %v367 = vadd.f32 0.0, %v366
  %v368 = vpop.f32.mrb[0].mxu0
  %369 = vdwg.mxu0
  %v370 = vxor.u32 %v356, 2147483648
  %v371 = vxor.u32 %v359, 2147483648
  %v372 = vxor.u32 %v364, 2147483648
  %v373 = vxor.u32 %v367, 2147483648
  %v374 = vmul.f32 %v370, 1.442695
  %v375 = vpow.pop %v374
  %v376 = vmul.f32 %v371, 1.442695
  %v377 = vpow.pop %v376
  %v378 = vmul.f32 %v372, 1.442695
  %v379 = vpow.pop %v378
  %v380 = vmul.f32 %v373, 1.442695
  %v381 = vpow.pop %v380
  %v382 = vadd.f32 %v375, 1.0
  %v383 = vadd.f32 %v377, 1.0
  %v384 = vadd.f32 %v379, 1.0
  %v385 = vadd.f32 %v381, 1.0
  %v386 = vrcp.pop %v382
  %v387 = vmul.f32 1.0, %v386
  %v388 = vrcp.pop %v383
  %v389 = vmul.f32 1.0, %v388
  %v390 = vrcp.pop %v384
  %v391 = vmul.f32 1.0, %v390
  %v392 = vrcp.pop %v385
  %v393 = vmul.f32 1.0, %v392
  %v394 = vmul.f32 %v356, %v387
  %v395 = vmul.f32 %v359, %v389
  %v396 = vmul.f32 %v364, %v391
  %v397 = vmul.f32 %v367, %v393
  %402 = vrot.lane.b32.xlu0 %v394, 64
  %v403 = vpop.permute.xlu0 %402
  %404 = vrot.lane.b32.xlu0 %v395, 64
  %v405 = vpop.permute.xlu0 %404
  %406 = vrot.lane.b32.xlu0 %v396, 64
  %v407 = vpop.permute.xlu0 %406
  %408 = vrot.lane.b32.xlu0 %v397, 64
  %v409 = vpop.permute.xlu0 %408
  %v414 = vmul.f32 %v356, %v403
  %v415 = vmul.f32 %v359, %v405
  %v416 = vmul.f32 %v364, %v407
  %v417 = vmul.f32 %v367, %v409
  %v418 = vpack.c.bf16 %v415, %v414
  %v419 = vpack.c.bf16 %v417, %v416
  %s420 = scalar_lea.vmem %s4, 32
  %v421 = vld [vmem:[%s420] sm:$0xf]
  %v422 = vld [vmem:[%s420 + $0x4] sm:$0xf]
  %v423 = vld [vmem:[%s420 + $0x8] sm:$0xf]
  %v424 = vld [vmem:[%s420 + $0xc] sm:$0xf]
  %v425 = vld [vmem:[%s420 + $0x10] sm:$0xf]
  %v426 = vld [vmem:[%s420 + $0x14] sm:$0xf]
  %v427 = vld [vmem:[%s420 + $0x18] sm:$0xf]
  %v428 = vld [vmem:[%s420 + $0x1c] sm:$0xf]
  %v437 = vunpack.c.l.b16 %v421
  %v438 = vunpack.c.l.b16 %v422
  %v439 = vunpack.c.l.b16 %v423
  %v440 = vunpack.c.l.b16 %v424
  %v441 = vunpack.c.l.b16 %v425
  %v442 = vunpack.c.l.b16 %v426
  %v443 = vunpack.c.l.b16 %v427
  %v444 = vunpack.c.l.b16 %v428
  %v445 = vpack.c.b16 %v438, %v437
  %v446 = vpack.c.b16 %v440, %v439
  %v447 = vpack.c.b16 %v442, %v441
  %v448 = vpack.c.b16 %v444, %v443
  %v454 = vsel %vm63, %v418, 0
  %v457 = vsel %vm63, %v419, 0
  %459 = vmatprep.subr.bf16.mxu0 0
  %460 = vmatpush1.bf16.msra.mxu0 %v445
  %461 = vmatprep.subr.bf16.mxu0 0
  %462 = vmatpush1.bf16.msra.mxu0 %v446
  %463 = vmatprep.subr.bf16.mxu0 0
  %464 = vmatpush1.bf16.msra.mxu0 %v447
  %465 = vmatprep.subr.bf16.mxu0 0
  %466 = vmatpush1.bf16.msra.mxu0 %v448
  %467 = vmatprep.subr.bf16.mxu0 0
  %468 = vmatpush1.bf16.msra.mxu0 0
  %469 = vmatprep.subr.bf16.mxu0 0
  %470 = vmatpush1.bf16.msra.mxu0 0
  %471 = vmatprep.subr.bf16.mxu0 0
  %472 = vmatpush1.bf16.msra.mxu0 0
  %473 = vmatprep.subr.bf16.mxu0 0
  %474 = vmatpush1.bf16.msra.mxu0 0
  %475 = vmatprep.subr.bf16.mxu0 0
  %476 = vmatpush1.bf16.msra.mxu0 0
  %477 = vmatprep.subr.bf16.mxu0 0
  %478 = vmatpush1.bf16.msra.mxu0 0
  %479 = vmatprep.subr.bf16.mxu0 0
  %480 = vmatpush1.bf16.msra.mxu0 0
  %481 = vmatprep.subr.bf16.mxu0 0
  %482 = vmatpush1.bf16.msra.mxu0 0
  %483 = vmatprep.subr.bf16.mxu0 0
  %484 = vmatpush1.bf16.msra.mxu0 0
  %485 = vmatprep.subr.bf16.mxu0 0
  %486 = vmatpush1.bf16.msra.mxu0 0
  %487 = vmatprep.subr.bf16.mxu0 0
  %488 = vmatpush1.bf16.msra.mxu0 0
  %489 = vmatprep.subr.bf16.mxu0 0
  %490 = vmatpush1.bf16.msra.mxu0 0
  %491 = vmatprep.mubr.bf16.mxu0 0
  %492 = vmatmul.mubr.bf16.gmra.mrb[0].mxu0 %v454
  %v493 = vpop.f32.mrb[0].mxu0
  %v494 = vadd.f32 0.0, %v493
  %v495 = vpop.f32.mrb[0].mxu0
  %v496 = vpop.f32.mrb[0].mxu0
  %v497 = vadd.f32 0.0, %v496
  %v498 = vpop.f32.mrb[0].mxu0
  %499 = vmatprep.mubr.bf16.mxu0 0
  %500 = vmatmul.mubr.bf16.gmra.mrb[0].mxu0 %v457
  %v501 = vpop.f32.mrb[0].mxu0
  %v502 = vadd.f32 0.0, %v501
  %v503 = vpop.f32.mrb[0].mxu0
  %v504 = vpop.f32.mrb[0].mxu0
  %v505 = vadd.f32 0.0, %v504
  %v506 = vpop.f32.mrb[0].mxu0
  %507 = vdwg.mxu0
  %s508 = scalar_lea.vmem %s2, 32
  %v509 = vld [vmem:[%s508] sm:$0xff]
  %v510 = vld [vmem:[%s508 + $0x8] sm:$0xff]
  %v511 = vld [vmem:[%s508 + $0x10] sm:$0xff]
  %v512 = vld [vmem:[%s508 + $0x18] sm:$0xff]
  %514 = vset.pattern.permute.xlu0 0
  %515 = vperm.xlu0 %514, %v509
  %v516 = vpop.permute.xlu0 %515
  %519 = vset.pattern.permute.xlu0 0
  %520 = vperm.xlu0 %519, %v510
  %v521 = vpop.permute.xlu0 %520
  %524 = vset.pattern.permute.xlu0 0
  %525 = vperm.xlu0 %524, %v511
  %v526 = vpop.permute.xlu0 %525
  %529 = vset.pattern.permute.xlu0 0
  %530 = vperm.xlu0 %529, %v512
  %v531 = vpop.permute.xlu0 %530
  %v533 = vmul.f32 %v516, %v494
  %v534 = vmul.f32 %v521, %v497
  %v535 = vmul.f32 %v526, %v502
  %v536 = vmul.f32 %v531, %v505
  %v537 = vadd.f32 %v284, %v533
  %v538 = vadd.f32 %v285, %v534
  %v539 = vadd.f32 %v286, %v535
  %v540 = vadd.f32 %v287, %v536
  %s541 = scalar_lea.vmem %s3, 64
  %v542 = vld [vmem:[%s541] sm:$0xf]
  %v543 = vld [vmem:[%s541 + $0x4] sm:$0xf]
  %v544 = vld [vmem:[%s541 + $0x8] sm:$0xf]
  %v545 = vld [vmem:[%s541 + $0xc] sm:$0xf]
  %v546 = vld [vmem:[%s541 + $0x10] sm:$0xf]
  %v547 = vld [vmem:[%s541 + $0x14] sm:$0xf]
  %v548 = vld [vmem:[%s541 + $0x18] sm:$0xf]
  %v549 = vld [vmem:[%s541 + $0x1c] sm:$0xf]
  %v558 = vunpack.c.l.b16 %v542
  %v559 = vunpack.c.l.b16 %v543
  %v560 = vunpack.c.l.b16 %v544
  %v561 = vunpack.c.l.b16 %v545
  %v562 = vunpack.c.l.b16 %v546
  %v563 = vunpack.c.l.b16 %v547
  %v564 = vunpack.c.l.b16 %v548
  %v565 = vunpack.c.l.b16 %v549
  %v566 = vpack.c.b16 %v559, %v558
  %v567 = vpack.c.b16 %v561, %v560
  %v568 = vpack.c.b16 %v563, %v562
  %v569 = vpack.c.b16 %v565, %v564
  %574 = vmatprep.subr.bf16.mxu0 0
  %575 = vmatpush1.bf16.msra.mxu0 %v566
  %576 = vmatprep.subr.bf16.mxu0 0
  %577 = vmatpush1.bf16.msra.mxu0 %v567
  %578 = vmatprep.subr.bf16.mxu0 0
  %579 = vmatpush1.bf16.msra.mxu0 %v568
  %580 = vmatprep.subr.bf16.mxu0 0
  %581 = vmatpush1.bf16.msra.mxu0 %v569
  %582 = vmatprep.subr.bf16.mxu0 0
  %583 = vmatpush1.bf16.msra.mxu0 0
  %584 = vmatprep.subr.bf16.mxu0 0
  %585 = vmatpush1.bf16.msra.mxu0 0
  %586 = vmatprep.subr.bf16.mxu0 0
  %587 = vmatpush1.bf16.msra.mxu0 0
  %588 = vmatprep.subr.bf16.mxu0 0
  %589 = vmatpush1.bf16.msra.mxu0 0
  %590 = vmatprep.subr.bf16.mxu0 0
  %591 = vmatpush1.bf16.msra.mxu0 0
  %592 = vmatprep.subr.bf16.mxu0 0
  %593 = vmatpush1.bf16.msra.mxu0 0
  %594 = vmatprep.subr.bf16.mxu0 0
  %595 = vmatpush1.bf16.msra.mxu0 0
  %596 = vmatprep.subr.bf16.mxu0 0
  %597 = vmatpush1.bf16.msra.mxu0 0
  %598 = vmatprep.subr.bf16.mxu0 0
  %599 = vmatpush1.bf16.msra.mxu0 0
  %600 = vmatprep.subr.bf16.mxu0 0
  %601 = vmatpush1.bf16.msra.mxu0 0
  %602 = vmatprep.subr.bf16.mxu0 0
  %603 = vmatpush1.bf16.msra.mxu0 0
  %604 = vmatprep.subr.bf16.mxu0 0
  %605 = vmatpush1.bf16.msra.mxu0 0
  %606 = vmatprep.mubr.bf16.mxu0 0
  %607 = vmatmul.mubr.bf16.gmra.mrb[0].mxu0 %v65
  %v608 = vpop.f32.mrb[0].mxu0
  %v609 = vadd.f32 0.0, %v608
  %v610 = vpop.f32.mrb[0].mxu0
  %v611 = vpop.f32.mrb[0].mxu0
  %v612 = vadd.f32 0.0, %v611
  %v613 = vpop.f32.mrb[0].mxu0
  %614 = vmatprep.mubr.bf16.mxu0 0
  %615 = vmatmul.mubr.bf16.gmra.mrb[0].mxu0 %v68
  %v616 = vpop.f32.mrb[0].mxu0
  %v617 = vadd.f32 0.0, %v616
  %v618 = vpop.f32.mrb[0].mxu0
  %v619 = vpop.f32.mrb[0].mxu0
  %v620 = vadd.f32 0.0, %v619
  %v621 = vpop.f32.mrb[0].mxu0
  %622 = vdwg.mxu0
  %v623 = vxor.u32 %v609, 2147483648
  %v624 = vxor.u32 %v612, 2147483648
  %v625 = vxor.u32 %v617, 2147483648
  %v626 = vxor.u32 %v620, 2147483648
  %v627 = vmul.f32 %v623, 1.442695
  %v628 = vpow.pop %v627
  %v629 = vmul.f32 %v624, 1.442695
  %v630 = vpow.pop %v629
  %v631 = vmul.f32 %v625, 1.442695
  %v632 = vpow.pop %v631
  %v633 = vmul.f32 %v626, 1.442695
  %v634 = vpow.pop %v633
  %v635 = vadd.f32 %v628, 1.0
  %v636 = vadd.f32 %v630, 1.0
  %v637 = vadd.f32 %v632, 1.0
  %v638 = vadd.f32 %v634, 1.0
  %v639 = vrcp.pop %v635
  %v640 = vmul.f32 1.0, %v639
  %v641 = vrcp.pop %v636
  %v642 = vmul.f32 1.0, %v641
  %v643 = vrcp.pop %v637
  %v644 = vmul.f32 1.0, %v643
  %v645 = vrcp.pop %v638
  %v646 = vmul.f32 1.0, %v645
  %v647 = vmul.f32 %v609, %v640
  %v648 = vmul.f32 %v612, %v642
  %v649 = vmul.f32 %v617, %v644
  %v650 = vmul.f32 %v620, %v646
  %655 = vrot.lane.b32.xlu0 %v647, 64
  %v656 = vpop.permute.xlu0 %655
  %657 = vrot.lane.b32.xlu0 %v648, 64
  %v658 = vpop.permute.xlu0 %657
  %659 = vrot.lane.b32.xlu0 %v649, 64
  %v660 = vpop.permute.xlu0 %659
  %661 = vrot.lane.b32.xlu0 %v650, 64
  %v662 = vpop.permute.xlu0 %661
  %v667 = vmul.f32 %v609, %v656
  %v668 = vmul.f32 %v612, %v658
  %v669 = vmul.f32 %v617, %v660
  %v670 = vmul.f32 %v620, %v662
  %v671 = vpack.c.bf16 %v668, %v667
  %v672 = vpack.c.bf16 %v670, %v669
  %s673 = scalar_lea.vmem %s4, 64
  %v674 = vld [vmem:[%s673] sm:$0xf]
  %v675 = vld [vmem:[%s673 + $0x4] sm:$0xf]
  %v676 = vld [vmem:[%s673 + $0x8] sm:$0xf]
  %v677 = vld [vmem:[%s673 + $0xc] sm:$0xf]
  %v678 = vld [vmem:[%s673 + $0x10] sm:$0xf]
  %v679 = vld [vmem:[%s673 + $0x14] sm:$0xf]
  %v680 = vld [vmem:[%s673 + $0x18] sm:$0xf]
  %v681 = vld [vmem:[%s673 + $0x1c] sm:$0xf]
  %v690 = vunpack.c.l.b16 %v674
  %v691 = vunpack.c.l.b16 %v675
  %v692 = vunpack.c.l.b16 %v676
  %v693 = vunpack.c.l.b16 %v677
  %v694 = vunpack.c.l.b16 %v678
  %v695 = vunpack.c.l.b16 %v679
  %v696 = vunpack.c.l.b16 %v680
  %v697 = vunpack.c.l.b16 %v681
  %v698 = vpack.c.b16 %v691, %v690
  %v699 = vpack.c.b16 %v693, %v692
  %v700 = vpack.c.b16 %v695, %v694
  %v701 = vpack.c.b16 %v697, %v696
  %v707 = vsel %vm63, %v671, 0
  %v710 = vsel %vm63, %v672, 0
  %712 = vmatprep.subr.bf16.mxu0 0
  %713 = vmatpush1.bf16.msra.mxu0 %v698
  %714 = vmatprep.subr.bf16.mxu0 0
  %715 = vmatpush1.bf16.msra.mxu0 %v699
  %716 = vmatprep.subr.bf16.mxu0 0
  %717 = vmatpush1.bf16.msra.mxu0 %v700
  %718 = vmatprep.subr.bf16.mxu0 0
  %719 = vmatpush1.bf16.msra.mxu0 %v701
  %720 = vmatprep.subr.bf16.mxu0 0
  %721 = vmatpush1.bf16.msra.mxu0 0
  %722 = vmatprep.subr.bf16.mxu0 0
  %723 = vmatpush1.bf16.msra.mxu0 0
  %724 = vmatprep.subr.bf16.mxu0 0
  %725 = vmatpush1.bf16.msra.mxu0 0
  %726 = vmatprep.subr.bf16.mxu0 0
  %727 = vmatpush1.bf16.msra.mxu0 0
  %728 = vmatprep.subr.bf16.mxu0 0
  %729 = vmatpush1.bf16.msra.mxu0 0
  %730 = vmatprep.subr.bf16.mxu0 0
  %731 = vmatpush1.bf16.msra.mxu0 0
  %732 = vmatprep.subr.bf16.mxu0 0
  %733 = vmatpush1.bf16.msra.mxu0 0
  %734 = vmatprep.subr.bf16.mxu0 0
  %735 = vmatpush1.bf16.msra.mxu0 0
  %736 = vmatprep.subr.bf16.mxu0 0
  %737 = vmatpush1.bf16.msra.mxu0 0
  %738 = vmatprep.subr.bf16.mxu0 0
  %739 = vmatpush1.bf16.msra.mxu0 0
  %740 = vmatprep.subr.bf16.mxu0 0
  %741 = vmatpush1.bf16.msra.mxu0 0
  %742 = vmatprep.subr.bf16.mxu0 0
  %743 = vmatpush1.bf16.msra.mxu0 0
  %744 = vmatprep.mubr.bf16.mxu0 0
  %745 = vmatmul.mubr.bf16.gmra.mrb[0].mxu0 %v707
  %v746 = vpop.f32.mrb[0].mxu0
  %v747 = vadd.f32 0.0, %v746
  %v748 = vpop.f32.mrb[0].mxu0
  %v749 = vpop.f32.mrb[0].mxu0
  %v750 = vadd.f32 0.0, %v749
  %v751 = vpop.f32.mrb[0].mxu0
  %752 = vmatprep.mubr.bf16.mxu0 0
  %753 = vmatmul.mubr.bf16.gmra.mrb[0].mxu0 %v710
  %v754 = vpop.f32.mrb[0].mxu0
  %v755 = vadd.f32 0.0, %v754
  %v756 = vpop.f32.mrb[0].mxu0
  %v757 = vpop.f32.mrb[0].mxu0
  %v758 = vadd.f32 0.0, %v757
  %v759 = vpop.f32.mrb[0].mxu0
  %760 = vdwg.mxu0
  %s761 = scalar_lea.vmem %s2, 64
  %v762 = vld [vmem:[%s761] sm:$0xff]
  %v763 = vld [vmem:[%s761 + $0x8] sm:$0xff]
  %v764 = vld [vmem:[%s761 + $0x10] sm:$0xff]
  %v765 = vld [vmem:[%s761 + $0x18] sm:$0xff]
  %767 = vset.pattern.permute.xlu0 0
  %768 = vperm.xlu0 %767, %v762
  %v769 = vpop.permute.xlu0 %768
  %772 = vset.pattern.permute.xlu0 0
  %773 = vperm.xlu0 %772, %v763
  %v774 = vpop.permute.xlu0 %773
  %777 = vset.pattern.permute.xlu0 0
  %778 = vperm.xlu0 %777, %v764
  %v779 = vpop.permute.xlu0 %778
  %782 = vset.pattern.permute.xlu0 0
  %783 = vperm.xlu0 %782, %v765
  %v784 = vpop.permute.xlu0 %783
  %v786 = vmul.f32 %v769, %v747
  %v787 = vmul.f32 %v774, %v750
  %v788 = vmul.f32 %v779, %v755
  %v789 = vmul.f32 %v784, %v758
  %v790 = vadd.f32 %v537, %v786
  %v791 = vadd.f32 %v538, %v787
  %v792 = vadd.f32 %v539, %v788
  %v793 = vadd.f32 %v540, %v789
  %s794 = scalar_lea.vmem %s3, 96
  %v795 = vld [vmem:[%s794] sm:$0xf]
  %v796 = vld [vmem:[%s794 + $0x4] sm:$0xf]
  %v797 = vld [vmem:[%s794 + $0x8] sm:$0xf]
  %v798 = vld [vmem:[%s794 + $0xc] sm:$0xf]
  %v799 = vld [vmem:[%s794 + $0x10] sm:$0xf]
  %v800 = vld [vmem:[%s794 + $0x14] sm:$0xf]
  %v801 = vld [vmem:[%s794 + $0x18] sm:$0xf]
  %v802 = vld [vmem:[%s794 + $0x1c] sm:$0xf]
  %v811 = vunpack.c.l.b16 %v795
  %v812 = vunpack.c.l.b16 %v796
  %v813 = vunpack.c.l.b16 %v797
  %v814 = vunpack.c.l.b16 %v798
  %v815 = vunpack.c.l.b16 %v799
  %v816 = vunpack.c.l.b16 %v800
  %v817 = vunpack.c.l.b16 %v801
  %v818 = vunpack.c.l.b16 %v802
  %v819 = vpack.c.b16 %v812, %v811
  %v820 = vpack.c.b16 %v814, %v813
  %v821 = vpack.c.b16 %v816, %v815
  %v822 = vpack.c.b16 %v818, %v817
  %827 = vmatprep.subr.bf16.mxu0 0
  %828 = vmatpush1.bf16.msra.mxu0 %v819
  %829 = vmatprep.subr.bf16.mxu0 0
  %830 = vmatpush1.bf16.msra.mxu0 %v820
  %831 = vmatprep.subr.bf16.mxu0 0
  %832 = vmatpush1.bf16.msra.mxu0 %v821
  %833 = vmatprep.subr.bf16.mxu0 0
  %834 = vmatpush1.bf16.msra.mxu0 %v822
  %835 = vmatprep.subr.bf16.mxu0 0
  %836 = vmatpush1.bf16.msra.mxu0 0
  %837 = vmatprep.subr.bf16.mxu0 0
  %838 = vmatpush1.bf16.msra.mxu0 0
  %839 = vmatprep.subr.bf16.mxu0 0
  %840 = vmatpush1.bf16.msra.mxu0 0
  %841 = vmatprep.subr.bf16.mxu0 0
  %842 = vmatpush1.bf16.msra.mxu0 0
  %843 = vmatprep.subr.bf16.mxu0 0
  %844 = vmatpush1.bf16.msra.mxu0 0
  %845 = vmatprep.subr.bf16.mxu0 0
  %846 = vmatpush1.bf16.msra.mxu0 0
  %847 = vmatprep.subr.bf16.mxu0 0
  %848 = vmatpush1.bf16.msra.mxu0 0
  %849 = vmatprep.subr.bf16.mxu0 0
  %850 = vmatpush1.bf16.msra.mxu0 0
  %851 = vmatprep.subr.bf16.mxu0 0
  %852 = vmatpush1.bf16.msra.mxu0 0
  %853 = vmatprep.subr.bf16.mxu0 0
  %854 = vmatpush1.bf16.msra.mxu0 0
  %855 = vmatprep.subr.bf16.mxu0 0
  %856 = vmatpush1.bf16.msra.mxu0 0
  %857 = vmatprep.subr.bf16.mxu0 0
  %858 = vmatpush1.bf16.msra.mxu0 0
  %859 = vmatprep.mubr.bf16.mxu0 0
  %860 = vmatmul.mubr.bf16.gmra.mrb[0].mxu0 %v65
  %v861 = vpop.f32.mrb[0].mxu0
  %v862 = vadd.f32 0.0, %v861
  %v863 = vpop.f32.mrb[0].mxu0
  %v864 = vpop.f32.mrb[0].mxu0
  %v865 = vadd.f32 0.0, %v864
  %v866 = vpop.f32.mrb[0].mxu0
  %867 = vmatprep.mubr.bf16.mxu0 0
  %868 = vmatmul.mubr.bf16.gmra.mrb[0].mxu0 %v68
  %v869 = vpop.f32.mrb[0].mxu0
  %v870 = vadd.f32 0.0, %v869
  %v871 = vpop.f32.mrb[0].mxu0
  %v872 = vpop.f32.mrb[0].mxu0
  %v873 = vadd.f32 0.0, %v872
  %v874 = vpop.f32.mrb[0].mxu0
  %875 = vdwg.mxu0
  %v876 = vxor.u32 %v862, 2147483648
  %v877 = vxor.u32 %v865, 2147483648
  %v878 = vxor.u32 %v870, 2147483648
  %v879 = vxor.u32 %v873, 2147483648
  %v880 = vmul.f32 %v876, 1.442695
  %v881 = vpow.pop %v880
  %v882 = vmul.f32 %v877, 1.442695
  %v883 = vpow.pop %v882
  %v884 = vmul.f32 %v878, 1.442695
  %v885 = vpow.pop %v884
  %v886 = vmul.f32 %v879, 1.442695
  %v887 = vpow.pop %v886
  %v888 = vadd.f32 %v881, 1.0
  %v889 = vadd.f32 %v883, 1.0
  %v890 = vadd.f32 %v885, 1.0
  %v891 = vadd.f32 %v887, 1.0
  %v892 = vrcp.pop %v888
  %v893 = vmul.f32 1.0, %v892
  %v894 = vrcp.pop %v889
  %v895 = vmul.f32 1.0, %v894
  %v896 = vrcp.pop %v890
  %v897 = vmul.f32 1.0, %v896
  %v898 = vrcp.pop %v891
  %v899 = vmul.f32 1.0, %v898
  %v900 = vmul.f32 %v862, %v893
  %v901 = vmul.f32 %v865, %v895
  %v902 = vmul.f32 %v870, %v897
  %v903 = vmul.f32 %v873, %v899
  %908 = vrot.lane.b32.xlu0 %v900, 64
  %v909 = vpop.permute.xlu0 %908
  %910 = vrot.lane.b32.xlu0 %v901, 64
  %v911 = vpop.permute.xlu0 %910
  %912 = vrot.lane.b32.xlu0 %v902, 64
  %v913 = vpop.permute.xlu0 %912
  %914 = vrot.lane.b32.xlu0 %v903, 64
  %v915 = vpop.permute.xlu0 %914
  %v920 = vmul.f32 %v862, %v909
  %v921 = vmul.f32 %v865, %v911
  %v922 = vmul.f32 %v870, %v913
  %v923 = vmul.f32 %v873, %v915
  %v924 = vpack.c.bf16 %v921, %v920
  %v925 = vpack.c.bf16 %v923, %v922
  %s926 = scalar_lea.vmem %s4, 96
  %v927 = vld [vmem:[%s926] sm:$0xf]
  %v928 = vld [vmem:[%s926 + $0x4] sm:$0xf]
  %v929 = vld [vmem:[%s926 + $0x8] sm:$0xf]
  %v930 = vld [vmem:[%s926 + $0xc] sm:$0xf]
  %v931 = vld [vmem:[%s926 + $0x10] sm:$0xf]
  %v932 = vld [vmem:[%s926 + $0x14] sm:$0xf]
  %v933 = vld [vmem:[%s926 + $0x18] sm:$0xf]
  %v934 = vld [vmem:[%s926 + $0x1c] sm:$0xf]
  %v943 = vunpack.c.l.b16 %v927
  %v944 = vunpack.c.l.b16 %v928
  %v945 = vunpack.c.l.b16 %v929
  %v946 = vunpack.c.l.b16 %v930
  %v947 = vunpack.c.l.b16 %v931
  %v948 = vunpack.c.l.b16 %v932
  %v949 = vunpack.c.l.b16 %v933
  %v950 = vunpack.c.l.b16 %v934
  %v951 = vpack.c.b16 %v944, %v943
  %v952 = vpack.c.b16 %v946, %v945
  %v953 = vpack.c.b16 %v948, %v947
  %v954 = vpack.c.b16 %v950, %v949
  %v960 = vsel %vm63, %v924, 0
  %v963 = vsel %vm63, %v925, 0
  %965 = vmatprep.subr.bf16.mxu0 0
  %966 = vmatpush1.bf16.msra.mxu0 %v951
  %967 = vmatprep.subr.bf16.mxu0 0
  %968 = vmatpush1.bf16.msra.mxu0 %v952
  %969 = vmatprep.subr.bf16.mxu0 0
  %970 = vmatpush1.bf16.msra.mxu0 %v953
  %971 = vmatprep.subr.bf16.mxu0 0
  %972 = vmatpush1.bf16.msra.mxu0 %v954
  %973 = vmatprep.subr.bf16.mxu0 0
  %974 = vmatpush1.bf16.msra.mxu0 0
  %975 = vmatprep.subr.bf16.mxu0 0
  %976 = vmatpush1.bf16.msra.mxu0 0
  %977 = vmatprep.subr.bf16.mxu0 0
  %978 = vmatpush1.bf16.msra.mxu0 0
  %979 = vmatprep.subr.bf16.mxu0 0
  %980 = vmatpush1.bf16.msra.mxu0 0
  %981 = vmatprep.subr.bf16.mxu0 0
  %982 = vmatpush1.bf16.msra.mxu0 0
  %983 = vmatprep.subr.bf16.mxu0 0
  %984 = vmatpush1.bf16.msra.mxu0 0
  %985 = vmatprep.subr.bf16.mxu0 0
  %986 = vmatpush1.bf16.msra.mxu0 0
  %987 = vmatprep.subr.bf16.mxu0 0
  %988 = vmatpush1.bf16.msra.mxu0 0
  %989 = vmatprep.subr.bf16.mxu0 0
  %990 = vmatpush1.bf16.msra.mxu0 0
  %991 = vmatprep.subr.bf16.mxu0 0
  %992 = vmatpush1.bf16.msra.mxu0 0
  %993 = vmatprep.subr.bf16.mxu0 0
  %994 = vmatpush1.bf16.msra.mxu0 0
  %995 = vmatprep.subr.bf16.mxu0 0
  %996 = vmatpush1.bf16.msra.mxu0 0
  %997 = vmatprep.mubr.bf16.mxu0 0
  %998 = vmatmul.mubr.bf16.gmra.mrb[0].mxu0 %v960
  %v999 = vpop.f32.mrb[0].mxu0
  %v1000 = vadd.f32 0.0, %v999
  %v1001 = vpop.f32.mrb[0].mxu0
  %v1002 = vpop.f32.mrb[0].mxu0
  %v1003 = vadd.f32 0.0, %v1002
  %v1004 = vpop.f32.mrb[0].mxu0
  %1005 = vmatprep.mubr.bf16.mxu0 0
  %1006 = vmatmul.mubr.bf16.gmra.mrb[0].mxu0 %v963
  %v1007 = vpop.f32.mrb[0].mxu0
  %v1008 = vadd.f32 0.0, %v1007
  %v1009 = vpop.f32.mrb[0].mxu0
  %v1010 = vpop.f32.mrb[0].mxu0
  %v1011 = vadd.f32 0.0, %v1010
  %v1012 = vpop.f32.mrb[0].mxu0
  %1013 = vdwg.mxu0
  %s1014 = scalar_lea.vmem %s2, 96
  %v1015 = vld [vmem:[%s1014] sm:$0xff]
  %v1016 = vld [vmem:[%s1014 + $0x8] sm:$0xff]
  %v1017 = vld [vmem:[%s1014 + $0x10] sm:$0xff]
  %v1018 = vld [vmem:[%s1014 + $0x18] sm:$0xff]
  %1020 = vset.pattern.permute.xlu0 0
  %1021 = vperm.xlu0 %1020, %v1015
  %v1022 = vpop.permute.xlu0 %1021
  %1025 = vset.pattern.permute.xlu0 0
  %1026 = vperm.xlu0 %1025, %v1016
  %v1027 = vpop.permute.xlu0 %1026
  %1030 = vset.pattern.permute.xlu0 0
  %1031 = vperm.xlu0 %1030, %v1017
  %v1032 = vpop.permute.xlu0 %1031
  %1035 = vset.pattern.permute.xlu0 0
  %1036 = vperm.xlu0 %1035, %v1018
  %v1037 = vpop.permute.xlu0 %1036
  %v1039 = vmul.f32 %v1022, %v1000
  %v1040 = vmul.f32 %v1027, %v1003
  %v1041 = vmul.f32 %v1032, %v1008
  %v1042 = vmul.f32 %v1037, %v1011
  %v1043 = vadd.f32 %v790, %v1039
  %v1044 = vadd.f32 %v791, %v1040
  %v1045 = vadd.f32 %v792, %v1041
  %v1046 = vadd.f32 %v793, %v1042
  %1047 = vst.msk [vmem:[%s5] sm:$0xff] %vm63, %v1043
  %1048 = vst.msk [vmem:[%s5 + $0x8] sm:$0xff] %vm63, %v1044
  %1049 = vst.msk [vmem:[%s5 + $0x10] sm:$0xff] %vm63, %v1045
  %1050 = vst.msk [vmem:[%s5 + $0x18] sm:$0xff] %vm63, %v1046
  // Predicated region
  $region22: #{mixtral_forward.6} parent=0 // pred_check
    _
  $region23: #{mixtral_forward.6} parent=0 // pred_check_branch
    %1052 = sbr.rel (0) target = $region25
  $region24: #{mixtral_forward.6} parent=0 // pred_region
    _
  $region25: #{mixtral_forward.6} parent=0 // pred_fallthru
    _
  // Predicated region
  $region26: #{mixtral_forward.6} parent=0 // pred_check
    _
  $region27: #{mixtral_forward.6} parent=0 // pred_check_branch
    %1054 = sbr.rel (0) target = $region29
  $region28: #{mixtral_forward.6} parent=0 // pred_region
    _
  $region29: #{mixtral_forward.6} parent=0 // pred_fallthru
    _

// kernel: mixtral_forward.5
$region0: #{mixtral_forward.5}
  #allocation0 [shape = 'u32[]', space=smem, size = 0x4, offset = 0x4, fixed_abs, tag = 'smem constant byte address 0x4 - core index']
  #allocation1 [shape = 'u32[144,128]{1,0:T(1,128)}', space=vmem, size = 0x12000, scoped, tag = 'internal scratch']
  %s0 = inlined_call_operand.vmem [shape: f32[32,64], index: 0, kind: input, shape index: {}]
  %s1 = inlined_call_operand.vmem [shape: f32[1,64], index: 1, kind: input, shape index: {}]
  %s2 = inlined_call_operand.vmem [shape: bf16[64,192], index: 2, kind: input, shape index: {}]
  %s3 = inlined_call_operand.vmem [shape: bf16[64,64], index: 3, kind: input, shape index: {}]
  %s4 = inlined_call_operand.vmem [shape: f32[16,8], index: 4, kind: input, shape index: {}]
  %s5 = inlined_call_operand.vmem [shape: f32[16,8], index: 5, kind: input, shape index: {}]
  %s6 = inlined_call_operand.vmem [shape: f32[1,64], index: 6, kind: input, shape index: {}]
  %s7 = inlined_call_operand.vmem [shape: f32[64,4], index: 7, kind: input, shape index: {}]
  %s8 = inlined_call_operand.vmem [shape: f32[32,64], index: 8, kind: output, shape index: {0}]
  %s9 = inlined_call_operand.vmem [shape: f32[32,64], index: 9, kind: output, shape index: {1}]
  %s10 = inlined_call_operand.vmem [shape: f32[32,4], index: 10, kind: output, shape index: {2}]
  %11 = xla_tuple %s8, %s9, %s10
  %s12 = sld [smem:[#allocation0]]
  $region81: #{mixtral_forward.5} parent=0
    _
  %s14 = ssub.s32 1, %s12
  %s15 = scalar_select 0, %s14, %s12
  loop: start=0, step=1, limit=4
  $region2: #{mixtral_forward.5} parent=0 // loop_pre_header
    _
  $region3: #{mixtral_forward.5} parent=0 // loop_header
    %s17 = sphi 0, %s21
    %p18 = scmp.ge.s32.totalorder %s17, 4
    %s27 = sphi 0, %s29
    %s30 = sphi 0, %s27
    %s31 = sphi 0, %s30
    %s47 = sphi 0, %s31
    %s51 = sphi 0, %s51
    %s53 = sphi 0, %s51
    %s54 = sphi 0, %s53
    %s68 = sphi 0, %s54
    %s72 = sphi 0, %s72
    %s74 = sphi 0, %s72
    %s75 = sphi 0, %s74
    %s89 = sphi 0, %s75
    %s93 = sphi 0, %s93
    %s95 = sphi 0, %s93
    %s96 = sphi 0, %s95
    %s110 = sphi 0, %s96
    %s114 = sphi 0, %s114
    %s116 = sphi 0, %s114
    %s117 = sphi 0, %s116
    %s131 = sphi 0, %s117
    %s135 = sphi 0, %s135
    %s137 = sphi 0, %s135
    %s138 = sphi 0, %s137
    %s152 = sphi 0, %s138
    %s156 = sphi 0, %s156
    %s158 = sphi 0, %s156
    %s159 = sphi 0, %s158
    %s173 = sphi 0, %s159
    %s177 = sphi 0, %s177
    %s179 = sphi 0, %s177
    %s180 = sphi 0, %s179
    %s194 = sphi 0, %s180
    %s200 = sphi 0, %s202
    %s203 = sphi 0, %s200
    %s204 = sphi 0, %s203
    %s220 = sphi 0, %s204
    %s226 = sphi 0, %s228
    %s229 = sphi 0, %s226
    %s230 = sphi 0, %s229
    %s246 = sphi 0, %s230
    %s252 = sphi 0, %s254
    %s255 = sphi 0, %s252
    %s256 = sphi 0, %s255
    %s272 = sphi 0, %s256
  $region4: #{mixtral_forward.5} parent=0 // loop_header_branch
    %20 = sbr.rel (%p18) target = $region8
  $region5: #{mixtral_forward.5} parent=0 // loop_body
    %s22 = ssub.s32 %s17, 1
    %s23 = ssub.s32 %s17, 2
    %s24 = sadd.s32 %s17, 1
    %s25 = ssub.s32 %s17, %s24
    %p26 = scmp.eq.s32.totalorder %s25, 0
    %s28 = sadd.s32 %s27, 1
    %s29 = scalar_select %p26, %s27, %s28
    %p32 = pneg %p26
    %p33 = scmp.eq.s32.totalorder %s17, 1
    %p34 = por %p32, %p33
    %p35 = scmp.ne.s32.totalorder %s27, %s30
    %p36 = scmp.eq.s32.totalorder %s17, 0
    %p37 = por %p35, %p36
    %p38 = scmp.ne.s32.totalorder %s27, %s30
    %p39 = scmp.eq.s32.totalorder %s22, 1
    %p40 = por %p38, %p39
    %p41 = scmp.ne.s32.totalorder %s30, %s31
    %p42 = scmp.eq.s32.totalorder %s22, 0
    %p43 = por %p41, %p42
    %p44 = scmp.ne.s32.totalorder %s30, %s31
    %p45 = scmp.eq.s32.totalorder %s23, 1
    %p46 = por %p44, %p45
    %p48 = scmp.ne.s32.totalorder %s31, %s47
    %p49 = scmp.eq.s32.totalorder %s23, 0
    %p50 = por %p48, %p49
    %s52 = sadd.s32 %s51, 1
    %p55 = scmp.eq.s32.totalorder %s17, 1
    %p56 = scmp.ne.s32.totalorder %s51, %s53
    %p57 = scmp.eq.s32.totalorder %s17, 0
    %p58 = por %p56, %p57
    %p59 = scmp.ne.s32.totalorder %s51, %s53
    %p60 = scmp.eq.s32.totalorder %s22, 1
    %p61 = por %p59, %p60
    %p62 = scmp.ne.s32.totalorder %s53, %s54
    %p63 = scmp.eq.s32.totalorder %s22, 0
    %p64 = por %p62, %p63
    %p65 = scmp.ne.s32.totalorder %s53, %s54
    %p66 = scmp.eq.s32.totalorder %s23, 1
    %p67 = por %p65, %p66
    %p69 = scmp.ne.s32.totalorder %s54, %s68
    %p70 = scmp.eq.s32.totalorder %s23, 0
    %p71 = por %p69, %p70
    %s73 = sadd.s32 %s72, 1
    %p76 = scmp.eq.s32.totalorder %s17, 1
    %p77 = scmp.ne.s32.totalorder %s72, %s74
    %p78 = scmp.eq.s32.totalorder %s17, 0
    %p79 = por %p77, %p78
    %p80 = scmp.ne.s32.totalorder %s72, %s74
    %p81 = scmp.eq.s32.totalorder %s22, 1
    %p82 = por %p80, %p81
    %p83 = scmp.ne.s32.totalorder %s74, %s75
    %p84 = scmp.eq.s32.totalorder %s22, 0
    %p85 = por %p83, %p84
    %p86 = scmp.ne.s32.totalorder %s74, %s75
    %p87 = scmp.eq.s32.totalorder %s23, 1
    %p88 = por %p86, %p87
    %p90 = scmp.ne.s32.totalorder %s75, %s89
    %p91 = scmp.eq.s32.totalorder %s23, 0
    %p92 = por %p90, %p91
    %s94 = sadd.s32 %s93, 1
    %p97 = scmp.eq.s32.totalorder %s17, 1
    %p98 = scmp.ne.s32.totalorder %s93, %s95
    %p99 = scmp.eq.s32.totalorder %s17, 0
    %p100 = por %p98, %p99
    %p101 = scmp.ne.s32.totalorder %s93, %s95
    %p102 = scmp.eq.s32.totalorder %s22, 1
    %p103 = por %p101, %p102
    %p104 = scmp.ne.s32.totalorder %s95, %s96
    %p105 = scmp.eq.s32.totalorder %s22, 0
    %p106 = por %p104, %p105
    %p107 = scmp.ne.s32.totalorder %s95, %s96
    %p108 = scmp.eq.s32.totalorder %s23, 1
    %p109 = por %p107, %p108
    %p111 = scmp.ne.s32.totalorder %s96, %s110
    %p112 = scmp.eq.s32.totalorder %s23, 0
    %p113 = por %p111, %p112
    %s115 = sadd.s32 %s114, 1
    %p118 = scmp.eq.s32.totalorder %s17, 1
    %p119 = scmp.ne.s32.totalorder %s114, %s116
    %p120 = scmp.eq.s32.totalorder %s17, 0
    %p121 = por %p119, %p120
    %p122 = scmp.ne.s32.totalorder %s114, %s116
    %p123 = scmp.eq.s32.totalorder %s22, 1
    %p124 = por %p122, %p123
    %p125 = scmp.ne.s32.totalorder %s116, %s117
    %p126 = scmp.eq.s32.totalorder %s22, 0
    %p127 = por %p125, %p126
    %p128 = scmp.ne.s32.totalorder %s116, %s117
    %p129 = scmp.eq.s32.totalorder %s23, 1
    %p130 = por %p128, %p129
    %p132 = scmp.ne.s32.totalorder %s117, %s131
    %p133 = scmp.eq.s32.totalorder %s23, 0
    %p134 = por %p132, %p133
    %s136 = sadd.s32 %s135, 1
    %p139 = scmp.eq.s32.totalorder %s17, 1
    %p140 = scmp.ne.s32.totalorder %s135, %s137
    %p141 = scmp.eq.s32.totalorder %s17, 0
    %p142 = por %p140, %p141
    %p143 = scmp.ne.s32.totalorder %s135, %s137
    %p144 = scmp.eq.s32.totalorder %s22, 1
    %p145 = por %p143, %p144
    %p146 = scmp.ne.s32.totalorder %s137, %s138
    %p147 = scmp.eq.s32.totalorder %s22, 0
    %p148 = por %p146, %p147
    %p149 = scmp.ne.s32.totalorder %s137, %s138
    %p150 = scmp.eq.s32.totalorder %s23, 1
    %p151 = por %p149, %p150
    %p153 = scmp.ne.s32.totalorder %s138, %s152
    %p154 = scmp.eq.s32.totalorder %s23, 0
    %p155 = por %p153, %p154
    %s157 = sadd.s32 %s156, 1
    %p160 = scmp.eq.s32.totalorder %s17, 1
    %p161 = scmp.ne.s32.totalorder %s156, %s158
    %p162 = scmp.eq.s32.totalorder %s17, 0
    %p163 = por %p161, %p162
    %p164 = scmp.ne.s32.totalorder %s156, %s158
    %p165 = scmp.eq.s32.totalorder %s22, 1
    %p166 = por %p164, %p165
    %p167 = scmp.ne.s32.totalorder %s158, %s159
    %p168 = scmp.eq.s32.totalorder %s22, 0
    %p169 = por %p167, %p168
    %p170 = scmp.ne.s32.totalorder %s158, %s159
    %p171 = scmp.eq.s32.totalorder %s23, 1
    %p172 = por %p170, %p171
    %p174 = scmp.ne.s32.totalorder %s159, %s173
    %p175 = scmp.eq.s32.totalorder %s23, 0
    %p176 = por %p174, %p175
    %s178 = sadd.s32 %s177, 1
    %p181 = scmp.eq.s32.totalorder %s17, 1
    %p182 = scmp.ne.s32.totalorder %s177, %s179
    %p183 = scmp.eq.s32.totalorder %s17, 0
    %p184 = por %p182, %p183
    %p185 = scmp.ne.s32.totalorder %s177, %s179
    %p186 = scmp.eq.s32.totalorder %s22, 1
    %p187 = por %p185, %p186
    %p188 = scmp.ne.s32.totalorder %s179, %s180
    %p189 = scmp.eq.s32.totalorder %s22, 0
    %p190 = por %p188, %p189
    %p191 = scmp.ne.s32.totalorder %s179, %s180
    %p192 = scmp.eq.s32.totalorder %s23, 1
    %p193 = por %p191, %p192
    %p195 = scmp.ne.s32.totalorder %s180, %s194
    %p196 = scmp.eq.s32.totalorder %s23, 0
    %p197 = por %p195, %p196
    %s198 = ssub.s32 %s17, %s24
    %p199 = scmp.eq.s32.totalorder %s198, 0
    %s201 = sadd.s32 %s200, 1
    %s202 = scalar_select %p199, %s200, %s201
    %p205 = pneg %p199
    %p206 = scmp.eq.s32.totalorder %s17, 1
    %p207 = por %p205, %p206
    %p208 = scmp.ne.s32.totalorder %s200, %s203
    %p209 = scmp.eq.s32.totalorder %s17, 0
    %p210 = por %p208, %p209
    %p211 = scmp.ne.s32.totalorder %s200, %s203
    %p212 = scmp.eq.s32.totalorder %s22, 1
    %p213 = por %p211, %p212
    %p214 = scmp.ne.s32.totalorder %s203, %s204
    %p215 = scmp.eq.s32.totalorder %s22, 0
    %p216 = por %p214, %p215
    %p217 = scmp.ne.s32.totalorder %s203, %s204
    %p218 = scmp.eq.s32.totalorder %s23, 1
    %p219 = por %p217, %p218
    %p221 = scmp.ne.s32.totalorder %s204, %s220
    %p222 = scmp.eq.s32.totalorder %s23, 0
    %p223 = por %p221, %p222
    %s224 = ssub.s32 %s17, %s24
    %p225 = scmp.eq.s32.totalorder %s224, 0
    %s227 = sadd.s32 %s226, 1
    %s228 = scalar_select %p225, %s226, %s227
    %p231 = pneg %p225
    %p232 = scmp.eq.s32.totalorder %s17, 1
    %p233 = por %p231, %p232
    %p234 = scmp.ne.s32.totalorder %s226, %s229
    %p235 = scmp.eq.s32.totalorder %s17, 0
    %p236 = por %p234, %p235
    %p237 = scmp.ne.s32.totalorder %s226, %s229
    %p238 = scmp.eq.s32.totalorder %s22, 1
    %p239 = por %p237, %p238
    %p240 = scmp.ne.s32.totalorder %s229, %s230
    %p241 = scmp.eq.s32.totalorder %s22, 0
    %p242 = por %p240, %p241
    %p243 = scmp.ne.s32.totalorder %s229, %s230
    %p244 = scmp.eq.s32.totalorder %s23, 1
    %p245 = por %p243, %p244
    %p247 = scmp.ne.s32.totalorder %s230, %s246
    %p248 = scmp.eq.s32.totalorder %s23, 0
    %p249 = por %p247, %p248
    %s250 = ssub.s32 %s17, %s24
    %p251 = scmp.eq.s32.totalorder %s250, 0
    %s253 = sadd.s32 %s252, 1
    %s254 = scalar_select %p251, %s252, %s253
    %p257 = pneg %p251
    %p258 = scmp.eq.s32.totalorder %s17, 1
    %p259 = por %p257, %p258
    %p260 = scmp.ne.s32.totalorder %s252, %s255
    %p261 = scmp.eq.s32.totalorder %s17, 0
    %p262 = por %p260, %p261
    %p263 = scmp.ne.s32.totalorder %s252, %s255
    %p264 = scmp.eq.s32.totalorder %s22, 1
    %p265 = por %p263, %p264
    %p266 = scmp.ne.s32.totalorder %s255, %s256
    %p267 = scmp.eq.s32.totalorder %s22, 0
    %p268 = por %p266, %p267
    %p269 = scmp.ne.s32.totalorder %s255, %s256
    %p270 = scmp.eq.s32.totalorder %s23, 1
    %p271 = por %p269, %p270
    %p273 = scmp.ne.s32.totalorder %s256, %s272
    %p274 = scmp.eq.s32.totalorder %s23, 0
    %p275 = por %p273, %p274
    %p276 = scmp.le.s32.totalorder 1, %s17
    %p277 = scmp.lt.s32.totalorder %s17, 3
    %p278 = pnand %p276, %p277
    %p279 = pneg %p278
    // Predicated region
    $region9: #{mixtral_forward.5} parent=5 // pred_check
      _
    $region10: #{mixtral_forward.5} parent=5 // pred_check_branch
      %281 = sbr.rel (%p278) target = $region12
    $region11: #{mixtral_forward.5} parent=5 // pred_region
      %s282 = ssub.s32 %s17, 1
      // Predicated region
      $region13: #{mixtral_forward.5} parent=11 // pred_check
        %p283 = pneg %p64
      $region14: #{mixtral_forward.5} parent=11 // pred_check_branch
        %285 = sbr.rel (%p283) target = $region16
      $region15: #{mixtral_forward.5} parent=11 // pred_region
        _
      $region16: #{mixtral_forward.5} parent=11 // pred_fallthru
        _
      // Predicated region
      $region17: #{mixtral_forward.5} parent=11 // pred_check
        %p286 = pneg %p85
      $region18: #{mixtral_forward.5} parent=11 // pred_check_branch
        %288 = sbr.rel (%p286) target = $region20
      $region19: #{mixtral_forward.5} parent=11 // pred_region
        _
      $region20: #{mixtral_forward.5} parent=11 // pred_fallthru
        _
      // Predicated region
      $region21: #{mixtral_forward.5} parent=11 // pred_check
        %p289 = pneg %p106
      $region22: #{mixtral_forward.5} parent=11 // pred_check_branch
        %291 = sbr.rel (%p289) target = $region24
      $region23: #{mixtral_forward.5} parent=11 // pred_region
        _
      $region24: #{mixtral_forward.5} parent=11 // pred_fallthru
        _
      // Predicated region
      $region25: #{mixtral_forward.5} parent=11 // pred_check
        %p292 = pneg %p127
      $region26: #{mixtral_forward.5} parent=11 // pred_check_branch
        %294 = sbr.rel (%p292) target = $region28
      $region27: #{mixtral_forward.5} parent=11 // pred_region
        _
      $region28: #{mixtral_forward.5} parent=11 // pred_fallthru
        _
      // Predicated region
      $region29: #{mixtral_forward.5} parent=11 // pred_check
        %p295 = pneg %p148
      $region30: #{mixtral_forward.5} parent=11 // pred_check_branch
        %297 = sbr.rel (%p295) target = $region32
      $region31: #{mixtral_forward.5} parent=11 // pred_region
        _
      $region32: #{mixtral_forward.5} parent=11 // pred_fallthru
        _
      // Predicated region
      $region33: #{mixtral_forward.5} parent=11 // pred_check
        %p298 = pneg %p169
      $region34: #{mixtral_forward.5} parent=11 // pred_check_branch
        %300 = sbr.rel (%p298) target = $region36
      $region35: #{mixtral_forward.5} parent=11 // pred_region
        _
      $region36: #{mixtral_forward.5} parent=11 // pred_fallthru
        _
      // Predicated region
      $region37: #{mixtral_forward.5} parent=11 // pred_check
        %p301 = pneg %p190
      $region38: #{mixtral_forward.5} parent=11 // pred_check_branch
        %303 = sbr.rel (%p301) target = $region40
      $region39: #{mixtral_forward.5} parent=11 // pred_region
        _
      $region40: #{mixtral_forward.5} parent=11 // pred_fallthru
        _
    $region12: #{mixtral_forward.5} parent=5 // pred_fallthru
      _
    %p304 = scmp.lt.s32.totalorder %s17, 2
    // Predicated region
    $region41: #{mixtral_forward.5} parent=5 // pred_check
      %p305 = pneg %p304
    $region42: #{mixtral_forward.5} parent=5 // pred_check_branch
      %307 = sbr.rel (%p305) target = $region44
    $region43: #{mixtral_forward.5} parent=5 // pred_region
      // Predicated region
      $region45: #{mixtral_forward.5} parent=43 // pred_check
        %p308 = pneg %p37
      $region46: #{mixtral_forward.5} parent=43 // pred_check_branch
        %310 = sbr.rel (%p308) target = $region48
      $region47: #{mixtral_forward.5} parent=43 // pred_region
        %s311 = smul.u32 2, %s17
        %p312 = scmp.lt.s32.totalorder %s311, 3
        %s313 = scalar_select %p312, %s311, 3
        %s314 = smul.addr %s313, 8
        %s315 = scalar_lea.vmem %s0, %s314
        %s316 = smul.u32 2, %s17
      $region48: #{mixtral_forward.5} parent=43 // pred_fallthru
        _
    $region44: #{mixtral_forward.5} parent=5 // pred_fallthru
      _
    %p317 = scmp.le.s32.totalorder 1, %s17
    %p318 = scmp.lt.s32.totalorder %s17, 3
    %p319 = pnand %p317, %p318
    %p320 = pneg %p319
    // Predicated region
    $region49: #{mixtral_forward.5} parent=5 // pred_check
      _
    $region50: #{mixtral_forward.5} parent=5 // pred_check_branch
      %322 = sbr.rel (%p319) target = $region52
    $region51: #{mixtral_forward.5} parent=5 // pred_region
      %s323 = ssub.s32 %s17, 1
      %s324 = smul.u32 2, %s22
      %p325 = scmp.lt.s32.totalorder %s324, 3
      %s326 = scalar_select %p325, %s324, 3
      %s327 = smul.addr %s326, 8
      %s328 = scalar_lea.vmem %s0, %s327
      %p329 = pneg %p43
      %p330 = pneg %p40
      %p331 = pneg %p64
      %p332 = pneg %p61
      %p333 = pneg %p85
      %p334 = pneg %p82
      %p335 = pneg %p106
      %p336 = pneg %p103
      %p337 = pneg %p127
      %p338 = pneg %p124
      %p339 = pneg %p148
      %p340 = pneg %p145
      %p341 = pneg %p169
      %p342 = pneg %p166
      %p343 = pneg %p190
      %p344 = pneg %p187
      %p345 = pneg %p216
      %p346 = pneg %p213
      %s347 = smul.u32 2, %s22
      %p348 = scmp.lt.s32.totalorder %s347, 3
      %s349 = scalar_select %p348, %s347, 3
      %s350 = smul.addr %s349, 8
      %s351 = scalar_lea.vmem %s8, %s350
      %p352 = pneg %p242
      %p353 = pneg %p239
      %s354 = smul.u32 2, %s22
      %p355 = scmp.lt.s32.totalorder %s354, 3
      %s356 = scalar_select %p355, %s354, 3
      %s357 = smul.addr %s356, 8
      %s358 = scalar_lea.vmem %s9, %s357
      %p359 = pneg %p268
      %p360 = pneg %p265
      %s361 = smul.u32 2, %s22
      %p362 = scmp.lt.s32.totalorder %s361, 3
      %s363 = scalar_select %p362, %s361, 3
      %s364 = smul.addr %s363, 8
      %s365 = scalar_lea.vmem %s10, %s364
      %s366 = smul.u32 2, %s22
      %p367 = scmp.lt.s32.totalorder %s366, 3
      %s368 = scalar_select %p367, %s366, 3
      %s369 = smul.addr %s368, 8
      %s370 = scalar_lea.vmem %s0, %s369
      %s371 = smul.u32 2, %s22
      %s372 = smul.u32 2, %s22
      %p373 = scmp.lt.s32.totalorder %s372, 3
      %s374 = scalar_select %p373, %s372, 3
      %s375 = smul.addr %s374, 8
      %s376 = scalar_lea.vmem %s8, %s375
      %s377 = smul.u32 2, %s22
      %s378 = smul.u32 2, %s22
      %p379 = scmp.lt.s32.totalorder %s378, 3
      %s380 = scalar_select %p379, %s378, 3
      %s381 = smul.addr %s380, 8
      %s382 = scalar_lea.vmem %s9, %s381
      %s383 = smul.u32 2, %s22
      %s384 = smul.u32 2, %s22
      %p385 = scmp.lt.s32.totalorder %s384, 3
      %s386 = scalar_select %p385, %s384, 3
      %s387 = smul.addr %s386, 8
      %s388 = scalar_lea.vmem %s10, %s387
      %s389 = smul.u32 2, %s22
      %v391 = vld [vmem:[%s370] sm:$0xff]
      %v392 = vld [vmem:[%s370 + $0x8] sm:$0xff]
      %v393 = vmul.f32 %v391, %v391
      %v394 = vmul.f32 %v392, %v392
      %vm395 = vcmask 523264
      %v396 = vsel %vm395, %v393, 0.0
      %397 = vadd.xlane.f32.xlu0 %v396
      %v398 = vpop.xlane.xlu0 %397
      %v399 = vsel %vm395, %v394, 0.0
      %400 = vadd.xlane.f32.xlu0 %v399
      %v401 = vpop.xlane.xlu0 %400
      %v402 = vrcp.pop 64.0
      %v403 = vmul.f32 %v398, %v402
      %v404 = vmul.f32 %v401, %v402
      %v405 = vadd.f32 %v403, 1e-06
      %v406 = vadd.f32 %v404, 1e-06
      %v407 = vrsqrt.pop %v405
      %v408 = vrsqrt.pop %v406
      %v409 = vmul.f32 %v391, %v407
      %v410 = vmul.f32 %v392, %v408
      %v411 = vld [vmem:[%s1] sm:$0x1]
      %v413 = vlaneseq
      %v414 = vshrl.u32 %v413, 7
      %v415 = vsub.s32 0, %v414
      %v416 = vrot.slane %v411, %v415
      %v418 = vmul.f32 %v409, %v416
      %v419 = vmul.f32 %v410, %v416
      %v420 = vpack.c.bf16 %v419, %v418
      %v421 = vld [vmem:[%s2] sm:$0xff]
      %v422 = vld [vmem:[%s2 + $0x8] sm:$0xff]
      %v423 = vld [vmem:[%s2 + $0x10] sm:$0xff]
      %v424 = vld [vmem:[%s2 + $0x18] sm:$0xff]
      %v425 = vld [vmem:[%s2 + $0x20] sm:$0xff]
      %v426 = vld [vmem:[%s2 + $0x28] sm:$0xff]
      %v427 = vld [vmem:[%s2 + $0x30] sm:$0xff]
      %v428 = vld [vmem:[%s2 + $0x38] sm:$0xff]
      %v437 = vunpack.c.l.b16 %v421
      %v438 = vunpack.c.h.b16 %v421
      %v439 = vunpack.c.l.b16 %v422
      %v440 = vunpack.c.h.b16 %v422
      %v441 = vunpack.c.l.b16 %v423
      %v442 = vunpack.c.h.b16 %v423
      %v443 = vunpack.c.l.b16 %v424
      %v444 = vunpack.c.h.b16 %v424
      %v445 = vunpack.c.l.b16 %v425
      %v446 = vunpack.c.h.b16 %v425
      %v447 = vunpack.c.l.b16 %v426
      %v448 = vunpack.c.h.b16 %v426
      %v449 = vunpack.c.l.b16 %v427
      %v450 = vunpack.c.h.b16 %v427
      %v451 = vunpack.c.l.b16 %v428
      %v452 = vunpack.c.h.b16 %v428
      %v453 = vpack.c.b16 %v439, %v437
      %v454 = vpack.c.b16 %v440, %v438
      %v455 = vpack.c.b16 %v443, %v441
      %v456 = vpack.c.b16 %v444, %v442
      %v457 = vpack.c.b16 %v447, %v445
      %v458 = vpack.c.b16 %v448, %v446
      %v459 = vpack.c.b16 %v451, %v449
      %v460 = vpack.c.b16 %v452, %v450
      %v470 = vsel %vm395, %v420, 0
      %472 = vmatprep.subr.bf16.mxu0 %v454
      %473 = vmatpush1.bf16.msra.mxu0 %v453
      %474 = vmatprep.subr.bf16.mxu0 %v456
      %475 = vmatpush1.bf16.msra.mxu0 %v455
      %476 = vmatprep.subr.bf16.mxu0 %v458
      %477 = vmatpush1.bf16.msra.mxu0 %v457
      %478 = vmatprep.subr.bf16.mxu0 %v460
      %479 = vmatpush1.bf16.msra.mxu0 %v459
      %480 = vmatprep.subr.bf16.mxu0 0
      %481 = vmatpush1.bf16.msra.mxu0 0
      %482 = vmatprep.subr.bf16.mxu0 0
      %483 = vmatpush1.bf16.msra.mxu0 0
      %484 = vmatprep.subr.bf16.mxu0 0
      %485 = vmatpush1.bf16.msra.mxu0 0
      %486 = vmatprep.subr.bf16.mxu0 0
      %487 = vmatpush1.bf16.msra.mxu0 0
      %488 = vmatprep.subr.bf16.mxu0 0
      %489 = vmatpush1.bf16.msra.mxu0 0
      %490 = vmatprep.subr.bf16.mxu0 0
      %491 = vmatpush1.bf16.msra.mxu0 0
      %492 = vmatprep.subr.bf16.mxu0 0
      %493 = vmatpush1.bf16.msra.mxu0 0
      %494 = vmatprep.subr.bf16.mxu0 0
      %495 = vmatpush1.bf16.msra.mxu0 0
      %496 = vmatprep.subr.bf16.mxu0 0
      %497 = vmatpush1.bf16.msra.mxu0 0
      %498 = vmatprep.subr.bf16.mxu0 0
      %499 = vmatpush1.bf16.msra.mxu0 0
      %500 = vmatprep.subr.bf16.mxu0 0
      %501 = vmatpush1.bf16.msra.mxu0 0
      %502 = vmatprep.subr.bf16.mxu0 0
      %503 = vmatpush1.bf16.msra.mxu0 0
      %504 = vmatprep.mubr.bf16.mxu0 0
      %505 = vmatmul.mubr.bf16.gmra.mrb[0].mxu0 %v470
      %v506 = vpop.f32.mrb[0].mxu0
      %v507 = vadd.f32 0.0, %v506
      %v508 = vpop.f32.mrb[0].mxu0
      %v509 = vadd.f32 0.0, %v508
      %v510 = vpop.f32.mrb[0].mxu0
      %v511 = vadd.f32 0.0, %v510
      %v512 = vpop.f32.mrb[0].mxu0
      %v513 = vadd.f32 0.0, %v512
      %514 = vdwg.mxu0
      %v515 = vld [vmem:[%s4] sm:$0xff]
      %v516 = vld [vmem:[%s4 + $0x8] sm:$0xff]
      %v517 = vld [vmem:[%s5] sm:$0xff]
      %v518 = vld [vmem:[%s5 + $0x8] sm:$0xff]
      %v519 = vlaneseq
      %v520 = vshrl.u32 %v519, 7
      %v521 = vadd.s32 %v520, 8
      %v522 = vlaneseq
      %v523 = vand.u32 %v522, 127
      %vm524 = vcmp.le.s32.totalorder %v523, %v520
      %vm525 = vcmp.le.s32.totalorder %v523, %v521
      %v526 = vsub.s32 %v520, %v523
      %v527 = vsub.s32 %v521, %v523
      %vm528 = vcmp.lt.s32.totalorder %v526, 8
      %vm529 = vcmp.lt.s32.totalorder %v527, 8
      %vm530 = vmand %vm524, %vm528
      %vm531 = vmand %vm525, %vm529
      %v532 = vmul.f32 %v507, %v515
      %v533 = vmul.f32 %v511, %v516
      %536 = vrot.lane.b32.xlu0 %v517, 8
      %v537 = vpop.permute.xlu0 %536
      %538 = vrot.lane.b32.xlu0 %v518, 8
      %v539 = vpop.permute.xlu0 %538
      %v542 = vmul.f32 %v507, %v537
      %v543 = vmul.f32 %v511, %v539
      %546 = vrot.lane.b32.xlu0 %v542, 120
      %v547 = vpop.permute.xlu0 %546
      %548 = vrot.lane.b32.xlu0 %v543, 120
      %v549 = vpop.permute.xlu0 %548
      %v552 = vsub.f32 %v532, %v547
      %v553 = vsub.f32 %v533, %v549
      %556 = vrot.lane.b32.xlu0 %v515, 8
      %v557 = vpop.permute.xlu0 %556
      %558 = vrot.lane.b32.xlu0 %v516, 8
      %v559 = vpop.permute.xlu0 %558
      %v562 = vmul.f32 %v507, %v557
      %v563 = vmul.f32 %v511, %v559
      %v564 = vmul.f32 %v507, %v517
      %v565 = vmul.f32 %v511, %v518
      %568 = vrot.lane.b32.xlu0 %v564, 8
      %v569 = vpop.permute.xlu0 %568
      %570 = vrot.lane.b32.xlu0 %v565, 8
      %v571 = vpop.permute.xlu0 %570
      %v574 = vadd.f32 %v562, %v569
      %v575 = vadd.f32 %v563, %v571
      %576 = vrot.lane.b32.xlu0 %v515, 64
      %v577 = vpop.permute.xlu0 %576
      %578 = vrot.lane.b32.xlu0 %v516, 64
      %v579 = vpop.permute.xlu0 %578
      %v582 = vmul.f32 %v507, %v577
      %v583 = vmul.f32 %v511, %v579
      %584 = vrot.lane.b32.xlu0 %v517, 72
      %v585 = vpop.permute.xlu0 %584
      %586 = vrot.lane.b32.xlu0 %v518, 72
      %v587 = vpop.permute.xlu0 %586
      %v590 = vmul.f32 %v507, %v585
      %v591 = vmul.f32 %v511, %v587
      %594 = vrot.lane.b32.xlu0 %v590, 120
      %v595 = vpop.permute.xlu0 %594
      %596 = vrot.lane.b32.xlu0 %v591, 120
      %v597 = vpop.permute.xlu0 %596
      %v600 = vsub.f32 %v582, %v595
      %v601 = vsub.f32 %v583, %v597
      %602 = vrot.lane.b32.xlu0 %v515, 72
      %v603 = vpop.permute.xlu0 %602
      %604 = vrot.lane.b32.xlu0 %v516, 72
      %v605 = vpop.permute.xlu0 %604
      %v608 = vmul.f32 %v507, %v603
      %v609 = vmul.f32 %v511, %v605
      %610 = vrot.lane.b32.xlu0 %v517, 64
      %v611 = vpop.permute.xlu0 %610
      %612 = vrot.lane.b32.xlu0 %v518, 64
      %v613 = vpop.permute.xlu0 %612
      %v616 = vmul.f32 %v507, %v611
      %v617 = vmul.f32 %v511, %v613
      %620 = vrot.lane.b32.xlu0 %v616, 8
      %v621 = vpop.permute.xlu0 %620
      %622 = vrot.lane.b32.xlu0 %v617, 8
      %v623 = vpop.permute.xlu0 %622
      %v626 = vadd.f32 %v608, %v621
      %v627 = vadd.f32 %v609, %v623
      %v628 = vpack.c.bf16 %v553, %v552
      %v629 = vpack.c.bf16 %v601, %v600
      %v630 = vpack.c.bf16 %v575, %v574
      %v631 = vpack.c.bf16 %v627, %v626
      %633 = vrot.lane.b32.xlu0 %v630, 120
      %v634 = vpop.permute.xlu0 %633
      %636 = vrot.lane.b32.xlu0 %v631, 56
      %v637 = vpop.permute.xlu0 %636
      %vm638 = vcmask 64512
      %v640 = vsel %vm638, %v634, 0
      %v643 = vsel %vm638, %v637, 0
      %645 = vmatprep.subr.bf16.mxu0 0
      %646 = vmatpush1.bf16.xpose.msra.mxu0 %v643
      %647 = vmatprep.subr.bf16.mxu0 0
      %648 = vmatpush1.bf16.xpose.msra.mxu0 0
      %649 = vmatprep.subr.bf16.mxu0 0
      %650 = vmatpush1.bf16.xpose.msra.mxu0 0
      %651 = vmatprep.subr.bf16.mxu0 0
      %652 = vmatpush1.bf16.xpose.msra.mxu0 0
      %653 = vmatprep.subr.bf16.mxu0 0
      %654 = vmatpush1.bf16.xpose.msra.mxu0 0
      %655 = vmatprep.subr.bf16.mxu0 0
      %656 = vmatpush1.bf16.xpose.msra.mxu0 0
      %657 = vmatprep.subr.bf16.mxu0 0
      %658 = vmatpush1.bf16.xpose.msra.mxu0 0
      %659 = vmatprep.subr.bf16.mxu0 0
      %660 = vmatpush1.bf16.xpose.msra.mxu0 0
      %661 = vmatprep.subr.bf16.mxu0 0
      %662 = vmatpush1.bf16.xpose.msra.mxu0 0
      %663 = vmatprep.subr.bf16.mxu0 0
      %664 = vmatpush1.bf16.xpose.msra.mxu0 0
      %665 = vmatprep.subr.bf16.mxu0 0
      %666 = vmatpush1.bf16.xpose.msra.mxu0 0
      %667 = vmatprep.subr.bf16.mxu0 0
      %668 = vmatpush1.bf16.xpose.msra.mxu0 0
      %669 = vmatprep.subr.bf16.mxu0 0
      %670 = vmatpush1.bf16.xpose.msra.mxu0 0
      %671 = vmatprep.subr.bf16.mxu0 0
      %672 = vmatpush1.bf16.xpose.msra.mxu0 0
      %673 = vmatprep.subr.bf16.mxu0 0
      %674 = vmatpush1.bf16.xpose.msra.mxu0 0
      %675 = vmatprep.subr.bf16.mxu0 0
      %676 = vmatpush1.bf16.xpose.msra.mxu0 0
      %677 = vmatprep.mubr.bf16.mxu0 0
      %678 = vmatmul.mubr.bf16.gmra.mrb[0].mxu0 %v640
      %v679 = vpop.f32.mrb[0].mxu0
      %v680 = vadd.f32 0.0, %v679
      %v681 = vpop.f32.mrb[0].mxu0
      %v682 = vpop.f32.mrb[0].mxu0
      %v683 = vadd.f32 0.0, %v682
      %v684 = vpop.f32.mrb[0].mxu0
      %685 = vdwg.mxu0
      %687 = vrot.lane.b32.xlu0 %v629, 64
      %v688 = vpop.permute.xlu0 %687
      %v690 = vsel %vm638, %v628, 0
      %v693 = vsel %vm638, %v688, 0
      %695 = vmatprep.subr.bf16.mxu0 0
      %696 = vmatpush1.bf16.xpose.msra.mxu0 %v693
      %697 = vmatprep.subr.bf16.mxu0 0
      %698 = vmatpush1.bf16.xpose.msra.mxu0 0
      %699 = vmatprep.subr.bf16.mxu0 0
      %700 = vmatpush1.bf16.xpose.msra.mxu0 0
      %701 = vmatprep.subr.bf16.mxu0 0
      %702 = vmatpush1.bf16.xpose.msra.mxu0 0
      %703 = vmatprep.subr.bf16.mxu0 0
      %704 = vmatpush1.bf16.xpose.msra.mxu0 0
      %705 = vmatprep.subr.bf16.mxu0 0
      %706 = vmatpush1.bf16.xpose.msra.mxu0 0
      %707 = vmatprep.subr.bf16.mxu0 0
      %708 = vmatpush1.bf16.xpose.msra.mxu0 0
      %709 = vmatprep.subr.bf16.mxu0 0
      %710 = vmatpush1.bf16.xpose.msra.mxu0 0
      %711 = vmatprep.subr.bf16.mxu0 0
      %712 = vmatpush1.bf16.xpose.msra.mxu0 0
      %713 = vmatprep.subr.bf16.mxu0 0
      %714 = vmatpush1.bf16.xpose.msra.mxu0 0
      %715 = vmatprep.subr.bf16.mxu0 0
      %716 = vmatpush1.bf16.xpose.msra.mxu0 0
      %717 = vmatprep.subr.bf16.mxu0 0
      %718 = vmatpush1.bf16.xpose.msra.mxu0 0
      %719 = vmatprep.subr.bf16.mxu0 0
      %720 = vmatpush1.bf16.xpose.msra.mxu0 0
      %721 = vmatprep.subr.bf16.mxu0 0
      %722 = vmatpush1.bf16.xpose.msra.mxu0 0
      %723 = vmatprep.subr.bf16.mxu0 0
      %724 = vmatpush1.bf16.xpose.msra.mxu0 0
      %725 = vmatprep.subr.bf16.mxu0 0
      %726 = vmatpush1.bf16.xpose.msra.mxu0 0
      %727 = vmatprep.mubr.bf16.mxu0 0
      %728 = vmatmul.mubr.bf16.gmra.mrb[0].mxu0 %v690
      %v729 = vpop.f32.mrb[0].mxu0
      %v730 = vadd.f32 %v680, %v729
      %v731 = vpop.f32.mrb[0].mxu0
      %v732 = vpop.f32.mrb[0].mxu0
      %v733 = vadd.f32 %v683, %v732
      %v734 = vpop.f32.mrb[0].mxu0
      %735 = vdwg.mxu0
      %v736 = vmul.f32 %v730, 0.25
      %v737 = vmul.f32 %v733, 0.25
      %v738 = vsel %vm530, %v736, -1e+30
      %v739 = vsel %vm531, %v737, -1e+30
      %vm740 = vcmask 130048
      %v741 = vsel %vm740, %v738, -inf
      %742 = vmax.xlane.f32.xlu0 %v741
      %v743 = vpop.xlane.xlu0 %742
      %v744 = vsel %vm740, %v739, -inf
      %745 = vmax.xlane.f32.xlu0 %v744
      %v746 = vpop.xlane.xlu0 %745
      %v747 = vsub.f32 %v738, %v743
      %v748 = vsub.f32 %v739, %v746
      %v749 = vmul.f32 %v747, 1.442695
      %v750 = vpow.pop %v749
      %v751 = vmul.f32 %v748, 1.442695
      %v752 = vpow.pop %v751
      %v753 = vsel %vm740, %v750, 0.0
      %754 = vadd.xlane.f32.xlu0 %v753
      %v755 = vpop.xlane.xlu0 %754
      %v756 = vsel %vm740, %v752, 0.0
      %757 = vadd.xlane.f32.xlu0 %v756
      %v758 = vpop.xlane.xlu0 %757
      %v759 = vrcp.pop %v755
      %v760 = vrcp.pop %v758
      %v761 = vmul.f32 %v750, %v759
      %v762 = vmul.f32 %v752, %v760
      %v763 = vpack.c.bf16 %v762, %v761
      %v764 = vpack.c.bf16 %v513, %v509
      %v766 = vsel %vm740, %v763, 0
      %768 = vmatprep.subr.bf16.mxu0 0
      %769 = vmatpush1.bf16.msra.mxu0 %v764
      %770 = vmatprep.subr.bf16.mxu0 0
      %771 = vmatpush1.bf16.msra.mxu0 0
      %772 = vmatprep.subr.bf16.mxu0 0
      %773 = vmatpush1.bf16.msra.mxu0 0
      %774 = vmatprep.subr.bf16.mxu0 0
      %775 = vmatpush1.bf16.msra.mxu0 0
      %776 = vmatprep.subr.bf16.mxu0 0
      %777 = vmatpush1.bf16.msra.mxu0 0
      %778 = vmatprep.subr.bf16.mxu0 0
      %779 = vmatpush1.bf16.msra.mxu0 0
      %780 = vmatprep.subr.bf16.mxu0 0
      %781 = vmatpush1.bf16.msra.mxu0 0
      %782 = vmatprep.subr.bf16.mxu0 0
      %783 = vmatpush1.bf16.msra.mxu0 0
      %784 = vmatprep.subr.bf16.mxu0 0
      %785 = vmatpush1.bf16.msra.mxu0 0
      %786 = vmatprep.subr.bf16.mxu0 0
      %787 = vmatpush1.bf16.msra.mxu0 0
      %788 = vmatprep.subr.bf16.mxu0 0
      %789 = vmatpush1.bf16.msra.mxu0 0
      %790 = vmatprep.subr.bf16.mxu0 0
      %791 = vmatpush1.bf16.msra.mxu0 0
      %792 = vmatprep.subr.bf16.mxu0 0
      %793 = vmatpush1.bf16.msra.mxu0 0
      %794 = vmatprep.subr.bf16.mxu0 0
      %795 = vmatpush1.bf16.msra.mxu0 0
      %796 = vmatprep.subr.bf16.mxu0 0
      %797 = vmatpush1.bf16.msra.mxu0 0
      %798 = vmatprep.subr.bf16.mxu0 0
      %799 = vmatpush1.bf16.msra.mxu0 0
      %800 = vmatprep.mubr.bf16.mxu0 0
      %801 = vmatmul.mubr.bf16.gmra.mrb[0].mxu0 %v766
      %v802 = vpop.f32.mrb[0].mxu0
      %v803 = vadd.f32 0.0, %v802
      %v804 = vpop.f32.mrb[0].mxu0
      %v805 = vpop.f32.mrb[0].mxu0
      %v806 = vadd.f32 0.0, %v805
      %v807 = vpop.f32.mrb[0].mxu0
      %808 = vdwg.mxu0
      %809 = vrot.lane.b32.xlu0 %v515, 16
      %v810 = vpop.permute.xlu0 %809
      %811 = vrot.lane.b32.xlu0 %v516, 16
      %v812 = vpop.permute.xlu0 %811
      %v815 = vmul.f32 %v507, %v810
      %v816 = vmul.f32 %v511, %v812
      %817 = vrot.lane.b32.xlu0 %v517, 24
      %v818 = vpop.permute.xlu0 %817
      %819 = vrot.lane.b32.xlu0 %v518, 24
      %v820 = vpop.permute.xlu0 %819
      %v823 = vmul.f32 %v507, %v818
      %v824 = vmul.f32 %v511, %v820
      %827 = vrot.lane.b32.xlu0 %v823, 120
      %v828 = vpop.permute.xlu0 %827
      %829 = vrot.lane.b32.xlu0 %v824, 120
      %v830 = vpop.permute.xlu0 %829
      %v833 = vsub.f32 %v815, %v828
      %v834 = vsub.f32 %v816, %v830
      %835 = vrot.lane.b32.xlu0 %v515, 24
      %v836 = vpop.permute.xlu0 %835
      %837 = vrot.lane.b32.xlu0 %v516, 24
      %v838 = vpop.permute.xlu0 %837
      %v841 = vmul.f32 %v507, %v836
      %v842 = vmul.f32 %v511, %v838
      %843 = vrot.lane.b32.xlu0 %v517, 16
      %v844 = vpop.permute.xlu0 %843
      %845 = vrot.lane.b32.xlu0 %v518, 16
      %v846 = vpop.permute.xlu0 %845
      %v849 = vmul.f32 %v507, %v844
      %v850 = vmul.f32 %v511, %v846
      %853 = vrot.lane.b32.xlu0 %v849, 8
      %v854 = vpop.permute.xlu0 %853
      %855 = vrot.lane.b32.xlu0 %v850, 8
      %v856 = vpop.permute.xlu0 %855
      %v859 = vadd.f32 %v841, %v854
      %v860 = vadd.f32 %v842, %v856
      %861 = vrot.lane.b32.xlu0 %v515, 80
      %v862 = vpop.permute.xlu0 %861
      %863 = vrot.lane.b32.xlu0 %v516, 80
      %v864 = vpop.permute.xlu0 %863
      %v867 = vmul.f32 %v507, %v862
      %v868 = vmul.f32 %v511, %v864
      %869 = vrot.lane.b32.xlu0 %v517, 88
      %v870 = vpop.permute.xlu0 %869
      %871 = vrot.lane.b32.xlu0 %v518, 88
      %v872 = vpop.permute.xlu0 %871
      %v875 = vmul.f32 %v507, %v870
      %v876 = vmul.f32 %v511, %v872
      %879 = vrot.lane.b32.xlu0 %v875, 120
      %v880 = vpop.permute.xlu0 %879
      %881 = vrot.lane.b32.xlu0 %v876, 120
      %v882 = vpop.permute.xlu0 %881
      %v885 = vsub.f32 %v867, %v880
      %v886 = vsub.f32 %v868, %v882
      %887 = vrot.lane.b32.xlu0 %v515, 88
      %v888 = vpop.permute.xlu0 %887
      %889 = vrot.lane.b32.xlu0 %v516, 88
      %v890 = vpop.permute.xlu0 %889
      %v893 = vmul.f32 %v507, %v888
      %v894 = vmul.f32 %v511, %v890
      %895 = vrot.lane.b32.xlu0 %v517, 80
      %v896 = vpop.permute.xlu0 %895
      %897 = vrot.lane.b32.xlu0 %v518, 80
      %v898 = vpop.permute.xlu0 %897
      %v901 = vmul.f32 %v507, %v896
      %v902 = vmul.f32 %v511, %v898
      %905 = vrot.lane.b32.xlu0 %v901, 8
      %v906 = vpop.permute.xlu0 %905
      %907 = vrot.lane.b32.xlu0 %v902, 8
      %v908 = vpop.permute.xlu0 %907
      %v911 = vadd.f32 %v893, %v906
      %v912 = vadd.f32 %v894, %v908
      %v913 = vpack.c.bf16 %v834, %v833
      %v914 = vpack.c.bf16 %v886, %v885
      %v915 = vpack.c.bf16 %v860, %v859
      %v916 = vpack.c.bf16 %v912, %v911
      %918 = vrot.lane.b32.xlu0 %v915, 104
      %v919 = vpop.permute.xlu0 %918
      %921 = vrot.lane.b32.xlu0 %v916, 40
      %v922 = vpop.permute.xlu0 %921
      %v924 = vsel %vm638, %v919, 0
      %v927 = vsel %vm638, %v922, 0
      %929 = vmatprep.subr.bf16.mxu0 0
      %930 = vmatpush1.bf16.xpose.msra.mxu0 %v927
      %931 = vmatprep.subr.bf16.mxu0 0
      %932 = vmatpush1.bf16.xpose.msra.mxu0 0
      %933 = vmatprep.subr.bf16.mxu0 0
      %934 = vmatpush1.bf16.xpose.msra.mxu0 0
      %935 = vmatprep.subr.bf16.mxu0 0
      %936 = vmatpush1.bf16.xpose.msra.mxu0 0
      %937 = vmatprep.subr.bf16.mxu0 0
      %938 = vmatpush1.bf16.xpose.msra.mxu0 0
      %939 = vmatprep.subr.bf16.mxu0 0
      %940 = vmatpush1.bf16.xpose.msra.mxu0 0
      %941 = vmatprep.subr.bf16.mxu0 0
      %942 = vmatpush1.bf16.xpose.msra.mxu0 0
      %943 = vmatprep.subr.bf16.mxu0 0
      %944 = vmatpush1.bf16.xpose.msra.mxu0 0
      %945 = vmatprep.subr.bf16.mxu0 0
      %946 = vmatpush1.bf16.xpose.msra.mxu0 0
      %947 = vmatprep.subr.bf16.mxu0 0
      %948 = vmatpush1.bf16.xpose.msra.mxu0 0
      %949 = vmatprep.subr.bf16.mxu0 0
      %950 = vmatpush1.bf16.xpose.msra.mxu0 0
      %951 = vmatprep.subr.bf16.mxu0 0
      %952 = vmatpush1.bf16.xpose.msra.mxu0 0
      %953 = vmatprep.subr.bf16.mxu0 0
      %954 = vmatpush1.bf16.xpose.msra.mxu0 0
      %955 = vmatprep.subr.bf16.mxu0 0
      %956 = vmatpush1.bf16.xpose.msra.mxu0 0
      %957 = vmatprep.subr.bf16.mxu0 0
      %958 = vmatpush1.bf16.xpose.msra.mxu0 0
      %959 = vmatprep.subr.bf16.mxu0 0
      %960 = vmatpush1.bf16.xpose.msra.mxu0 0
      %961 = vmatprep.mubr.bf16.mxu0 0
      %962 = vmatmul.mubr.bf16.gmra.mrb[0].mxu0 %v924
      %v963 = vpop.f32.mrb[0].mxu0
      %v964 = vadd.f32 0.0, %v963
      %v965 = vpop.f32.mrb[0].mxu0
      %v966 = vpop.f32.mrb[0].mxu0
      %v967 = vadd.f32 0.0, %v966
      %v968 = vpop.f32.mrb[0].mxu0
      %969 = vdwg.mxu0
      %971 = vrot.lane.b32.xlu0 %v913, 112
      %v972 = vpop.permute.xlu0 %971
      %974 = vrot.lane.b32.xlu0 %v914, 48
      %v975 = vpop.permute.xlu0 %974
      %v977 = vsel %vm638, %v972, 0
      %v980 = vsel %vm638, %v975, 0
      %982 = vmatprep.subr.bf16.mxu0 0
      %983 = vmatpush1.bf16.xpose.msra.mxu0 %v980
      %984 = vmatprep.subr.bf16.mxu0 0
      %985 = vmatpush1.bf16.xpose.msra.mxu0 0
      %986 = vmatprep.subr.bf16.mxu0 0
      %987 = vmatpush1.bf16.xpose.msra.mxu0 0
      %988 = vmatprep.subr.bf16.mxu0 0
      %989 = vmatpush1.bf16.xpose.msra.mxu0 0
      %990 = vmatprep.subr.bf16.mxu0 0
      %991 = vmatpush1.bf16.xpose.msra.mxu0 0
      %992 = vmatprep.subr.bf16.mxu0 0
      %993 = vmatpush1.bf16.xpose.msra.mxu0 0
      %994 = vmatprep.subr.bf16.mxu0 0
      %995 = vmatpush1.bf16.xpose.msra.mxu0 0
      %996 = vmatprep.subr.bf16.mxu0 0
      %997 = vmatpush1.bf16.xpose.msra.mxu0 0
      %998 = vmatprep.subr.bf16.mxu0 0
      %999 = vmatpush1.bf16.xpose.msra.mxu0 0
      %1000 = vmatprep.subr.bf16.mxu0 0
      %1001 = vmatpush1.bf16.xpose.msra.mxu0 0
      %1002 = vmatprep.subr.bf16.mxu0 0
      %1003 = vmatpush1.bf16.xpose.msra.mxu0 0
      %1004 = vmatprep.subr.bf16.mxu0 0
      %1005 = vmatpush1.bf16.xpose.msra.mxu0 0
      %1006 = vmatprep.subr.bf16.mxu0 0
      %1007 = vmatpush1.bf16.xpose.msra.mxu0 0
      %1008 = vmatprep.subr.bf16.mxu0 0
      %1009 = vmatpush1.bf16.xpose.msra.mxu0 0
      %1010 = vmatprep.subr.bf16.mxu0 0
      %1011 = vmatpush1.bf16.xpose.msra.mxu0 0
      %1012 = vmatprep.subr.bf16.mxu0 0
      %1013 = vmatpush1.bf16.xpose.msra.mxu0 0
      %1014 = vmatprep.mubr.bf16.mxu0 0
      %1015 = vmatmul.mubr.bf16.gmra.mrb[0].mxu0 %v977
      %v1016 = vpop.f32.mrb[0].mxu0
      %v1017 = vadd.f32 %v964, %v1016
      %v1018 = vpop.f32.mrb[0].mxu0
      %v1019 = vpop.f32.mrb[0].mxu0
      %v1020 = vadd.f32 %v967, %v1019
      %v1021 = vpop.f32.mrb[0].mxu0
      %1022 = vdwg.mxu0
      %v1023 = vmul.f32 %v1017, 0.25
      %v1024 = vmul.f32 %v1020, 0.25
      %v1025 = vsel %vm530, %v1023, -1e+30
      %v1026 = vsel %vm531, %v1024, -1e+30
      %v1027 = vsel %vm740, %v1025, -inf
      %1028 = vmax.xlane.f32.xlu0 %v1027
      %v1029 = vpop.xlane.xlu0 %1028
      %v1030 = vsel %vm740, %v1026, -inf
      %1031 = vmax.xlane.f32.xlu0 %v1030
      %v1032 = vpop.xlane.xlu0 %1031
      %v1033 = vsub.f32 %v1025, %v1029
      %v1034 = vsub.f32 %v1026, %v1032
      %v1035 = vmul.f32 %v1033, 1.442695
      %v1036 = vpow.pop %v1035
      %v1037 = vmul.f32 %v1034, 1.442695
      %v1038 = vpow.pop %v1037
      %v1039 = vsel %vm740, %v1036, 0.0
      %1040 = vadd.xlane.f32.xlu0 %v1039
      %v1041 = vpop.xlane.xlu0 %1040
      %v1042 = vsel %vm740, %v1038, 0.0
      %1043 = vadd.xlane.f32.xlu0 %v1042
      %v1044 = vpop.xlane.xlu0 %1043
      %v1045 = vrcp.pop %v1041
      %v1046 = vrcp.pop %v1044
      %v1047 = vmul.f32 %v1036, %v1045
      %v1048 = vmul.f32 %v1038, %v1046
      %v1049 = vpack.c.bf16 %v1048, %v1047
      %1051 = vrot.lane.b32.xlu0 %v764, 112
      %v1052 = vpop.permute.xlu0 %1051
      %v1055 = vsel %vm740, %v1049, 0
      %1057 = vmatprep.subr.bf16.mxu0 0
      %1058 = vmatpush1.bf16.msra.mxu0 %v1052
      %1059 = vmatprep.subr.bf16.mxu0 0
      %1060 = vmatpush1.bf16.msra.mxu0 0
      %1061 = vmatprep.subr.bf16.mxu0 0
      %1062 = vmatpush1.bf16.msra.mxu0 0
      %1063 = vmatprep.subr.bf16.mxu0 0
      %1064 = vmatpush1.bf16.msra.mxu0 0
      %1065 = vmatprep.subr.bf16.mxu0 0
      %1066 = vmatpush1.bf16.msra.mxu0 0
      %1067 = vmatprep.subr.bf16.mxu0 0
      %1068 = vmatpush1.bf16.msra.mxu0 0
      %1069 = vmatprep.subr.bf16.mxu0 0
      %1070 = vmatpush1.bf16.msra.mxu0 0
      %1071 = vmatprep.subr.bf16.mxu0 0
      %1072 = vmatpush1.bf16.msra.mxu0 0
      %1073 = vmatprep.subr.bf16.mxu0 0
      %1074 = vmatpush1.bf16.msra.mxu0 0
      %1075 = vmatprep.subr.bf16.mxu0 0
      %1076 = vmatpush1.bf16.msra.mxu0 0
      %1077 = vmatprep.subr.bf16.mxu0 0
      %1078 = vmatpush1.bf16.msra.mxu0 0
      %1079 = vmatprep.subr.bf16.mxu0 0
      %1080 = vmatpush1.bf16.msra.mxu0 0
      %1081 = vmatprep.subr.bf16.mxu0 0
      %1082 = vmatpush1.bf16.msra.mxu0 0
      %1083 = vmatprep.subr.bf16.mxu0 0
      %1084 = vmatpush1.bf16.msra.mxu0 0
      %1085 = vmatprep.subr.bf16.mxu0 0
      %1086 = vmatpush1.bf16.msra.mxu0 0
      %1087 = vmatprep.subr.bf16.mxu0 0
      %1088 = vmatpush1.bf16.msra.mxu0 0
      %1089 = vmatprep.mubr.bf16.mxu0 0
      %1090 = vmatmul.mubr.bf16.gmra.mrb[0].mxu0 %v1055
      %v1091 = vpop.f32.mrb[0].mxu0
      %v1092 = vadd.f32 0.0, %v1091
      %v1093 = vpop.f32.mrb[0].mxu0
      %v1094 = vpop.f32.mrb[0].mxu0
      %v1095 = vadd.f32 0.0, %v1094
      %v1096 = vpop.f32.mrb[0].mxu0
      %1097 = vdwg.mxu0
      %1098 = vrot.lane.b32.xlu0 %v515, 32
      %v1099 = vpop.permute.xlu0 %1098
      %1100 = vrot.lane.b32.xlu0 %v516, 32
      %v1101 = vpop.permute.xlu0 %1100
      %v1104 = vmul.f32 %v507, %v1099
      %v1105 = vmul.f32 %v511, %v1101
      %1106 = vrot.lane.b32.xlu0 %v517, 40
      %v1107 = vpop.permute.xlu0 %1106
      %1108 = vrot.lane.b32.xlu0 %v518, 40
      %v1109 = vpop.permute.xlu0 %1108
      %v1112 = vmul.f32 %v507, %v1107
      %v1113 = vmul.f32 %v511, %v1109
      %1116 = vrot.lane.b32.xlu0 %v1112, 120
      %v1117 = vpop.permute.xlu0 %1116
      %1118 = vrot.lane.b32.xlu0 %v1113, 120
      %v1119 = vpop.permute.xlu0 %1118
      %v1122 = vsub.f32 %v1104, %v1117
      %v1123 = vsub.f32 %v1105, %v1119
      %1124 = vrot.lane.b32.xlu0 %v515, 40
      %v1125 = vpop.permute.xlu0 %1124
      %1126 = vrot.lane.b32.xlu0 %v516, 40
      %v1127 = vpop.permute.xlu0 %1126
      %v1130 = vmul.f32 %v507, %v1125
      %v1131 = vmul.f32 %v511, %v1127
      %1132 = vrot.lane.b32.xlu0 %v517, 32
      %v1133 = vpop.permute.xlu0 %1132
      %1134 = vrot.lane.b32.xlu0 %v518, 32
      %v1135 = vpop.permute.xlu0 %1134
      %v1138 = vmul.f32 %v507, %v1133
      %v1139 = vmul.f32 %v511, %v1135
      %1142 = vrot.lane.b32.xlu0 %v1138, 8
      %v1143 = vpop.permute.xlu0 %1142
      %1144 = vrot.lane.b32.xlu0 %v1139, 8
      %v1145 = vpop.permute.xlu0 %1144
      %v1148 = vadd.f32 %v1130, %v1143
      %v1149 = vadd.f32 %v1131, %v1145
      %1150 = vrot.lane.b32.xlu0 %v515, 96
      %v1151 = vpop.permute.xlu0 %1150
      %1152 = vrot.lane.b32.xlu0 %v516, 96
      %v1153 = vpop.permute.xlu0 %1152
      %v1156 = vmul.f32 %v507, %v1151
      %v1157 = vmul.f32 %v511, %v1153
      %1158 = vrot.lane.b32.xlu0 %v517, 104
      %v1159 = vpop.permute.xlu0 %1158
      %1160 = vrot.lane.b32.xlu0 %v518, 104
      %v1161 = vpop.permute.xlu0 %1160
      %v1164 = vmul.f32 %v507, %v1159
      %v1165 = vmul.f32 %v511, %v1161
      %1168 = vrot.lane.b32.xlu0 %v1164, 120
      %v1169 = vpop.permute.xlu0 %1168
      %1170 = vrot.lane.b32.xlu0 %v1165, 120
      %v1171 = vpop.permute.xlu0 %1170
      %v1174 = vsub.f32 %v1156, %v1169
      %v1175 = vsub.f32 %v1157, %v1171
      %1176 = vrot.lane.b32.xlu0 %v515, 104
      %v1177 = vpop.permute.xlu0 %1176
      %1178 = vrot.lane.b32.xlu0 %v516, 104
      %v1179 = vpop.permute.xlu0 %1178
      %v1182 = vmul.f32 %v507, %v1177
      %v1183 = vmul.f32 %v511, %v1179
      %1184 = vrot.lane.b32.xlu0 %v517, 96
      %v1185 = vpop.permute.xlu0 %1184
      %1186 = vrot.lane.b32.xlu0 %v518, 96
      %v1187 = vpop.permute.xlu0 %1186
      %v1190 = vmul.f32 %v507, %v1185
      %v1191 = vmul.f32 %v511, %v1187
      %1194 = vrot.lane.b32.xlu0 %v1190, 8
      %v1195 = vpop.permute.xlu0 %1194
      %1196 = vrot.lane.b32.xlu0 %v1191, 8
      %v1197 = vpop.permute.xlu0 %1196
      %v1200 = vadd.f32 %v1182, %v1195
      %v1201 = vadd.f32 %v1183, %v1197
      %v1202 = vpack.c.bf16 %v1123, %v1122
      %v1203 = vpack.c.bf16 %v1175, %v1174
      %v1204 = vpack.c.bf16 %v1149, %v1148
      %v1205 = vpack.c.bf16 %v1201, %v1200
      %1207 = vrot.lane.b32.xlu0 %v1204, 88
      %v1208 = vpop.permute.xlu0 %1207
      %1210 = vrot.lane.b32.xlu0 %v1205, 24
      %v1211 = vpop.permute.xlu0 %1210
      %v1213 = vsel %vm638, %v1208, 0
      %v1216 = vsel %vm638, %v1211, 0
      %1218 = vmatprep.subr.bf16.mxu0 0
      %1219 = vmatpush1.bf16.xpose.msra.mxu0 %v1216
      %1220 = vmatprep.subr.bf16.mxu0 0
      %1221 = vmatpush1.bf16.xpose.msra.mxu0 0
      %1222 = vmatprep.subr.bf16.mxu0 0
      %1223 = vmatpush1.bf16.xpose.msra.mxu0 0
      %1224 = vmatprep.subr.bf16.mxu0 0
      %1225 = vmatpush1.bf16.xpose.msra.mxu0 0
      %1226 = vmatprep.subr.bf16.mxu0 0
      %1227 = vmatpush1.bf16.xpose.msra.mxu0 0
      %1228 = vmatprep.subr.bf16.mxu0 0
      %1229 = vmatpush1.bf16.xpose.msra.mxu0 0
      %1230 = vmatprep.subr.bf16.mxu0 0
      %1231 = vmatpush1.bf16.xpose.msra.mxu0 0
      %1232 = vmatprep.subr.bf16.mxu0 0
      %1233 = vmatpush1.bf16.xpose.msra.mxu0 0
      %1234 = vmatprep.subr.bf16.mxu0 0
      %1235 = vmatpush1.bf16.xpose.msra.mxu0 0
      %1236 = vmatprep.subr.bf16.mxu0 0
      %1237 = vmatpush1.bf16.xpose.msra.mxu0 0
      %1238 = vmatprep.subr.bf16.mxu0 0
      %1239 = vmatpush1.bf16.xpose.msra.mxu0 0
      %1240 = vmatprep.subr.bf16.mxu0 0
      %1241 = vmatpush1.bf16.xpose.msra.mxu0 0
      %1242 = vmatprep.subr.bf16.mxu0 0
      %1243 = vmatpush1.bf16.xpose.msra.mxu0 0
      %1244 = vmatprep.subr.bf16.mxu0 0
      %1245 = vmatpush1.bf16.xpose.msra.mxu0 0
      %1246 = vmatprep.subr.bf16.mxu0 0
      %1247 = vmatpush1.bf16.xpose.msra.mxu0 0
      %1248 = vmatprep.subr.bf16.mxu0 0
      %1249 = vmatpush1.bf16.xpose.msra.mxu0 0
      %1250 = vmatprep.mubr.bf16.mxu0 0
      %1251 = vmatmul.mubr.bf16.gmra.mrb[0].mxu0 %v1213
      %v1252 = vpop.f32.mrb[0].mxu0
      %v1253 = vadd.f32 0.0, %v1252
      %v1254 = vpop.f32.mrb[0].mxu0
      %v1255 = vpop.f32.mrb[0].mxu0
      %v1256 = vadd.f32 0.0, %v1255
      %v1257 = vpop.f32.mrb[0].mxu0
      %1258 = vdwg.mxu0
      %1260 = vrot.lane.b32.xlu0 %v1202, 96
      %v1261 = vpop.permute.xlu0 %1260
      %1263 = vrot.lane.b32.xlu0 %v1203, 32
      %v1264 = vpop.permute.xlu0 %1263
      %v1266 = vsel %vm638, %v1261, 0
      %v1269 = vsel %vm638, %v1264, 0
      %1271 = vmatprep.subr.bf16.mxu0 0
      %1272 = vmatpush1.bf16.xpose.msra.mxu0 %v1269
      %1273 = vmatprep.subr.bf16.mxu0 0
      %1274 = vmatpush1.bf16.xpose.msra.mxu0 0
      %1275 = vmatprep.subr.bf16.mxu0 0
      %1276 = vmatpush1.bf16.xpose.msra.mxu0 0
      %1277 = vmatprep.subr.bf16.mxu0 0
      %1278 = vmatpush1.bf16.xpose.msra.mxu0 0
      %1279 = vmatprep.subr.bf16.mxu0 0
      %1280 = vmatpush1.bf16.xpose.msra.mxu0 0
      %1281 = vmatprep.subr.bf16.mxu0 0
      %1282 = vmatpush1.bf16.xpose.msra.mxu0 0
      %1283 = vmatprep.subr.bf16.mxu0 0
      %1284 = vmatpush1.bf16.xpose.msra.mxu0 0
      %1285 = vmatprep.subr.bf16.mxu0 0
      %1286 = vmatpush1.bf16.xpose.msra.mxu0 0
      %1287 = vmatprep.subr.bf16.mxu0 0
      %1288 = vmatpush1.bf16.xpose.msra.mxu0 0
      %1289 = vmatprep.subr.bf16.mxu0 0
      %1290 = vmatpush1.bf16.xpose.msra.mxu0 0
      %1291 = vmatprep.subr.bf16.mxu0 0
      %1292 = vmatpush1.bf16.xpose.msra.mxu0 0
      %1293 = vmatprep.subr.bf16.mxu0 0
      %1294 = vmatpush1.bf16.xpose.msra.mxu0 0
      %1295 = vmatprep.subr.bf16.mxu0 0
      %1296 = vmatpush1.bf16.xpose.msra.mxu0 0
      %1297 = vmatprep.subr.bf16.mxu0 0
      %1298 = vmatpush1.bf16.xpose.msra.mxu0 0
      %1299 = vmatprep.subr.bf16.mxu0 0
      %1300 = vmatpush1.bf16.xpose.msra.mxu0 0
      %1301 = vmatprep.subr.bf16.mxu0 0
      %1302 = vmatpush1.bf16.xpose.msra.mxu0 0
      %1303 = vmatprep.mubr.bf16.mxu0 0
      %1304 = vmatmul.mubr.bf16.gmra.mrb[0].mxu0 %v1266
      %v1305 = vpop.f32.mrb[0].mxu0
      %v1306 = vadd.f32 %v1253, %v1305
      %v1307 = vpop.f32.mrb[0].mxu0
      %v1308 = vpop.f32.mrb[0].mxu0
      %v1309 = vadd.f32 %v1256, %v1308
      %v1310 = vpop.f32.mrb[0].mxu0
      %1311 = vdwg.mxu0
      %v1312 = vmul.f32 %v1306, 0.25
      %v1313 = vmul.f32 %v1309, 0.25
      %v1314 = vsel %vm530, %v1312, -1e+30
      %v1315 = vsel %vm531, %v1313, -1e+30
      %v1316 = vsel %vm740, %v1314, -inf
      %1317 = vmax.xlane.f32.xlu0 %v1316
      %v1318 = vpop.xlane.xlu0 %1317
      %v1319 = vsel %vm740, %v1315, -inf
      %1320 = vmax.xlane.f32.xlu0 %v1319
      %v1321 = vpop.xlane.xlu0 %1320
      %v1322 = vsub.f32 %v1314, %v1318
      %v1323 = vsub.f32 %v1315, %v1321
      %v1324 = vmul.f32 %v1322, 1.442695
      %v1325 = vpow.pop %v1324
      %v1326 = vmul.f32 %v1323, 1.442695
      %v1327 = vpow.pop %v1326
      %v1328 = vsel %vm740, %v1325, 0.0
      %1329 = vadd.xlane.f32.xlu0 %v1328
      %v1330 = vpop.xlane.xlu0 %1329
      %v1331 = vsel %vm740, %v1327, 0.0
      %1332 = vadd.xlane.f32.xlu0 %v1331
      %v1333 = vpop.xlane.xlu0 %1332
      %v1334 = vrcp.pop %v1330
      %v1335 = vrcp.pop %v1333
      %v1336 = vmul.f32 %v1325, %v1334
      %v1337 = vmul.f32 %v1327, %v1335
      %v1338 = vpack.c.bf16 %v1337, %v1336
      %1339 = vrot.lane.b32.xlu0 %v764, 96
      %v1340 = vpop.permute.xlu0 %1339
      %v1343 = vsel %vm740, %v1338, 0
      %1345 = vmatprep.subr.bf16.mxu0 0
      %1346 = vmatpush1.bf16.msra.mxu0 %v1340
      %1347 = vmatprep.subr.bf16.mxu0 0
      %1348 = vmatpush1.bf16.msra.mxu0 0
      %1349 = vmatprep.subr.bf16.mxu0 0
      %1350 = vmatpush1.bf16.msra.mxu0 0
      %1351 = vmatprep.subr.bf16.mxu0 0
      %1352 = vmatpush1.bf16.msra.mxu0 0
      %1353 = vmatprep.subr.bf16.mxu0 0
      %1354 = vmatpush1.bf16.msra.mxu0 0
      %1355 = vmatprep.subr.bf16.mxu0 0
      %1356 = vmatpush1.bf16.msra.mxu0 0
      %1357 = vmatprep.subr.bf16.mxu0 0
      %1358 = vmatpush1.bf16.msra.mxu0 0
      %1359 = vmatprep.subr.bf16.mxu0 0
      %1360 = vmatpush1.bf16.msra.mxu0 0
      %1361 = vmatprep.subr.bf16.mxu0 0
      %1362 = vmatpush1.bf16.msra.mxu0 0
      %1363 = vmatprep.subr.bf16.mxu0 0
      %1364 = vmatpush1.bf16.msra.mxu0 0
      %1365 = vmatprep.subr.bf16.mxu0 0
      %1366 = vmatpush1.bf16.msra.mxu0 0
      %1367 = vmatprep.subr.bf16.mxu0 0
      %1368 = vmatpush1.bf16.msra.mxu0 0
      %1369 = vmatprep.subr.bf16.mxu0 0
      %1370 = vmatpush1.bf16.msra.mxu0 0
      %1371 = vmatprep.subr.bf16.mxu0 0
      %1372 = vmatpush1.bf16.msra.mxu0 0
      %1373 = vmatprep.subr.bf16.mxu0 0
      %1374 = vmatpush1.bf16.msra.mxu0 0
      %1375 = vmatprep.subr.bf16.mxu0 0
      %1376 = vmatpush1.bf16.msra.mxu0 0
      %1377 = vmatprep.mubr.bf16.mxu0 0
      %1378 = vmatmul.mubr.bf16.gmra.mrb[0].mxu0 %v1343
      %v1379 = vpop.f32.mrb[0].mxu0
      %v1380 = vadd.f32 0.0, %v1379
      %v1381 = vpop.f32.mrb[0].mxu0
      %v1382 = vpop.f32.mrb[0].mxu0
      %v1383 = vadd.f32 0.0, %v1382
      %v1384 = vpop.f32.mrb[0].mxu0
      %1385 = vdwg.mxu0
      %1386 = vrot.lane.b32.xlu0 %v515, 48
      %v1387 = vpop.permute.xlu0 %1386
      %1388 = vrot.lane.b32.xlu0 %v516, 48
      %v1389 = vpop.permute.xlu0 %1388
      %v1392 = vmul.f32 %v507, %v1387
      %v1393 = vmul.f32 %v511, %v1389
      %1394 = vrot.lane.b32.xlu0 %v517, 56
      %v1395 = vpop.permute.xlu0 %1394
      %1396 = vrot.lane.b32.xlu0 %v518, 56
      %v1397 = vpop.permute.xlu0 %1396
      %v1400 = vmul.f32 %v507, %v1395
      %v1401 = vmul.f32 %v511, %v1397
      %1404 = vrot.lane.b32.xlu0 %v1400, 120
      %v1405 = vpop.permute.xlu0 %1404
      %1406 = vrot.lane.b32.xlu0 %v1401, 120
      %v1407 = vpop.permute.xlu0 %1406
      %v1410 = vsub.f32 %v1392, %v1405
      %v1411 = vsub.f32 %v1393, %v1407
      %1412 = vrot.lane.b32.xlu0 %v515, 56
      %v1413 = vpop.permute.xlu0 %1412
      %1414 = vrot.lane.b32.xlu0 %v516, 56
      %v1415 = vpop.permute.xlu0 %1414
      %v1418 = vmul.f32 %v507, %v1413
      %v1419 = vmul.f32 %v511, %v1415
      %1420 = vrot.lane.b32.xlu0 %v517, 48
      %v1421 = vpop.permute.xlu0 %1420
      %1422 = vrot.lane.b32.xlu0 %v518, 48
      %v1423 = vpop.permute.xlu0 %1422
      %v1426 = vmul.f32 %v507, %v1421
      %v1427 = vmul.f32 %v511, %v1423
      %1430 = vrot.lane.b32.xlu0 %v1426, 8
      %v1431 = vpop.permute.xlu0 %1430
      %1432 = vrot.lane.b32.xlu0 %v1427, 8
      %v1433 = vpop.permute.xlu0 %1432
      %v1436 = vadd.f32 %v1418, %v1431
      %v1437 = vadd.f32 %v1419, %v1433
      %1438 = vrot.lane.b32.xlu0 %v515, 112
      %v1439 = vpop.permute.xlu0 %1438
      %1440 = vrot.lane.b32.xlu0 %v516, 112
      %v1441 = vpop.permute.xlu0 %1440
      %v1444 = vmul.f32 %v507, %v1439
      %v1445 = vmul.f32 %v511, %v1441
      %1446 = vrot.lane.b32.xlu0 %v517, 120
      %v1447 = vpop.permute.xlu0 %1446
      %1448 = vrot.lane.b32.xlu0 %v518, 120
      %v1449 = vpop.permute.xlu0 %1448
      %v1452 = vmul.f32 %v507, %v1447
      %v1453 = vmul.f32 %v511, %v1449
      %1456 = vrot.lane.b32.xlu0 %v1452, 120
      %v1457 = vpop.permute.xlu0 %1456
      %1458 = vrot.lane.b32.xlu0 %v1453, 120
      %v1459 = vpop.permute.xlu0 %1458
      %v1462 = vsub.f32 %v1444, %v1457
      %v1463 = vsub.f32 %v1445, %v1459
      %1464 = vrot.lane.b32.xlu0 %v515, 120
      %v1465 = vpop.permute.xlu0 %1464
      %1466 = vrot.lane.b32.xlu0 %v516, 120
      %v1467 = vpop.permute.xlu0 %1466
      %v1470 = vmul.f32 %v507, %v1465
      %v1471 = vmul.f32 %v511, %v1467
      %1472 = vrot.lane.b32.xlu0 %v517, 112
      %v1473 = vpop.permute.xlu0 %1472
      %1474 = vrot.lane.b32.xlu0 %v518, 112
      %v1475 = vpop.permute.xlu0 %1474
      %v1478 = vmul.f32 %v507, %v1473
      %v1479 = vmul.f32 %v511, %v1475
      %1482 = vrot.lane.b32.xlu0 %v1478, 8
      %v1483 = vpop.permute.xlu0 %1482
      %1484 = vrot.lane.b32.xlu0 %v1479, 8
      %v1485 = vpop.permute.xlu0 %1484
      %v1488 = vadd.f32 %v1470, %v1483
      %v1489 = vadd.f32 %v1471, %v1485
      %v1490 = vpack.c.bf16 %v1411, %v1410
      %v1491 = vpack.c.bf16 %v1463, %v1462
      %v1492 = vpack.c.bf16 %v1437, %v1436
      %v1493 = vpack.c.bf16 %v1489, %v1488
      %1495 = vrot.lane.b32.xlu0 %v1492, 72
      %v1496 = vpop.permute.xlu0 %1495
      %1498 = vrot.lane.b32.xlu0 %v1493, 8
      %v1499 = vpop.permute.xlu0 %1498
      %v1501 = vsel %vm638, %v1496, 0
      %v1504 = vsel %vm638, %v1499, 0
      %1506 = vmatprep.subr.bf16.mxu0 0
      %1507 = vmatpush1.bf16.xpose.msra.mxu0 %v1504
      %1508 = vmatprep.subr.bf16.mxu0 0
      %1509 = vmatpush1.bf16.xpose.msra.mxu0 0
      %1510 = vmatprep.subr.bf16.mxu0 0
      %1511 = vmatpush1.bf16.xpose.msra.mxu0 0
      %1512 = vmatprep.subr.bf16.mxu0 0
      %1513 = vmatpush1.bf16.xpose.msra.mxu0 0
      %1514 = vmatprep.subr.bf16.mxu0 0
      %1515 = vmatpush1.bf16.xpose.msra.mxu0 0
      %1516 = vmatprep.subr.bf16.mxu0 0
      %1517 = vmatpush1.bf16.xpose.msra.mxu0 0
      %1518 = vmatprep.subr.bf16.mxu0 0
      %1519 = vmatpush1.bf16.xpose.msra.mxu0 0
      %1520 = vmatprep.subr.bf16.mxu0 0
      %1521 = vmatpush1.bf16.xpose.msra.mxu0 0
      %1522 = vmatprep.subr.bf16.mxu0 0
      %1523 = vmatpush1.bf16.xpose.msra.mxu0 0
      %1524 = vmatprep.subr.bf16.mxu0 0
      %1525 = vmatpush1.bf16.xpose.msra.mxu0 0
      %1526 = vmatprep.subr.bf16.mxu0 0
      %1527 = vmatpush1.bf16.xpose.msra.mxu0 0
      %1528 = vmatprep.subr.bf16.mxu0 0
      %1529 = vmatpush1.bf16.xpose.msra.mxu0 0
      %1530 = vmatprep.subr.bf16.mxu0 0
      %1531 = vmatpush1.bf16.xpose.msra.mxu0 0
      %1532 = vmatprep.subr.bf16.mxu0 0
      %1533 = vmatpush1.bf16.xpose.msra.mxu0 0
      %1534 = vmatprep.subr.bf16.mxu0 0
      %1535 = vmatpush1.bf16.xpose.msra.mxu0 0
      %1536 = vmatprep.subr.bf16.mxu0 0
      %1537 = vmatpush1.bf16.xpose.msra.mxu0 0
      %1538 = vmatprep.mubr.bf16.mxu0 0
      %1539 = vmatmul.mubr.bf16.gmra.mrb[0].mxu0 %v1501
      %v1540 = vpop.f32.mrb[0].mxu0
      %v1541 = vadd.f32 0.0, %v1540
      %v1542 = vpop.f32.mrb[0].mxu0
      %v1543 = vpop.f32.mrb[0].mxu0
      %v1544 = vadd.f32 0.0, %v1543
      %v1545 = vpop.f32.mrb[0].mxu0
      %1546 = vdwg.mxu0
      %1548 = vrot.lane.b32.xlu0 %v1490, 80
      %v1549 = vpop.permute.xlu0 %1548
      %1551 = vrot.lane.b32.xlu0 %v1491, 16
      %v1552 = vpop.permute.xlu0 %1551
      %v1554 = vsel %vm638, %v1549, 0
      %v1557 = vsel %vm638, %v1552, 0
      %1559 = vmatprep.subr.bf16.mxu0 0
      %1560 = vmatpush1.bf16.xpose.msra.mxu0 %v1557
      %1561 = vmatprep.subr.bf16.mxu0 0
      %1562 = vmatpush1.bf16.xpose.msra.mxu0 0
      %1563 = vmatprep.subr.bf16.mxu0 0
      %1564 = vmatpush1.bf16.xpose.msra.mxu0 0
      %1565 = vmatprep.subr.bf16.mxu0 0
      %1566 = vmatpush1.bf16.xpose.msra.mxu0 0
      %1567 = vmatprep.subr.bf16.mxu0 0
      %1568 = vmatpush1.bf16.xpose.msra.mxu0 0
      %1569 = vmatprep.subr.bf16.mxu0 0
      %1570 = vmatpush1.bf16.xpose.msra.mxu0 0
      %1571 = vmatprep.subr.bf16.mxu0 0
      %1572 = vmatpush1.bf16.xpose.msra.mxu0 0
      %1573 = vmatprep.subr.bf16.mxu0 0
      %1574 = vmatpush1.bf16.xpose.msra.mxu0 0
      %1575 = vmatprep.subr.bf16.mxu0 0
      %1576 = vmatpush1.bf16.xpose.msra.mxu0 0
      %1577 = vmatprep.subr.bf16.mxu0 0
      %1578 = vmatpush1.bf16.xpose.msra.mxu0 0
      %1579 = vmatprep.subr.bf16.mxu0 0
      %1580 = vmatpush1.bf16.xpose.msra.mxu0 0
      %1581 = vmatprep.subr.bf16.mxu0 0
      %1582 = vmatpush1.bf16.xpose.msra.mxu0 0
      %1583 = vmatprep.subr.bf16.mxu0 0
      %1584 = vmatpush1.bf16.xpose.msra.mxu0 0
      %1585 = vmatprep.subr.bf16.mxu0 0
      %1586 = vmatpush1.bf16.xpose.msra.mxu0 0
      %1587 = vmatprep.subr.bf16.mxu0 0
      %1588 = vmatpush1.bf16.xpose.msra.mxu0 0
      %1589 = vmatprep.subr.bf16.mxu0 0
      %1590 = vmatpush1.bf16.xpose.msra.mxu0 0
      %1591 = vmatprep.mubr.bf16.mxu0 0
      %1592 = vmatmul.mubr.bf16.gmra.mrb[0].mxu0 %v1554
      %v1593 = vpop.f32.mrb[0].mxu0
      %v1594 = vadd.f32 %v1541, %v1593
      %v1595 = vpop.f32.mrb[0].mxu0
      %v1596 = vpop.f32.mrb[0].mxu0
      %v1597 = vadd.f32 %v1544, %v1596
      %v1598 = vpop.f32.mrb[0].mxu0
      %1599 = vdwg.mxu0
      %v1600 = vmul.f32 %v1594, 0.25
      %v1601 = vmul.f32 %v1597, 0.25
      %v1602 = vsel %vm530, %v1600, -1e+30
      %v1603 = vsel %vm531, %v1601, -1e+30
      %v1604 = vsel %vm740, %v1602, -inf
      %1605 = vmax.xlane.f32.xlu0 %v1604
      %v1606 = vpop.xlane.xlu0 %1605
      %v1607 = vsel %vm740, %v1603, -inf
      %1608 = vmax.xlane.f32.xlu0 %v1607
      %v1609 = vpop.xlane.xlu0 %1608
      %v1610 = vsub.f32 %v1602, %v1606
      %v1611 = vsub.f32 %v1603, %v1609
      %v1612 = vmul.f32 %v1610, 1.442695
      %v1613 = vpow.pop %v1612
      %v1614 = vmul.f32 %v1611, 1.442695
      %v1615 = vpow.pop %v1614
      %v1616 = vsel %vm740, %v1613, 0.0
      %1617 = vadd.xlane.f32.xlu0 %v1616
      %v1618 = vpop.xlane.xlu0 %1617
      %v1619 = vsel %vm740, %v1615, 0.0
      %1620 = vadd.xlane.f32.xlu0 %v1619
      %v1621 = vpop.xlane.xlu0 %1620
      %v1622 = vrcp.pop %v1618
      %v1623 = vrcp.pop %v1621
      %v1624 = vmul.f32 %v1613, %v1622
      %v1625 = vmul.f32 %v1615, %v1623
      %v1626 = vpack.c.bf16 %v1625, %v1624
      %1627 = vrot.lane.b32.xlu0 %v764, 80
      %v1628 = vpop.permute.xlu0 %1627
      %v1631 = vsel %vm740, %v1626, 0
      %1633 = vmatprep.subr.bf16.mxu0 0
      %1634 = vmatpush1.bf16.msra.mxu0 %v1628
      %1635 = vmatprep.subr.bf16.mxu0 0
      %1636 = vmatpush1.bf16.msra.mxu0 0
      %1637 = vmatprep.subr.bf16.mxu0 0
      %1638 = vmatpush1.bf16.msra.mxu0 0
      %1639 = vmatprep.subr.bf16.mxu0 0
      %1640 = vmatpush1.bf16.msra.mxu0 0
      %1641 = vmatprep.subr.bf16.mxu0 0
      %1642 = vmatpush1.bf16.msra.mxu0 0
      %1643 = vmatprep.subr.bf16.mxu0 0
      %1644 = vmatpush1.bf16.msra.mxu0 0
      %1645 = vmatprep.subr.bf16.mxu0 0
      %1646 = vmatpush1.bf16.msra.mxu0 0
      %1647 = vmatprep.subr.bf16.mxu0 0
      %1648 = vmatpush1.bf16.msra.mxu0 0
      %1649 = vmatprep.subr.bf16.mxu0 0
      %1650 = vmatpush1.bf16.msra.mxu0 0
      %1651 = vmatprep.subr.bf16.mxu0 0
      %1652 = vmatpush1.bf16.msra.mxu0 0
      %1653 = vmatprep.subr.bf16.mxu0 0
      %1654 = vmatpush1.bf16.msra.mxu0 0
      %1655 = vmatprep.subr.bf16.mxu0 0
      %1656 = vmatpush1.bf16.msra.mxu0 0
      %1657 = vmatprep.subr.bf16.mxu0 0
      %1658 = vmatpush1.bf16.msra.mxu0 0
      %1659 = vmatprep.subr.bf16.mxu0 0
      %1660 = vmatpush1.bf16.msra.mxu0 0
      %1661 = vmatprep.subr.bf16.mxu0 0
      %1662 = vmatpush1.bf16.msra.mxu0 0
      %1663 = vmatprep.subr.bf16.mxu0 0
      %1664 = vmatpush1.bf16.msra.mxu0 0
      %1665 = vmatprep.mubr.bf16.mxu0 0
      %1666 = vmatmul.mubr.bf16.gmra.mrb[0].mxu0 %v1631
      %v1667 = vpop.f32.mrb[0].mxu0
      %v1668 = vadd.f32 0.0, %v1667
      %v1669 = vpop.f32.mrb[0].mxu0
      %v1670 = vpop.f32.mrb[0].mxu0
      %v1671 = vadd.f32 0.0, %v1670
      %v1672 = vpop.f32.mrb[0].mxu0
      %1673 = vdwg.mxu0
      %1676 = vrot.lane.b32.xlu0 %v1092, 16
      %v1677 = vpop.permute.xlu0 %1676
      %1678 = vrot.lane.b32.xlu0 %v1095, 16
      %v1679 = vpop.permute.xlu0 %1678
      %1684 = vrot.lane.b32.xlu0 %v1380, 32
      %v1685 = vpop.permute.xlu0 %1684
      %1686 = vrot.lane.b32.xlu0 %v1383, 32
      %v1687 = vpop.permute.xlu0 %1686
      %1692 = vrot.lane.b32.xlu0 %v1668, 48
      %v1693 = vpop.permute.xlu0 %1692
      %1694 = vrot.lane.b32.xlu0 %v1671, 48
      %v1695 = vpop.permute.xlu0 %1694
      %v1698 = vsel %vm740, %v803, %v1677
      %v1699 = vsel %vm740, %v806, %v1679
      %vm1700 = vcmask 261120
      %v1701 = vsel %vm1700, %v1698, %v1685
      %v1702 = vsel %vm1700, %v1699, %v1687
      %vm1703 = vcmask 392192
      %v1704 = vsel %vm1703, %v1701, %v1693
      %v1705 = vsel %vm1703, %v1702, %v1695
      %v1706 = vpack.c.bf16 %v1705, %v1704
      %v1707 = vld [vmem:[%s3] sm:$0xf]
      %v1708 = vld [vmem:[%s3 + $0x4] sm:$0xf]
      %v1709 = vld [vmem:[%s3 + $0x8] sm:$0xf]
      %v1710 = vld [vmem:[%s3 + $0xc] sm:$0xf]
      %v1711 = vld [vmem:[%s3 + $0x10] sm:$0xf]
      %v1712 = vld [vmem:[%s3 + $0x14] sm:$0xf]
      %v1713 = vld [vmem:[%s3 + $0x18] sm:$0xf]
      %v1714 = vld [vmem:[%s3 + $0x1c] sm:$0xf]
      %v1723 = vunpack.c.l.b16 %v1707
      %v1724 = vunpack.c.l.b16 %v1708
      %v1725 = vunpack.c.l.b16 %v1709
      %v1726 = vunpack.c.l.b16 %v1710
      %v1727 = vunpack.c.l.b16 %v1711
      %v1728 = vunpack.c.l.b16 %v1712
      %v1729 = vunpack.c.l.b16 %v1713
      %v1730 = vunpack.c.l.b16 %v1714
      %v1731 = vpack.c.b16 %v1724, %v1723
      %v1732 = vpack.c.b16 %v1726, %v1725
      %v1733 = vpack.c.b16 %v1728, %v1727
      %v1734 = vpack.c.b16 %v1730, %v1729
      %v1740 = vsel %vm395, %v1706, 0
      %1742 = vmatprep.subr.bf16.mxu0 0
      %1743 = vmatpush1.bf16.msra.mxu0 %v1731
      %1744 = vmatprep.subr.bf16.mxu0 0
      %1745 = vmatpush1.bf16.msra.mxu0 %v1732
      %1746 = vmatprep.subr.bf16.mxu0 0
      %1747 = vmatpush1.bf16.msra.mxu0 %v1733
      %1748 = vmatprep.subr.bf16.mxu0 0
      %1749 = vmatpush1.bf16.msra.mxu0 %v1734
      %1750 = vmatprep.subr.bf16.mxu0 0
      %1751 = vmatpush1.bf16.msra.mxu0 0
      %1752 = vmatprep.subr.bf16.mxu0 0
      %1753 = vmatpush1.bf16.msra.mxu0 0
      %1754 = vmatprep.subr.bf16.mxu0 0
      %1755 = vmatpush1.bf16.msra.mxu0 0
      %1756 = vmatprep.subr.bf16.mxu0 0
      %1757 = vmatpush1.bf16.msra.mxu0 0
      %1758 = vmatprep.subr.bf16.mxu0 0
      %1759 = vmatpush1.bf16.msra.mxu0 0
      %1760 = vmatprep.subr.bf16.mxu0 0
      %1761 = vmatpush1.bf16.msra.mxu0 0
      %1762 = vmatprep.subr.bf16.mxu0 0
      %1763 = vmatpush1.bf16.msra.mxu0 0
      %1764 = vmatprep.subr.bf16.mxu0 0
      %1765 = vmatpush1.bf16.msra.mxu0 0
      %1766 = vmatprep.subr.bf16.mxu0 0
      %1767 = vmatpush1.bf16.msra.mxu0 0
      %1768 = vmatprep.subr.bf16.mxu0 0
      %1769 = vmatpush1.bf16.msra.mxu0 0
      %1770 = vmatprep.subr.bf16.mxu0 0
      %1771 = vmatpush1.bf16.msra.mxu0 0
      %1772 = vmatprep.subr.bf16.mxu0 0
      %1773 = vmatpush1.bf16.msra.mxu0 0
      %1774 = vmatprep.mubr.bf16.mxu0 0
      %1775 = vmatmul.mubr.bf16.gmra.mrb[0].mxu0 %v1740
      %v1776 = vpop.f32.mrb[0].mxu0
      %v1777 = vadd.f32 0.0, %v1776
      %v1778 = vpop.f32.mrb[0].mxu0
      %v1779 = vpop.f32.mrb[0].mxu0
      %v1780 = vadd.f32 0.0, %v1779
      %v1781 = vpop.f32.mrb[0].mxu0
      %1782 = vdwg.mxu0
      %v1783 = vadd.f32 %v391, %v1777
      %v1784 = vadd.f32 %v392, %v1780
      %1785 = vst.msk [vmem:[%s376] sm:$0xff] %vm395, %v1783
      %1786 = vst.msk [vmem:[%s376 + $0x8] sm:$0xff] %vm395, %v1784
      %v1787 = vmul.f32 %v1783, %v1783
      %v1788 = vmul.f32 %v1784, %v1784
      %v1789 = vsel %vm395, %v1787, 0.0
      %1790 = vadd.xlane.f32.xlu0 %v1789
      %v1791 = vpop.xlane.xlu0 %1790
      %v1792 = vsel %vm395, %v1788, 0.0
      %1793 = vadd.xlane.f32.xlu0 %v1792
      %v1794 = vpop.xlane.xlu0 %1793
      %v1795 = vmul.f32 %v1791, %v402
      %v1796 = vmul.f32 %v1794, %v402
      %v1797 = vadd.f32 %v1795, 1e-06
      %v1798 = vadd.f32 %v1796, 1e-06
      %v1799 = vrsqrt.pop %v1797
      %v1800 = vrsqrt.pop %v1798
      %v1801 = vmul.f32 %v1783, %v1799
      %v1802 = vmul.f32 %v1784, %v1800
      %v1803 = vld [vmem:[%s6] sm:$0x1]
      %v1805 = vlaneseq
      %v1806 = vshrl.u32 %v1805, 7
      %v1807 = vsub.s32 0, %v1806
      %v1808 = vrot.slane %v1803, %v1807
      %v1810 = vmul.f32 %v1801, %v1808
      %v1811 = vmul.f32 %v1802, %v1808
      %1812 = vst.msk [vmem:[%s382] sm:$0xff] %vm395, %v1810
      %1813 = vst.msk [vmem:[%s382 + $0x8] sm:$0xff] %vm395, %v1811
      %v1814 = vld [vmem:[%s7] sm:$0xff]
      %v1815 = vld [vmem:[%s7 + $0x8] sm:$0xff]
      %v1816 = vld [vmem:[%s7 + $0x10] sm:$0xff]
      %v1817 = vld [vmem:[%s7 + $0x18] sm:$0xff]
      %v1818 = vld [vmem:[%s7 + $0x20] sm:$0xff]
      %v1819 = vld [vmem:[%s7 + $0x28] sm:$0xff]
      %v1820 = vld [vmem:[%s7 + $0x30] sm:$0xff]
      %v1821 = vld [vmem:[%s7 + $0x38] sm:$0xff]
      %v1823 = vsel %vm395, %v1810, 0
      %v1826 = vsel %vm395, %v1811, 0
      %1828 = vmatprep.subr.mxu0 0.0
      %1829 = vmatpush1.msra.mxu0 %v1814
      %1830 = vmatprep.subr.mxu0 0.0
      %1831 = vmatpush1.msra.mxu0 %v1815
      %1832 = vmatprep.subr.mxu0 0.0
      %1833 = vmatpush1.msra.mxu0 %v1816
      %1834 = vmatprep.subr.mxu0 0.0
      %1835 = vmatpush1.msra.mxu0 %v1817
      %1836 = vmatprep.subr.mxu0 0.0
      %1837 = vmatpush1.msra.mxu0 %v1818
      %1838 = vmatprep.subr.mxu0 0.0
      %1839 = vmatpush1.msra.mxu0 %v1819
      %1840 = vmatprep.subr.mxu0 0.0
      %1841 = vmatpush1.msra.mxu0 %v1820
      %1842 = vmatprep.subr.mxu0 0.0
      %1843 = vmatpush1.msra.mxu0 %v1821
      %1844 = vmatprep.subr.mxu0 0.0
      %1845 = vmatpush1.msra.mxu0 0.0
      %1846 = vmatprep.subr.mxu0 0.0
      %1847 = vmatpush1.msra.mxu0 0.0
      %1848 = vmatprep.subr.mxu0 0.0
      %1849 = vmatpush1.msra.mxu0 0.0
      %1850 = vmatprep.subr.mxu0 0.0
      %1851 = vmatpush1.msra.mxu0 0.0
      %1852 = vmatprep.subr.mxu0 0.0
      %1853 = vmatpush1.msra.mxu0 0.0
      %1854 = vmatprep.subr.mxu0 0.0
      %1855 = vmatpush1.msra.mxu0 0.0
      %1856 = vmatprep.subr.mxu0 0.0
      %1857 = vmatpush1.msra.mxu0 0.0
      %1858 = vmatprep.subr.mxu0 0.0
      %1859 = vmatpush1.msra.mxu0 0.0
      %1860 = vmatprep.subr.mxu0 0.0
      %1861 = vmatpush1.msra.mxu0 0.0
      %1862 = vmatprep.subr.mxu0 0.0
      %1863 = vmatpush1.msra.mxu0 0.0
      %1864 = vmatprep.subr.mxu0 0.0
      %1865 = vmatpush1.msra.mxu0 0.0
      %1866 = vmatprep.subr.mxu0 0.0
      %1867 = vmatpush1.msra.mxu0 0.0
      %1868 = vmatprep.subr.mxu0 0.0
      %1869 = vmatpush1.msra.mxu0 0.0
      %1870 = vmatprep.subr.mxu0 0.0
      %1871 = vmatpush1.msra.mxu0 0.0
      %1872 = vmatprep.subr.mxu0 0.0
      %1873 = vmatpush1.msra.mxu0 0.0
      %1874 = vmatprep.subr.mxu0 0.0
      %1875 = vmatpush1.msra.mxu0 0.0
      %1876 = vmatprep.subr.mxu0 0.0
      %1877 = vmatpush1.msra.mxu0 0.0
      %1878 = vmatprep.subr.mxu0 0.0
      %1879 = vmatpush1.msra.mxu0 0.0
      %1880 = vmatprep.subr.mxu0 0.0
      %1881 = vmatpush1.msra.mxu0 0.0
      %1882 = vmatprep.subr.mxu0 0.0
      %1883 = vmatpush1.msra.mxu0 0.0
      %1884 = vmatprep.subr.mxu0 0.0
      %1885 = vmatpush1.msra.mxu0 0.0
      %1886 = vmatprep.subr.mxu0 0.0
      %1887 = vmatpush1.msra.mxu0 0.0
      %1888 = vmatprep.subr.mxu0 0.0
      %1889 = vmatpush1.msra.mxu0 0.0
      %1890 = vmatprep.subr.mxu0 0.0
      %1891 = vmatpush1.msra.mxu0 0.0
      %1892 = vmatprep.mubr.f32.mxu0 0.0
      %1893 = vmatmul.mubr.f32.gmra.mrb[0].mxu0 %v1823
      %v1894 = vpop.f32.mrb[0].mxu0
      %v1895 = vadd.f32 0.0, %v1894
      %v1896 = vpop.f32.mrb[0].mxu0
      %1897 = vmatprep.mubr.f32.mxu0 0.0
      %1898 = vmatmul.mubr.f32.gmra.mrb[0].mxu0 %v1826
      %v1899 = vpop.f32.mrb[0].mxu0
      %v1900 = vadd.f32 0.0, %v1899
      %v1901 = vpop.f32.mrb[0].mxu0
      %1902 = vdwg.mxu0
      %vm1903 = vcmask 31744
      %1904 = vst.msk [vmem:[%s388] sm:$0xff] %vm1903, %v1895
      %1905 = vst.msk [vmem:[%s388 + $0x8] sm:$0xff] %vm1903, %v1900
      %s1906 = smul.u32 2, %s22
      %p1907 = scmp.lt.s32.totalorder %s1906, 3
      %s1908 = scalar_select %p1907, %s1906, 3
      %s1909 = smul.addr %s1908, 8
      %s1910 = scalar_lea.vmem %s8, %s1909
      %s1911 = smul.u32 2, %s22
      %p1912 = scmp.lt.s32.totalorder %s1911, 3
      %s1913 = scalar_select %p1912, %s1911, 3
      %s1914 = smul.addr %s1913, 8
      %s1915 = scalar_lea.vmem %s9, %s1914
      %s1916 = smul.u32 2, %s22
      %p1917 = scmp.lt.s32.totalorder %s1916, 3
      %s1918 = scalar_select %p1917, %s1916, 3
      %s1919 = smul.addr %s1918, 8
      %s1920 = scalar_lea.vmem %s10, %s1919
      // Predicated region
      $region53: #{mixtral_forward.5} parent=51 // pred_check
        %p1921 = pneg %p213
      $region54: #{mixtral_forward.5} parent=51 // pred_check_branch
        %1923 = sbr.rel (%p1921) target = $region56
      $region55: #{mixtral_forward.5} parent=51 // pred_region
        %s1924 = smul.u32 2, %s22
      $region56: #{mixtral_forward.5} parent=51 // pred_fallthru
        _
      // Predicated region
      $region57: #{mixtral_forward.5} parent=51 // pred_check
        %p1925 = pneg %p239
      $region58: #{mixtral_forward.5} parent=51 // pred_check_branch
        %1927 = sbr.rel (%p1925) target = $region60
      $region59: #{mixtral_forward.5} parent=51 // pred_region
        %s1928 = smul.u32 2, %s22
      $region60: #{mixtral_forward.5} parent=51 // pred_fallthru
        _
      // Predicated region
      $region61: #{mixtral_forward.5} parent=51 // pred_check
        %p1929 = pneg %p265
      $region62: #{mixtral_forward.5} parent=51 // pred_check_branch
        %1931 = sbr.rel (%p1929) target = $region64
      $region63: #{mixtral_forward.5} parent=51 // pred_region
        %s1932 = smul.u32 2, %s22
      $region64: #{mixtral_forward.5} parent=51 // pred_fallthru
        _
    $region52: #{mixtral_forward.5} parent=5 // pred_fallthru
      _
    %p1933 = scmp.le.s32.totalorder 2, %s17
    // Predicated region
    $region65: #{mixtral_forward.5} parent=5 // pred_check
      %p1934 = pneg %p1933
    $region66: #{mixtral_forward.5} parent=5 // pred_check_branch
      %1936 = sbr.rel (%p1934) target = $region68
    $region67: #{mixtral_forward.5} parent=5 // pred_region
      %s1937 = ssub.s32 %s17, 2
      // Predicated region
      $region69: #{mixtral_forward.5} parent=67 // pred_check
        %p1938 = pneg %p219
      $region70: #{mixtral_forward.5} parent=67 // pred_check_branch
        %1940 = sbr.rel (%p1938) target = $region72
      $region71: #{mixtral_forward.5} parent=67 // pred_region
        %s1941 = smul.u32 2, %s23
        %p1942 = scmp.lt.s32.totalorder %s1941, 3
        %s1943 = scalar_select %p1942, %s1941, 3
        %s1944 = smul.addr %s1943, 8
        %s1945 = scalar_lea.vmem %s8, %s1944
      $region72: #{mixtral_forward.5} parent=67 // pred_fallthru
        _
      // Predicated region
      $region73: #{mixtral_forward.5} parent=67 // pred_check
        %p1946 = pneg %p245
      $region74: #{mixtral_forward.5} parent=67 // pred_check_branch
        %1948 = sbr.rel (%p1946) target = $region76
      $region75: #{mixtral_forward.5} parent=67 // pred_region
        %s1949 = smul.u32 2, %s23
        %p1950 = scmp.lt.s32.totalorder %s1949, 3
        %s1951 = scalar_select %p1950, %s1949, 3
        %s1952 = smul.addr %s1951, 8
        %s1953 = scalar_lea.vmem %s9, %s1952
      $region76: #{mixtral_forward.5} parent=67 // pred_fallthru
        _
      // Predicated region
      $region77: #{mixtral_forward.5} parent=67 // pred_check
        %p1954 = pneg %p271
      $region78: #{mixtral_forward.5} parent=67 // pred_check_branch
        %1956 = sbr.rel (%p1954) target = $region80
      $region79: #{mixtral_forward.5} parent=67 // pred_region
        %s1957 = smul.u32 2, %s23
        %p1958 = scmp.lt.s32.totalorder %s1957, 3
        %s1959 = scalar_select %p1958, %s1957, 3
        %s1960 = smul.addr %s1959, 8
        %s1961 = scalar_lea.vmem %s10, %s1960
      $region80: #{mixtral_forward.5} parent=67 // pred_fallthru
        _
    $region68: #{mixtral_forward.5} parent=5 // pred_fallthru
      _
  $region6: #{mixtral_forward.5} parent=0 // loop_footer
    %s21 = sadd.s32 1, %s17
  $region7: #{mixtral_forward.5} parent=0 // loop_footer_branch
    %16 = sbr.rel target = $region3
  $region8: #{mixtral_forward.5} parent=0 // loop_exit
    _

</llo_original>
